<compile_context>
chip_gen: v7x
topology: tpu7x:2x2x1
jax: 0.10.0
libtpu: 0.0.40
codegen_flags: <defaults>
</compile_context>

<pallas_src>
import functools

import jax
import jax.numpy as jnp
import numpy as np
from jax import lax
from jax.experimental import pallas as pl
from jax.experimental.pallas import tpu as pltpu

C_DIM = 10          # c_dim in the reference
NR_FILTERS = 8      # args.nr_filters (small synthetic choice)
KERNEL = 5          # self.kernel
OBS = (1, 28, 28)   # self.obs


# ----------------------------------------------------------------------------
# Pallas kernel: one im2col matmul per causal conv
# ----------------------------------------------------------------------------
def _conv_im2col_kernel(x_ref, w_ref, b_ref, o_ref):
    # x_ref: (K*K*Cin, COLS_BLK) bf16   im2col columns (lane-dense)
    # w_ref: (Cout, K*K*Cin)     bf16   flattened OIHW weights
    # b_ref: (Cout, 1)           f32
    # o_ref: (Cout, COLS_BLK)    f32
    acc = jnp.dot(w_ref[...], x_ref[...], preferred_element_type=jnp.float32)
    o_ref[...] = (acc + b_ref[...]).astype(o_ref.dtype)


def conv2d_causal_cbhw(x_cbhw, w_oihw, b, stride):
    """Causal conv on channel-first CBHW activations.

    Equivalent to PyTorch: ZeroPad2d((K-1, 0, K-1, 0)) + Conv2d(K, stride, pad=0).
    Input  : (Cin,  B, H,  W )
    Output : (Cout, B, Ho, Wo)
    """
    Cin, B, H, W = x_cbhw.shape
    Cout, Cin2, K, _ = w_oihw.shape
    assert Cin == Cin2
    Hp, Wp = H + K - 1, W + K - 1
    Ho = (Hp - K) // stride + 1
    Wo = (Wp - K) // stride + 1
    N = Ho * Wo
    cols = B * N
    KKC = Cin * K * K

    # Causal zero pad, cast to bf16 once, then build im2col directly in the
    # lane-dense (K*K*Cin, B*N) layout (pure XLA data movement).
    xp = jnp.pad(x_cbhw.astype(jnp.bfloat16),
                 ((0, 0), (0, 0), (K - 1, 0), (K - 1, 0)))
    taps = []
    for kh in range(K):
        for kw in range(K):
            taps.append(xp[:, :, kh:kh + stride * (Ho - 1) + 1:stride,
                              kw:kw + stride * (Wo - 1) + 1:stride])
    # (Cin, K*K, B, Ho, Wo) -> (Cin*K*K, B*N); row order matches OIHW reshape.
    x_col = jnp.stack(taps, axis=1).reshape(KKC, cols)

    # Pad columns to a multiple of 256 so the 2-way lane split stays 128-aligned.
    cols_pad = ((cols + 255) // 256) * 256
    if cols_pad != cols:
        x_col = jnp.pad(x_col, ((0, 0), (0, cols_pad - cols)))
    half = cols_pad // 2

    w_col = w_oihw.reshape(Cout, KKC).astype(jnp.bfloat16)
    b_col = b.reshape(Cout, 1).astype(jnp.float32)

    out = pl.pallas_call(
        _conv_im2col_kernel,
        out_shape=jax.ShapeDtypeStruct((Cout, cols_pad), jnp.float32),
        grid=(2,),  # 2-way split of the lane (column) dim -> both TCs on v7x
        in_specs=[
            pl.BlockSpec((KKC, half), lambda i: (0, i)),
            pl.BlockSpec((Cout, KKC), lambda i: (0, 0)),   # resident across steps
            pl.BlockSpec((Cout, 1), lambda i: (0, 0)),     # resident across steps
        ],
        out_specs=pl.BlockSpec((Cout, half), lambda i: (0, i)),
        compiler_params=pltpu.CompilerParams(
            dimension_semantics=("parallel",)),
    )(x_col, w_col, b_col)

    return out[:, :cols].reshape(Cout, B, Ho, Wo)          # CBHW, no transpose


# ----------------------------------------------------------------------------
# Small glue (left to XLA on purpose)
# ----------------------------------------------------------------------------
def fc_loc(zs, w1, b1, w2, b2):
    # Linear(90->32) + ReLU + Linear(32->6). Left to XLA per perf review: a
    # separate pallas_call costs more in launch/DMA than the compute at B=2.
    h = jnp.maximum(zs @ w1 + b1, 0.0)
    return h @ w2 + b2


def affine_grid_sample(c_nchw, theta):
    """F.affine_grid + F.grid_sample (bilinear, zeros padding, align_corners=False).
    Data-dependent gather: kept in plain JAX (no clean dense-Pallas equivalent)."""
    B, C, H, W = c_nchw.shape
    dt = c_nchw.dtype
    xs = (2.0 * (jnp.arange(W, dtype=dt) + 0.5) / W) - 1.0
    ys = (2.0 * (jnp.arange(H, dtype=dt) + 0.5) / H) - 1.0
    gx0, gy0 = jnp.meshgrid(xs, ys)                                   # (H, W)
    base = jnp.stack([gx0, gy0, jnp.ones_like(gx0)], axis=-1)         # (H, W, 3)
    grid = jnp.einsum("bij,hwj->bhwi", theta.astype(dt), base)        # (B, H, W, 2)
    gx, gy = grid[..., 0], grid[..., 1]
    ix = ((gx + 1.0) * W - 1.0) * 0.5
    iy = ((gy + 1.0) * H - 1.0) * 0.5
    x0 = jnp.floor(ix); y0 = jnp.floor(iy)
    x1 = x0 + 1.0;      y1 = y0 + 1.0
    wa = (x1 - ix) * (y1 - iy)
    wb = (x1 - ix) * (iy - y0)
    wc = (ix - x0) * (y1 - iy)
    wd = (ix - x0) * (iy - y0)

    def gather(img, yy, xx):
        valid = ((xx >= 0) & (xx <= W - 1) & (yy >= 0) & (yy <= H - 1)).astype(dt)
        xi = jnp.clip(xx, 0, W - 1).astype(jnp.int32)
        yi = jnp.clip(yy, 0, H - 1).astype(jnp.int32)
        return img[:, yi, xi] * valid[None]

    def per_batch(img, x0b, x1b, y0b, y1b, wab, wbb, wcb, wdb):
        va = gather(img, y0b, x0b)
        vb = gather(img, y1b, x0b)
        vc = gather(img, y0b, x1b)
        vd = gather(img, y1b, x1b)
        return wab[None] * va + wbb[None] * vb + wcb[None] * vc + wdb[None] * vd

    return jax.vmap(per_batch)(c_nchw, x0, x1, y0, y1, wa, wb, wc, wd)


# ----------------------------------------------------------------------------
# Parameters (deterministic, matching the PyTorch __init__ shapes)
# ----------------------------------------------------------------------------
def init_params(key):
    ks = jax.random.split(key, 8)
    f2 = 2 * NR_FILTERS
    return {
        "fc1_w": jax.random.normal(ks[0], (C_DIM * 3 * 3, 32), jnp.float32) * 0.05,
        "fc1_b": jax.random.normal(ks[1], (32,), jnp.float32) * 0.05,
        "fc2_w": jnp.zeros((32, 6), jnp.float32),                   # weight.data.zero_()
        "fc2_b": jnp.array([1, 0, 0, 0, 1, 0], jnp.float32),        # identity transform bias
        "conv1_w": jax.random.normal(ks[2], (f2, C_DIM, KERNEL, KERNEL), jnp.float32) * 0.05,
        "conv1_b": jax.random.normal(ks[3], (f2,), jnp.float32) * 0.05,
        "conv2_w": jax.random.normal(ks[4], (f2, f2, KERNEL, KERNEL), jnp.float32) * 0.05,
        "conv2_b": jax.random.normal(ks[5], (f2,), jnp.float32) * 0.05,
        "conv3_w": jax.random.normal(ks[6], (f2, f2, KERNEL, KERNEL), jnp.float32) * 0.05,
        "conv3_b": jax.random.normal(ks[7], (f2,), jnp.float32) * 0.05,
    }


def px_forward(params, c, z):
    """Px.forward conditioning path: stn(z, c) + the three causal cond convs.
    Returns cond_blocks {(28,28),(14,14),(7,7)} in NCHW like the PyTorch code."""
    B = c.shape[0]
    zs = z.reshape(B, C_DIM * 3 * 3)                                 # z.view(-1, 90)
    theta = fc_loc(zs, params["fc1_w"], params["fc1_b"],
                   params["fc2_w"], params["fc2_b"]).reshape(B, 2, 3)
    cond = affine_grid_sample(c, theta)                              # (B, 10, 28, 28) NCHW
    x = jnp.transpose(cond, (1, 0, 2, 3))                            # CBHW internal layout
    cb28 = conv2d_causal_cbhw(x,    params["conv1_w"], params["conv1_b"], stride=1)  # 28x28
    cb14 = conv2d_causal_cbhw(cb28, params["conv2_w"], params["conv2_b"], stride=2)  # 14x14
    cb7  = conv2d_causal_cbhw(cb14, params["conv3_w"], params["conv3_b"], stride=2)  # 7x7
    to_nchw = lambda a: jnp.transpose(a, (1, 0, 2, 3))
    # TODO(synk): PixelCNN(...), softmax_loss_1d and the autoregressive sample()
    # loop are not defined in the reference source; only the conditioning path
    # (stn + causal cond convs, i.e. cond_blocks) is implemented here.
    return {(28, 28): to_nchw(cb28), (14, 14): to_nchw(cb14), (7, 7): to_nchw(cb7)}


# ----------------------------------------------------------------------------
# Reference conv (XLA, f32) for sanity checking the Pallas path
# ----------------------------------------------------------------------------
def _conv_ref(x_nchw, w, b, stride, K):
    y = lax.conv_general_dilated(
        x_nchw, w, window_strides=(stride, stride),
        padding=((K - 1, 0), (K - 1, 0)),
        dimension_numbers=("NCHW", "OIHW", "NCHW"))
    return y + b[None, :, None, None]


if __name__ == "__main__":
    key = jax.random.PRNGKey(0)
    kp, kc, kz = jax.random.split(key, 3)
    params = init_params(kp)
    c = jax.random.normal(kc, (2, C_DIM, 28, 28), jnp.float32)   # conditioning maps
    z = jax.random.normal(kz, (2, C_DIM, 3, 3), jnp.float32)     # latent for the STN

    fwd = jax.jit(functools.partial(px_forward, params))
    blocks = fwd(c, z)
    blocks = jax.tree_util.tree_map(jax.block_until_ready, blocks)

    # Sanity check the Pallas convs against full-f32 XLA convs on the same
    # conditioning tensor (2e-2 tolerance covers the bf16 kernel inputs).
    zs = z.reshape(2, C_DIM * 3 * 3)
    theta = (jnp.maximum(zs @ params["fc1_w"] + params["fc1_b"], 0.0)
             @ params["fc2_w"] + params["fc2_b"]).reshape(2, 2, 3)
    cond = affine_grid_sample(c, theta)
    r28 = _conv_ref(cond, params["conv1_w"], params["conv1_b"], 1, KERNEL)
    r14 = _conv_ref(r28,  params["conv2_w"], params["conv2_b"], 2, KERNEL)
    r7  = _conv_ref(r14,  params["conv3_w"], params["conv3_b"], 2, KERNEL)

    np.testing.assert_allclose(np.asarray(blocks[(28, 28)]), np.asarray(r28), rtol=2e-2, atol=2e-2)
    np.testing.assert_allclose(np.asarray(blocks[(14, 14)]), np.asarray(r14), rtol=2e-2, atol=2e-2)
    np.testing.assert_allclose(np.asarray(blocks[(7, 7)]),   np.asarray(r7),  rtol=2e-2, atol=2e-2)
    assert blocks[(28, 28)].shape == (2, 2 * NR_FILTERS, 28, 28)
    assert blocks[(14, 14)].shape == (2, 2 * NR_FILTERS, 14, 14)
    assert blocks[(7, 7)].shape == (2, 2 * NR_FILTERS, 7, 7)
    print("KERNEL_OK")
</pallas_src>

<mosaic_0001>
module attributes {stable_mosaic.version = 11 : i64} {
  func.func private @main(%arg0: i32) attributes {dimension_semantics = [#tpu.dimension_semantics<core_parallel>], iteration_bounds = array<i64: 2>, tpu.core_type = #tpu.core_type<sc_scalar_subcore>, window_params = []} {
    return
  }
}

module attributes {stable_mosaic.version = 11 : i64} {
  func.func private @main(%arg0: i32) attributes {dimension_semantics = [#tpu.dimension_semantics<core_parallel>], iteration_bounds = array<i64: 2>, tpu.core_type = #tpu.core_type<sc_scalar_subcore>, window_params = []} {
    return
  }
}

module attributes {stable_mosaic.version = 11 : i64} {
  func.func @_conv_im2col_kernel(%arg0: i32, %arg1: memref<250x896xbf16, #tpu.memory_space<vmem>>, %arg2: memref<16x250xbf16, #tpu.memory_space<vmem>>, %arg3: memref<16x1xf32, #tpu.memory_space<vmem>>, %arg4: memref<16x896xf32, #tpu.memory_space<vmem>>) attributes {dimension_semantics = [#tpu.dimension_semantics<parallel>], iteration_bounds = array<i64: 2>, scalar_prefetch = 0 : i64, scratch_operands = 0 : i64, tpu.core_type = #tpu.core_type<tc>, window_params = [{transform_indices = @transform_0, window_bounds = array<i64: 250, 896>}, {pipeline_mode = #tpu.pipeline_mode<synchronous>, transform_indices = @transform_1, window_bounds = array<i64: 16, 250>}, {pipeline_mode = #tpu.pipeline_mode<synchronous>, transform_indices = @transform_2, window_bounds = array<i64: 16, 1>}, {transform_indices = @transform_3, window_bounds = array<i64: 16, 896>}]} {
    %c0 = arith.constant 0 : index
    %c0_0 = arith.constant 0 : index
    %0 = vector.load %arg2[%c0, %c0_0] : memref<16x250xbf16, #tpu.memory_space<vmem>>, vector<16x250xbf16>
    %c0_1 = arith.constant 0 : index
    %c0_2 = arith.constant 0 : index
    %1 = vector.load %arg1[%c0_1, %c0_2] : memref<250x896xbf16, #tpu.memory_space<vmem>>, vector<250x896xbf16>
    %cst = arith.constant dense<0.000000e+00> : vector<16x896xf32>
    %2 = tpu.matmul %0, %1, %cst {dimension_numbers = #tpu.dot_dimension_numbers<[1], [0], [0], [1], [0, 0, 1, 1], [], []>} : vector<16x250xbf16>, vector<250x896xbf16>, vector<16x896xf32> -> vector<16x896xf32>
    %c0_3 = arith.constant 0 : index
    %c0_4 = arith.constant 0 : index
    %3 = vector.load %arg3[%c0_3, %c0_4] : memref<16x1xf32, #tpu.memory_space<vmem>>, vector<16x1xf32>
    %4 = vector.broadcast %3 : vector<16x1xf32> to vector<16x896xf32>
    %5 = arith.addf %2, %4 : vector<16x896xf32>
    %c0_5 = arith.constant 0 : index
    %c0_6 = arith.constant 0 : index
    %6 = vector.load %arg4[%c0_5, %c0_6] : memref<16x896xf32, #tpu.memory_space<vmem>>, vector<16x896xf32>
    tpu.vector_store %arg4[%c0_5, %c0_6], %5 {strides = array<i32>} : memref<16x896xf32, #tpu.memory_space<vmem>>, vector<16x896xf32>,
    return
  }
  func.func @transform_0(%arg0: i32) -> (i32, i32) {
    %c0_i32 = arith.constant 0 : i32
    %c0_i32_0 = arith.constant 0 : i32
    return %c0_i32, %arg0 : i32, i32
  }
  func.func @transform_1(%arg0: i32) -> (i32, i32) {
    %c0_i32 = arith.constant 0 : i32
    %c0_i32_0 = arith.constant 0 : i32
    %c0_i32_1 = arith.constant 0 : i32
    return %c0_i32, %c0_i32_0 : i32, i32
  }
  func.func @transform_2(%arg0: i32) -> (i32, i32) {
    %c0_i32 = arith.constant 0 : i32
    %c0_i32_0 = arith.constant 0 : i32
    %c0_i32_1 = arith.constant 0 : i32
    return %c0_i32, %c0_i32_0 : i32, i32
  }
  func.func @transform_3(%arg0: i32) -> (i32, i32) {
    %c0_i32 = arith.constant 0 : i32
    %c0_i32_0 = arith.constant 0 : i32
    return %c0_i32, %arg0 : i32, i32
  }
}

module attributes {stable_mosaic.version = 11 : i64} {
  func.func @_conv_im2col_kernel(%arg0: i32, %arg1: memref<400x256xbf16, #tpu.memory_space<vmem>>, %arg2: memref<16x400xbf16, #tpu.memory_space<vmem>>, %arg3: memref<16x1xf32, #tpu.memory_space<vmem>>, %arg4: memref<16x256xf32, #tpu.memory_space<vmem>>) attributes {dimension_semantics = [#tpu.dimension_semantics<parallel>], iteration_bounds = array<i64: 2>, scalar_prefetch = 0 : i64, scratch_operands = 0 : i64, tpu.core_type = #tpu.core_type<tc>, window_params = [{transform_indices = @transform_0, window_bounds = array<i64: 400, 256>}, {pipeline_mode = #tpu.pipeline_mode<synchronous>, transform_indices = @transform_1, window_bounds = array<i64: 16, 400>}, {pipeline_mode = #tpu.pipeline_mode<synchronous>, transform_indices = @transform_2, window_bounds = array<i64: 16, 1>}, {transform_indices = @transform_3, window_bounds = array<i64: 16, 256>}]} {
    %c0 = arith.constant 0 : index
    %c0_0 = arith.constant 0 : index
    %0 = vector.load %arg2[%c0, %c0_0] : memref<16x400xbf16, #tpu.memory_space<vmem>>, vector<16x400xbf16>
    %c0_1 = arith.constant 0 : index
    %c0_2 = arith.constant 0 : index
    %1 = vector.load %arg1[%c0_1, %c0_2] : memref<400x256xbf16, #tpu.memory_space<vmem>>, vector<400x256xbf16>
    %cst = arith.constant dense<0.000000e+00> : vector<16x256xf32>
    %2 = tpu.matmul %0, %1, %cst {dimension_numbers = #tpu.dot_dimension_numbers<[1], [0], [0], [1], [0, 0, 1, 1], [], []>} : vector<16x400xbf16>, vector<400x256xbf16>, vector<16x256xf32> -> vector<16x256xf32>
    %c0_3 = arith.constant 0 : index
    %c0_4 = arith.constant 0 : index
    %3 = vector.load %arg3[%c0_3, %c0_4] : memref<16x1xf32, #tpu.memory_space<vmem>>, vector<16x1xf32>
    %4 = vector.broadcast %3 : vector<16x1xf32> to vector<16x256xf32>
    %5 = arith.addf %2, %4 : vector<16x256xf32>
    %c0_5 = arith.constant 0 : index
    %c0_6 = arith.constant 0 : index
    %6 = vector.load %arg4[%c0_5, %c0_6] : memref<16x256xf32, #tpu.memory_space<vmem>>, vector<16x256xf32>
    tpu.vector_store %arg4[%c0_5, %c0_6], %5 {strides = array<i32>} : memref<16x256xf32, #tpu.memory_space<vmem>>, vector<16x256xf32>,
    return
  }
  func.func @transform_0(%arg0: i32) -> (i32, i32) {
    %c0_i32 = arith.constant 0 : i32
    %c0_i32_0 = arith.constant 0 : i32
    return %c0_i32, %arg0 : i32, i32
  }
  func.func @transform_1(%arg0: i32) -> (i32, i32) {
    %c0_i32 = arith.constant 0 : i32
    %c0_i32_0 = arith.constant 0 : i32
    %c0_i32_1 = arith.constant 0 : i32
    return %c0_i32, %c0_i32_0 : i32, i32
  }
  func.func @transform_2(%arg0: i32) -> (i32, i32) {
    %c0_i32 = arith.constant 0 : i32
    %c0_i32_0 = arith.constant 0 : i32
    %c0_i32_1 = arith.constant 0 : i32
    return %c0_i32, %c0_i32_0 : i32, i32
  }
  func.func @transform_3(%arg0: i32) -> (i32, i32) {
    %c0_i32 = arith.constant 0 : i32
    %c0_i32_0 = arith.constant 0 : i32
    return %c0_i32, %arg0 : i32, i32
  }
}

module attributes {stable_mosaic.version = 11 : i64} {
  func.func @_conv_im2col_kernel(%arg0: i32, %arg1: memref<400x128xbf16, #tpu.memory_space<vmem>>, %arg2: memref<16x400xbf16, #tpu.memory_space<vmem>>, %arg3: memref<16x1xf32, #tpu.memory_space<vmem>>, %arg4: memref<16x128xf32, #tpu.memory_space<vmem>>) attributes {dimension_semantics = [#tpu.dimension_semantics<parallel>], iteration_bounds = array<i64: 2>, scalar_prefetch = 0 : i64, scratch_operands = 0 : i64, tpu.core_type = #tpu.core_type<tc>, window_params = [{transform_indices = @transform_0, window_bounds = array<i64: 400, 128>}, {pipeline_mode = #tpu.pipeline_mode<synchronous>, transform_indices = @transform_1, window_bounds = array<i64: 16, 400>}, {pipeline_mode = #tpu.pipeline_mode<synchronous>, transform_indices = @transform_2, window_bounds = array<i64: 16, 1>}, {transform_indices = @transform_3, window_bounds = array<i64: 16, 128>}]} {
    %c0 = arith.constant 0 : index
    %c0_0 = arith.constant 0 : index
    %0 = vector.load %arg2[%c0, %c0_0] : memref<16x400xbf16, #tpu.memory_space<vmem>>, vector<16x400xbf16>
    %c0_1 = arith.constant 0 : index
    %c0_2 = arith.constant 0 : index
    %1 = vector.load %arg1[%c0_1, %c0_2] : memref<400x128xbf16, #tpu.memory_space<vmem>>, vector<400x128xbf16>
    %cst = arith.constant dense<0.000000e+00> : vector<16x128xf32>
    %2 = tpu.matmul %0, %1, %cst {dimension_numbers = #tpu.dot_dimension_numbers<[1], [0], [0], [1], [0, 0, 1, 1], [], []>} : vector<16x400xbf16>, vector<400x128xbf16>, vector<16x128xf32> -> vector<16x128xf32>
    %c0_3 = arith.constant 0 : index
    %c0_4 = arith.constant 0 : index
    %3 = vector.load %arg3[%c0_3, %c0_4] : memref<16x1xf32, #tpu.memory_space<vmem>>, vector<16x1xf32>
    %4 = vector.broadcast %3 : vector<16x1xf32> to vector<16x128xf32>
    %5 = arith.addf %2, %4 : vector<16x128xf32>
    %c0_5 = arith.constant 0 : index
    %c0_6 = arith.constant 0 : index
    %6 = vector.load %arg4[%c0_5, %c0_6] : memref<16x128xf32, #tpu.memory_space<vmem>>, vector<16x128xf32>
    tpu.vector_store %arg4[%c0_5, %c0_6], %5 {strides = array<i32>} : memref<16x128xf32, #tpu.memory_space<vmem>>, vector<16x128xf32>,
    return
  }
  func.func @transform_0(%arg0: i32) -> (i32, i32) {
    %c0_i32 = arith.constant 0 : i32
    %c0_i32_0 = arith.constant 0 : i32
    return %c0_i32, %arg0 : i32, i32
  }
  func.func @transform_1(%arg0: i32) -> (i32, i32) {
    %c0_i32 = arith.constant 0 : i32
    %c0_i32_0 = arith.constant 0 : i32
    %c0_i32_1 = arith.constant 0 : i32
    return %c0_i32, %c0_i32_0 : i32, i32
  }
  func.func @transform_2(%arg0: i32) -> (i32, i32) {
    %c0_i32 = arith.constant 0 : i32
    %c0_i32_0 = arith.constant 0 : i32
    %c0_i32_1 = arith.constant 0 : i32
    return %c0_i32, %c0_i32_0 : i32, i32
  }
  func.func @transform_3(%arg0: i32) -> (i32, i32) {
    %c0_i32 = arith.constant 0 : i32
    %c0_i32_0 = arith.constant 0 : i32
    return %c0_i32, %arg0 : i32, i32
  }
}

</mosaic_0001>

<llo_original>
// kernel: px_forward.3
$region0: #{px_forward.3}
  #allocation0 [shape = 'u32[]', space=smem, size = 0x4, offset = 0x4, fixed_abs, tag = 'smem constant byte address 0x4 - core index']
  #allocation1 [shape = 'u32[144,128]{1,0:T(1,128)}', space=vmem, size = 0x12000, scoped, tag = 'internal scratch']
  %s0 = inlined_call_operand.vmem [shape: bf16[250,1792], index: 0, kind: input, shape index: {}]
  %s1 = inlined_call_operand.vmem [shape: bf16[16,250], index: 1, kind: input, shape index: {}]
  %s2 = inlined_call_operand.vmem [shape: f32[16,1], index: 2, kind: input, shape index: {}]
  %s3 = inlined_call_operand.vmem [shape: f32[16,1792], index: 3, kind: output, shape index: {}]
  %s4 = sld [smem:[#allocation0]]
  $region90: #{px_forward.3} parent=0
    _
  %s6 = ssub.s32 1, %s4
  %s7 = scalar_select 0, %s6, %s4
  $region1: #{px_forward.3} parent=0
    #allocation2 [shape = 'u8[917504]{0}', space=vmem, size = 0xe0000, scoped, tag = 'input window, operand 0']
    #allocation3 [shape = 'u8[114688]{0}', space=vmem, size = 0x1c000, scoped, tag = 'output window, operand 0']
    loop: start=0, step=1, limit=4
    $region2: #{px_forward.3} parent=1 // loop_pre_header
      _
    $region3: #{px_forward.3} parent=1 // loop_header
      %s9 = sphi 0, %s13
      %p10 = scmp.ge.s32.totalorder %s9, 4
      %s19 = sphi 0, %s21
      %s22 = sphi 0, %s19
      %s23 = sphi 0, %s22
      %s39 = sphi 0, %s23
      %s43 = sphi 0, %s43
      %s45 = sphi 0, %s43
      %s46 = sphi 0, %s45
      %s60 = sphi 0, %s46
      %s64 = sphi 0, %s64
      %s66 = sphi 0, %s64
      %s67 = sphi 0, %s66
      %s81 = sphi 0, %s67
      %s87 = sphi 0, %s89
      %s90 = sphi 0, %s87
      %s91 = sphi 0, %s90
      %s107 = sphi 0, %s91
    $region4: #{px_forward.3} parent=1 // loop_header_branch
      %12 = sbr.rel (%p10) target = $region8
    $region5: #{px_forward.3} parent=1 // loop_body
      %s14 = ssub.s32 %s9, 1
      %s15 = ssub.s32 %s9, 2
      %s16 = sadd.s32 %s9, 1
      %s17 = ssub.s32 %s9, %s16
      %p18 = scmp.eq.s32.totalorder %s17, 0
      %s20 = sadd.s32 %s19, 1
      %s21 = scalar_select %p18, %s19, %s20
      %p24 = pneg %p18
      %p25 = scmp.eq.s32.totalorder %s9, 1
      %p26 = por %p24, %p25
      %p27 = scmp.ne.s32.totalorder %s19, %s22
      %p28 = scmp.eq.s32.totalorder %s9, 0
      %p29 = por %p27, %p28
      %p30 = scmp.ne.s32.totalorder %s19, %s22
      %p31 = scmp.eq.s32.totalorder %s14, 1
      %p32 = por %p30, %p31
      %p33 = scmp.ne.s32.totalorder %s22, %s23
      %p34 = scmp.eq.s32.totalorder %s14, 0
      %p35 = por %p33, %p34
      %p36 = scmp.ne.s32.totalorder %s22, %s23
      %p37 = scmp.eq.s32.totalorder %s15, 1
      %p38 = por %p36, %p37
      %p40 = scmp.ne.s32.totalorder %s23, %s39
      %p41 = scmp.eq.s32.totalorder %s15, 0
      %p42 = por %p40, %p41
      %s44 = sadd.s32 %s43, 1
      %p47 = scmp.eq.s32.totalorder %s9, 1
      %p48 = scmp.ne.s32.totalorder %s43, %s45
      %p49 = scmp.eq.s32.totalorder %s9, 0
      %p50 = por %p48, %p49
      %p51 = scmp.ne.s32.totalorder %s43, %s45
      %p52 = scmp.eq.s32.totalorder %s14, 1
      %p53 = por %p51, %p52
      %p54 = scmp.ne.s32.totalorder %s45, %s46
      %p55 = scmp.eq.s32.totalorder %s14, 0
      %p56 = por %p54, %p55
      %p57 = scmp.ne.s32.totalorder %s45, %s46
      %p58 = scmp.eq.s32.totalorder %s15, 1
      %p59 = por %p57, %p58
      %p61 = scmp.ne.s32.totalorder %s46, %s60
      %p62 = scmp.eq.s32.totalorder %s15, 0
      %p63 = por %p61, %p62
      %s65 = sadd.s32 %s64, 1
      %p68 = scmp.eq.s32.totalorder %s9, 1
      %p69 = scmp.ne.s32.totalorder %s64, %s66
      %p70 = scmp.eq.s32.totalorder %s9, 0
      %p71 = por %p69, %p70
      %p72 = scmp.ne.s32.totalorder %s64, %s66
      %p73 = scmp.eq.s32.totalorder %s14, 1
      %p74 = por %p72, %p73
      %p75 = scmp.ne.s32.totalorder %s66, %s67
      %p76 = scmp.eq.s32.totalorder %s14, 0
      %p77 = por %p75, %p76
      %p78 = scmp.ne.s32.totalorder %s66, %s67
      %p79 = scmp.eq.s32.totalorder %s15, 1
      %p80 = por %p78, %p79
      %p82 = scmp.ne.s32.totalorder %s67, %s81
      %p83 = scmp.eq.s32.totalorder %s15, 0
      %p84 = por %p82, %p83
      %s85 = ssub.s32 %s9, %s16
      %p86 = scmp.eq.s32.totalorder %s85, 0
      %s88 = sadd.s32 %s87, 1
      %s89 = scalar_select %p86, %s87, %s88
      %p92 = pneg %p86
      %p93 = scmp.eq.s32.totalorder %s9, 1
      %p94 = por %p92, %p93
      %p95 = scmp.ne.s32.totalorder %s87, %s90
      %p96 = scmp.eq.s32.totalorder %s9, 0
      %p97 = por %p95, %p96
      %p98 = scmp.ne.s32.totalorder %s87, %s90
      %p99 = scmp.eq.s32.totalorder %s14, 1
      %p100 = por %p98, %p99
      %p101 = scmp.ne.s32.totalorder %s90, %s91
      %p102 = scmp.eq.s32.totalorder %s14, 0
      %p103 = por %p101, %p102
      %p104 = scmp.ne.s32.totalorder %s90, %s91
      %p105 = scmp.eq.s32.totalorder %s15, 1
      %p106 = por %p104, %p105
      %p108 = scmp.ne.s32.totalorder %s91, %s107
      %p109 = scmp.eq.s32.totalorder %s15, 0
      %p110 = por %p108, %p109
      %p111 = scmp.le.s32.totalorder 1, %s9
      %p112 = scmp.lt.s32.totalorder %s9, 3
      %p113 = pnand %p111, %p112
      %p114 = pneg %p113
      // Predicated region
      $region9: #{px_forward.3} parent=5 // pred_check
        _
      $region10: #{px_forward.3} parent=5 // pred_check_branch
        %116 = sbr.rel (%p113) target = $region12
      $region11: #{px_forward.3} parent=5 // pred_region
        %s117 = ssub.s32 %s9, 1
        // Predicated region
        $region13: #{px_forward.3} parent=11 // pred_check
          %p118 = pneg %p56
        $region14: #{px_forward.3} parent=11 // pred_check_branch
          %120 = sbr.rel (%p118) target = $region16
        $region15: #{px_forward.3} parent=11 // pred_region
          _
        $region16: #{px_forward.3} parent=11 // pred_fallthru
          _
        // Predicated region
        $region17: #{px_forward.3} parent=11 // pred_check
          %p121 = pneg %p77
        $region18: #{px_forward.3} parent=11 // pred_check_branch
          %123 = sbr.rel (%p121) target = $region20
        $region19: #{px_forward.3} parent=11 // pred_region
          _
        $region20: #{px_forward.3} parent=11 // pred_fallthru
          _
      $region12: #{px_forward.3} parent=5 // pred_fallthru
        _
      %p124 = scmp.lt.s32.totalorder %s9, 2
      // Predicated region
      $region21: #{px_forward.3} parent=5 // pred_check
        %p125 = pneg %p124
      $region22: #{px_forward.3} parent=5 // pred_check_branch
        %127 = sbr.rel (%p125) target = $region24
      $region23: #{px_forward.3} parent=5 // pred_region
        // Predicated region
        $region25: #{px_forward.3} parent=23 // pred_check
          %p128 = pneg %p29
        $region26: #{px_forward.3} parent=23 // pred_check_branch
          %130 = sbr.rel (%p128) target = $region28
        $region27: #{px_forward.3} parent=23 // pred_region
          %s131 = sand.u32 %s19, 1
          %s132 = sand.u32 %s19, 1
          %s133 = smul.addr %s132, 896
          %s134 = scalar_lea.vmem [#allocation2], %s133
          %s135 = smul.u32 7, %s9
          %s136 = smul.addr %s135, 4
          %s137 = scalar_lea.vmem %s0, %s136
          // Predicated region
          $region29: #{px_forward.3} parent=27 // pred_check
            _
          $region30: #{px_forward.3} parent=27 // pred_check_branch
            %139 = sbr.rel (0) target = $region32
          $region31: #{px_forward.3} parent=27 // pred_region
            // Predicated region
            $region33: #{px_forward.3} parent=31 // pred_check
              _
            $region34: #{px_forward.3} parent=31 // pred_check_branch
              %141 = sbr.rel (0) target = $region36
            $region35: #{px_forward.3} parent=31 // pred_region
              %s142 = scalar_lea.vmem %s137, 24
              %s143 = scalar_lea.vmem %s134, 24 [#allocation2]
              loop: start=0, step=1, limit=1
              $region37: #{px_forward.3} parent=35 // loop_pre_header
                _
              $region38: #{px_forward.3} parent=35 // loop_header
                %s145 = sphi 0, %s149
                %p146 = scmp.ge.s32.totalorder %s145, 1
                %s150 = sphi %s137, %s137
                %s151 = sphi %s134, %s134
              $region39: #{px_forward.3} parent=35 // loop_header_branch
                %148 = sbr.rel (%p146) target = $region43
              $region40: #{px_forward.3} parent=35 // loop_body
                %v152 = vld [vmem:[%s150] sm:$0xff]
                %153 = vst [vmem:[%s151] sm:$0xff] %v152
                %v154 = vld [vmem:[%s150 + $0x8] sm:$0xff]
                %155 = vst [vmem:[%s151 + $0x8] sm:$0xff] %v154
                %v156 = vld [vmem:[%s150 + $0x10] sm:$0xff]
                %157 = vst [vmem:[%s151 + $0x10] sm:$0xff] %v156
                %v158 = vld [vmem:[%s150 + $0x38] sm:$0xff]
                %159 = vst [vmem:[%s151 + $0x1c] sm:$0xff] %v158
                %v160 = vld [vmem:[%s150 + $0x40] sm:$0xff]
                %161 = vst [vmem:[%s151 + $0x24] sm:$0xff] %v160
                %v162 = vld [vmem:[%s150 + $0x48] sm:$0xff]
                %163 = vst [vmem:[%s151 + $0x2c] sm:$0xff] %v162
                %v164 = vld [vmem:[%s150 + $0x70] sm:$0xff]
                %165 = vst [vmem:[%s151 + $0x38] sm:$0xff] %v164
                %v166 = vld [vmem:[%s150 + $0x78] sm:$0xff]
                %167 = vst [vmem:[%s151 + $0x40] sm:$0xff] %v166
                %v168 = vld [vmem:[%s150 + $0x80] sm:$0xff]
                %169 = vst [vmem:[%s151 + $0x48] sm:$0xff] %v168
                %v170 = vld [vmem:[%s150 + $0xa8] sm:$0xff]
                %171 = vst [vmem:[%s151 + $0x54] sm:$0xff] %v170
                %v172 = vld [vmem:[%s150 + $0xb0] sm:$0xff]
                %173 = vst [vmem:[%s151 + $0x5c] sm:$0xff] %v172
                %v174 = vld [vmem:[%s150 + $0xb8] sm:$0xff]
                %175 = vst [vmem:[%s151 + $0x64] sm:$0xff] %v174
                %v176 = vld [vmem:[%s150 + $0xe0] sm:$0xff]
                %177 = vst [vmem:[%s151 + $0x70] sm:$0xff] %v176
                %v178 = vld [vmem:[%s150 + $0xe8] sm:$0xff]
                %179 = vst [vmem:[%s151 + $0x78] sm:$0xff] %v178
                %v180 = vld [vmem:[%s150 + $0xf0] sm:$0xff]
                %181 = vst [vmem:[%s151 + $0x80] sm:$0xff] %v180
                %v182 = vld [vmem:[%s150 + $0x118] sm:$0xff]
                %183 = vst [vmem:[%s151 + $0x8c] sm:$0xff] %v182
                %v184 = vld [vmem:[%s150 + $0x120] sm:$0xff]
                %185 = vst [vmem:[%s151 + $0x94] sm:$0xff] %v184
                %v186 = vld [vmem:[%s150 + $0x128] sm:$0xff]
                %187 = vst [vmem:[%s151 + $0x9c] sm:$0xff] %v186
                %v188 = vld [vmem:[%s150 + $0x150] sm:$0xff]
                %189 = vst [vmem:[%s151 + $0xa8] sm:$0xff] %v188
                %v190 = vld [vmem:[%s150 + $0x158] sm:$0xff]
                %191 = vst [vmem:[%s151 + $0xb0] sm:$0xff] %v190
                %v192 = vld [vmem:[%s150 + $0x160] sm:$0xff]
                %193 = vst [vmem:[%s151 + $0xb8] sm:$0xff] %v192
                %v194 = vld [vmem:[%s150 + $0x188] sm:$0xff]
                %195 = vst [vmem:[%s151 + $0xc4] sm:$0xff] %v194
                %v196 = vld [vmem:[%s150 + $0x190] sm:$0xff]
                %197 = vst [vmem:[%s151 + $0xcc] sm:$0xff] %v196
                %v198 = vld [vmem:[%s150 + $0x198] sm:$0xff]
                %199 = vst [vmem:[%s151 + $0xd4] sm:$0xff] %v198
                %v200 = vld [vmem:[%s150 + $0x1c0] sm:$0xff]
                %201 = vst [vmem:[%s151 + $0xe0] sm:$0xff] %v200
                %v202 = vld [vmem:[%s150 + $0x1c8] sm:$0xff]
                %203 = vst [vmem:[%s151 + $0xe8] sm:$0xff] %v202
                %v204 = vld [vmem:[%s150 + $0x1d0] sm:$0xff]
                %205 = vst [vmem:[%s151 + $0xf0] sm:$0xff] %v204
                %v206 = vld [vmem:[%s150 + $0x1f8] sm:$0xff]
                %207 = vst [vmem:[%s151 + $0xfc] sm:$0xff] %v206
                %v208 = vld [vmem:[%s150 + $0x200] sm:$0xff]
                %209 = vst [vmem:[%s151 + $0x104] sm:$0xff] %v208
                %v210 = vld [vmem:[%s150 + $0x208] sm:$0xff]
                %211 = vst [vmem:[%s151 + $0x10c] sm:$0xff] %v210
                %v212 = vld [vmem:[%s150 + $0x230] sm:$0xff]
                %213 = vst [vmem:[%s151 + $0x118] sm:$0xff] %v212
                %v214 = vld [vmem:[%s150 + $0x238] sm:$0xff]
                %215 = vst [vmem:[%s151 + $0x120] sm:$0xff] %v214
                %v216 = vld [vmem:[%s150 + $0x240] sm:$0xff]
                %217 = vst [vmem:[%s151 + $0x128] sm:$0xff] %v216
                %v218 = vld [vmem:[%s150 + $0x268] sm:$0xff]
                %219 = vst [vmem:[%s151 + $0x134] sm:$0xff] %v218
                %v220 = vld [vmem:[%s150 + $0x270] sm:$0xff]
                %221 = vst [vmem:[%s151 + $0x13c] sm:$0xff] %v220
                %v222 = vld [vmem:[%s150 + $0x278] sm:$0xff]
                %223 = vst [vmem:[%s151 + $0x144] sm:$0xff] %v222
                %v224 = vld [vmem:[%s150 + $0x2a0] sm:$0xff]
                %225 = vst [vmem:[%s151 + $0x150] sm:$0xff] %v224
                %v226 = vld [vmem:[%s150 + $0x2a8] sm:$0xff]
                %227 = vst [vmem:[%s151 + $0x158] sm:$0xff] %v226
                %v228 = vld [vmem:[%s150 + $0x2b0] sm:$0xff]
                %229 = vst [vmem:[%s151 + $0x160] sm:$0xff] %v228
                %v230 = vld [vmem:[%s150 + $0x2d8] sm:$0xff]
                %231 = vst [vmem:[%s151 + $0x16c] sm:$0xff] %v230
                %v232 = vld [vmem:[%s150 + $0x2e0] sm:$0xff]
                %233 = vst [vmem:[%s151 + $0x174] sm:$0xff] %v232
                %v234 = vld [vmem:[%s150 + $0x2e8] sm:$0xff]
                %235 = vst [vmem:[%s151 + $0x17c] sm:$0xff] %v234
                %v236 = vld [vmem:[%s150 + $0x310] sm:$0xff]
                %237 = vst [vmem:[%s151 + $0x188] sm:$0xff] %v236
                %v238 = vld [vmem:[%s150 + $0x318] sm:$0xff]
                %239 = vst [vmem:[%s151 + $0x190] sm:$0xff] %v238
                %v240 = vld [vmem:[%s150 + $0x320] sm:$0xff]
                %241 = vst [vmem:[%s151 + $0x198] sm:$0xff] %v240
                %v242 = vld [vmem:[%s150 + $0x348] sm:$0xff]
                %243 = vst [vmem:[%s151 + $0x1a4] sm:$0xff] %v242
                %v244 = vld [vmem:[%s150 + $0x350] sm:$0xff]
                %245 = vst [vmem:[%s151 + $0x1ac] sm:$0xff] %v244
                %v246 = vld [vmem:[%s150 + $0x358] sm:$0xff]
                %247 = vst [vmem:[%s151 + $0x1b4] sm:$0xff] %v246
                %v248 = vld [vmem:[%s150 + $0x380] sm:$0xff]
                %249 = vst [vmem:[%s151 + $0x1c0] sm:$0xff] %v248
                %v250 = vld [vmem:[%s150 + $0x388] sm:$0xff]
                %251 = vst [vmem:[%s151 + $0x1c8] sm:$0xff] %v250
                %v252 = vld [vmem:[%s150 + $0x390] sm:$0xff]
                %253 = vst [vmem:[%s151 + $0x1d0] sm:$0xff] %v252
                %v254 = vld [vmem:[%s150 + $0x3b8] sm:$0xff]
                %255 = vst [vmem:[%s151 + $0x1dc] sm:$0xff] %v254
                %v256 = vld [vmem:[%s150 + $0x3c0] sm:$0xff]
                %257 = vst [vmem:[%s151 + $0x1e4] sm:$0xff] %v256
                %v258 = vld [vmem:[%s150 + $0x3c8] sm:$0xff]
                %259 = vst [vmem:[%s151 + $0x1ec] sm:$0xff] %v258
                %v260 = vld [vmem:[%s150 + $0x3f0] sm:$0xff]
                %261 = vst [vmem:[%s151 + $0x1f8] sm:$0xff] %v260
                %v262 = vld [vmem:[%s150 + $0x3f8] sm:$0xff]
                %263 = vst [vmem:[%s151 + $0x200] sm:$0xff] %v262
                %v264 = vld [vmem:[%s150 + $0x400] sm:$0xff]
                %265 = vst [vmem:[%s151 + $0x208] sm:$0xff] %v264
                %v266 = vld [vmem:[%s150 + $0x428] sm:$0xff]
                %267 = vst [vmem:[%s151 + $0x214] sm:$0xff] %v266
                %v268 = vld [vmem:[%s150 + $0x430] sm:$0xff]
                %269 = vst [vmem:[%s151 + $0x21c] sm:$0xff] %v268
                %v270 = vld [vmem:[%s150 + $0x438] sm:$0xff]
                %271 = vst [vmem:[%s151 + $0x224] sm:$0xff] %v270
                %v272 = vld [vmem:[%s150 + $0x460] sm:$0xff]
                %273 = vst [vmem:[%s151 + $0x230] sm:$0xff] %v272
                %v274 = vld [vmem:[%s150 + $0x468] sm:$0xff]
                %275 = vst [vmem:[%s151 + $0x238] sm:$0xff] %v274
                %v276 = vld [vmem:[%s150 + $0x470] sm:$0xff]
                %277 = vst [vmem:[%s151 + $0x240] sm:$0xff] %v276
                %v278 = vld [vmem:[%s150 + $0x498] sm:$0xff]
                %279 = vst [vmem:[%s151 + $0x24c] sm:$0xff] %v278
                %v280 = vld [vmem:[%s150 + $0x4a0] sm:$0xff]
                %281 = vst [vmem:[%s151 + $0x254] sm:$0xff] %v280
                %v282 = vld [vmem:[%s150 + $0x4a8] sm:$0xff]
                %283 = vst [vmem:[%s151 + $0x25c] sm:$0xff] %v282
                %v284 = vld [vmem:[%s150 + $0x4d0] sm:$0xff]
                %285 = vst [vmem:[%s151 + $0x268] sm:$0xff] %v284
                %v286 = vld [vmem:[%s150 + $0x4d8] sm:$0xff]
                %287 = vst [vmem:[%s151 + $0x270] sm:$0xff] %v286
                %v288 = vld [vmem:[%s150 + $0x4e0] sm:$0xff]
                %289 = vst [vmem:[%s151 + $0x278] sm:$0xff] %v288
                %v290 = vld [vmem:[%s150 + $0x508] sm:$0xff]
                %291 = vst [vmem:[%s151 + $0x284] sm:$0xff] %v290
                %v292 = vld [vmem:[%s150 + $0x510] sm:$0xff]
                %293 = vst [vmem:[%s151 + $0x28c] sm:$0xff] %v292
                %v294 = vld [vmem:[%s150 + $0x518] sm:$0xff]
                %295 = vst [vmem:[%s151 + $0x294] sm:$0xff] %v294
                %v296 = vld [vmem:[%s150 + $0x540] sm:$0xff]
                %297 = vst [vmem:[%s151 + $0x2a0] sm:$0xff] %v296
                %v298 = vld [vmem:[%s150 + $0x548] sm:$0xff]
                %299 = vst [vmem:[%s151 + $0x2a8] sm:$0xff] %v298
                %v300 = vld [vmem:[%s150 + $0x550] sm:$0xff]
                %301 = vst [vmem:[%s151 + $0x2b0] sm:$0xff] %v300
                %v302 = vld [vmem:[%s150 + $0x578] sm:$0xff]
                %303 = vst [vmem:[%s151 + $0x2bc] sm:$0xff] %v302
                %v304 = vld [vmem:[%s150 + $0x580] sm:$0xff]
                %305 = vst [vmem:[%s151 + $0x2c4] sm:$0xff] %v304
                %v306 = vld [vmem:[%s150 + $0x588] sm:$0xff]
                %307 = vst [vmem:[%s151 + $0x2cc] sm:$0xff] %v306
                %v308 = vld [vmem:[%s150 + $0x5b0] sm:$0xff]
                %309 = vst [vmem:[%s151 + $0x2d8] sm:$0xff] %v308
                %v310 = vld [vmem:[%s150 + $0x5b8] sm:$0xff]
                %311 = vst [vmem:[%s151 + $0x2e0] sm:$0xff] %v310
                %v312 = vld [vmem:[%s150 + $0x5c0] sm:$0xff]
                %313 = vst [vmem:[%s151 + $0x2e8] sm:$0xff] %v312
                %v314 = vld [vmem:[%s150 + $0x5e8] sm:$0xff]
                %315 = vst [vmem:[%s151 + $0x2f4] sm:$0xff] %v314
                %v316 = vld [vmem:[%s150 + $0x5f0] sm:$0xff]
                %317 = vst [vmem:[%s151 + $0x2fc] sm:$0xff] %v316
                %v318 = vld [vmem:[%s150 + $0x5f8] sm:$0xff]
                %319 = vst [vmem:[%s151 + $0x304] sm:$0xff] %v318
                %v320 = vld [vmem:[%s150 + $0x620] sm:$0xff]
                %321 = vst [vmem:[%s151 + $0x310] sm:$0xff] %v320
                %v322 = vld [vmem:[%s150 + $0x628] sm:$0xff]
                %323 = vst [vmem:[%s151 + $0x318] sm:$0xff] %v322
                %v324 = vld [vmem:[%s150 + $0x630] sm:$0xff]
                %325 = vst [vmem:[%s151 + $0x320] sm:$0xff] %v324
                %v326 = vld [vmem:[%s150 + $0x658] sm:$0xff]
                %327 = vst [vmem:[%s151 + $0x32c] sm:$0xff] %v326
                %v328 = vld [vmem:[%s150 + $0x660] sm:$0xff]
                %329 = vst [vmem:[%s151 + $0x334] sm:$0xff] %v328
                %v330 = vld [vmem:[%s150 + $0x668] sm:$0xff]
                %331 = vst [vmem:[%s151 + $0x33c] sm:$0xff] %v330
                %v332 = vld [vmem:[%s150 + $0x690] sm:$0xff]
                %333 = vst [vmem:[%s151 + $0x348] sm:$0xff] %v332
                %v334 = vld [vmem:[%s150 + $0x698] sm:$0xff]
                %335 = vst [vmem:[%s151 + $0x350] sm:$0xff] %v334
                %v336 = vld [vmem:[%s150 + $0x6a0] sm:$0xff]
                %337 = vst [vmem:[%s151 + $0x358] sm:$0xff] %v336
                %v338 = vld [vmem:[%s150 + $0x6c8] sm:$0xff]
                %339 = vst [vmem:[%s151 + $0x364] sm:$0xff] %v338
                %v340 = vld [vmem:[%s150 + $0x6d0] sm:$0xff]
                %341 = vst [vmem:[%s151 + $0x36c] sm:$0xff] %v340
                %v342 = vld [vmem:[%s150 + $0x6d8] sm:$0xff]
                %343 = vst [vmem:[%s151 + $0x374] sm:$0xff] %v342
              $region41: #{px_forward.3} parent=35 // loop_footer
                %s149 = sadd.s32 1, %s145
              $region42: #{px_forward.3} parent=35 // loop_footer_branch
                %144 = sbr.rel target = $region38
              $region43: #{px_forward.3} parent=35 // loop_exit
                _
              loop: start=0, step=1, limit=1
              $region44: #{px_forward.3} parent=35 // loop_pre_header
                _
              $region45: #{px_forward.3} parent=35 // loop_header
                %s346 = sphi 0, %s350
                %p347 = scmp.ge.s32.totalorder %s346, 1
                %s351 = sphi %s142, %s142
                %s352 = sphi %s143, %s143
              $region46: #{px_forward.3} parent=35 // loop_header_branch
                %349 = sbr.rel (%p347) target = $region50
              $region47: #{px_forward.3} parent=35 // loop_body
                %v353 = vld [vmem:[%s351] sm:$0xf]
                %354 = vst [vmem:[%s352] sm:$0xf] %v353
                %v355 = vld [vmem:[%s351 + $0x38] sm:$0xf]
                %356 = vst [vmem:[%s352 + $0x1c] sm:$0xf] %v355
                %v357 = vld [vmem:[%s351 + $0x70] sm:$0xf]
                %358 = vst [vmem:[%s352 + $0x38] sm:$0xf] %v357
                %v359 = vld [vmem:[%s351 + $0xa8] sm:$0xf]
                %360 = vst [vmem:[%s352 + $0x54] sm:$0xf] %v359
                %v361 = vld [vmem:[%s351 + $0xe0] sm:$0xf]
                %362 = vst [vmem:[%s352 + $0x70] sm:$0xf] %v361
                %v363 = vld [vmem:[%s351 + $0x118] sm:$0xf]
                %364 = vst [vmem:[%s352 + $0x8c] sm:$0xf] %v363
                %v365 = vld [vmem:[%s351 + $0x150] sm:$0xf]
                %366 = vst [vmem:[%s352 + $0xa8] sm:$0xf] %v365
                %v367 = vld [vmem:[%s351 + $0x188] sm:$0xf]
                %368 = vst [vmem:[%s352 + $0xc4] sm:$0xf] %v367
                %v369 = vld [vmem:[%s351 + $0x1c0] sm:$0xf]
                %370 = vst [vmem:[%s352 + $0xe0] sm:$0xf] %v369
                %v371 = vld [vmem:[%s351 + $0x1f8] sm:$0xf]
                %372 = vst [vmem:[%s352 + $0xfc] sm:$0xf] %v371
                %v373 = vld [vmem:[%s351 + $0x230] sm:$0xf]
                %374 = vst [vmem:[%s352 + $0x118] sm:$0xf] %v373
                %v375 = vld [vmem:[%s351 + $0x268] sm:$0xf]
                %376 = vst [vmem:[%s352 + $0x134] sm:$0xf] %v375
                %v377 = vld [vmem:[%s351 + $0x2a0] sm:$0xf]
                %378 = vst [vmem:[%s352 + $0x150] sm:$0xf] %v377
                %v379 = vld [vmem:[%s351 + $0x2d8] sm:$0xf]
                %380 = vst [vmem:[%s352 + $0x16c] sm:$0xf] %v379
                %v381 = vld [vmem:[%s351 + $0x310] sm:$0xf]
                %382 = vst [vmem:[%s352 + $0x188] sm:$0xf] %v381
                %v383 = vld [vmem:[%s351 + $0x348] sm:$0xf]
                %384 = vst [vmem:[%s352 + $0x1a4] sm:$0xf] %v383
                %v385 = vld [vmem:[%s351 + $0x380] sm:$0xf]
                %386 = vst [vmem:[%s352 + $0x1c0] sm:$0xf] %v385
                %v387 = vld [vmem:[%s351 + $0x3b8] sm:$0xf]
                %388 = vst [vmem:[%s352 + $0x1dc] sm:$0xf] %v387
                %v389 = vld [vmem:[%s351 + $0x3f0] sm:$0xf]
                %390 = vst [vmem:[%s352 + $0x1f8] sm:$0xf] %v389
                %v391 = vld [vmem:[%s351 + $0x428] sm:$0xf]
                %392 = vst [vmem:[%s352 + $0x214] sm:$0xf] %v391
                %v393 = vld [vmem:[%s351 + $0x460] sm:$0xf]
                %394 = vst [vmem:[%s352 + $0x230] sm:$0xf] %v393
                %v395 = vld [vmem:[%s351 + $0x498] sm:$0xf]
                %396 = vst [vmem:[%s352 + $0x24c] sm:$0xf] %v395
                %v397 = vld [vmem:[%s351 + $0x4d0] sm:$0xf]
                %398 = vst [vmem:[%s352 + $0x268] sm:$0xf] %v397
                %v399 = vld [vmem:[%s351 + $0x508] sm:$0xf]
                %400 = vst [vmem:[%s352 + $0x284] sm:$0xf] %v399
                %v401 = vld [vmem:[%s351 + $0x540] sm:$0xf]
                %402 = vst [vmem:[%s352 + $0x2a0] sm:$0xf] %v401
                %v403 = vld [vmem:[%s351 + $0x578] sm:$0xf]
                %404 = vst [vmem:[%s352 + $0x2bc] sm:$0xf] %v403
                %v405 = vld [vmem:[%s351 + $0x5b0] sm:$0xf]
                %406 = vst [vmem:[%s352 + $0x2d8] sm:$0xf] %v405
                %v407 = vld [vmem:[%s351 + $0x5e8] sm:$0xf]
                %408 = vst [vmem:[%s352 + $0x2f4] sm:$0xf] %v407
                %v409 = vld [vmem:[%s351 + $0x620] sm:$0xf]
                %410 = vst [vmem:[%s352 + $0x310] sm:$0xf] %v409
                %v411 = vld [vmem:[%s351 + $0x658] sm:$0xf]
                %412 = vst [vmem:[%s352 + $0x32c] sm:$0xf] %v411
                %v413 = vld [vmem:[%s351 + $0x690] sm:$0xf]
                %414 = vst [vmem:[%s352 + $0x348] sm:$0xf] %v413
                %v415 = vld [vmem:[%s351 + $0x6c8] sm:$0xf]
                %416 = vst [vmem:[%s352 + $0x364] sm:$0xf] %v415
              $region48: #{px_forward.3} parent=35 // loop_footer
                %s350 = sadd.s32 1, %s346
              $region49: #{px_forward.3} parent=35 // loop_footer_branch
                %345 = sbr.rel target = $region45
              $region50: #{px_forward.3} parent=35 // loop_exit
                _
            $region36: #{px_forward.3} parent=31 // pred_fallthru
              _
          $region32: #{px_forward.3} parent=27 // pred_fallthru
            _
          %417 = vnop
        $region28: #{px_forward.3} parent=23 // pred_fallthru
          _
      $region24: #{px_forward.3} parent=5 // pred_fallthru
        _
      %p418 = scmp.le.s32.totalorder 1, %s9
      %p419 = scmp.lt.s32.totalorder %s9, 3
      %p420 = pnand %p418, %p419
      %p421 = pneg %p420
      // Predicated region
      $region51: #{px_forward.3} parent=5 // pred_check
        _
      $region52: #{px_forward.3} parent=5 // pred_check_branch
        %423 = sbr.rel (%p420) target = $region54
      $region53: #{px_forward.3} parent=5 // pred_region
        %s424 = ssub.s32 %s9, 1
        %s425 = sand.u32 %s22, 1
        %s426 = sand.u32 %s22, 1
        %s427 = smul.addr %s426, 896
        %s428 = scalar_lea.vmem [#allocation2], %s427
        // Predicated region
        $region55: #{px_forward.3} parent=53 // pred_check
          %p429 = pneg %p35
        $region56: #{px_forward.3} parent=53 // pred_check_branch
          %431 = sbr.rel (%p429) target = $region58
        $region57: #{px_forward.3} parent=53 // pred_region
          _
        $region58: #{px_forward.3} parent=53 // pred_fallthru
          _
        %s432 = sand.u32 %s22, 1
        %s433 = sand.u32 %s22, 1
        %s434 = smul.addr %s433, 896
        %s435 = scalar_lea.vmem [#allocation2], %s434
        %p436 = pneg %p35
        %p437 = pneg %p32
        %p438 = pneg %p56
        %p439 = pneg %p53
        %p440 = pneg %p77
        %p441 = pneg %p74
        %p442 = pneg %p103
        %p443 = pneg %p100
        %s444 = sand.u32 %s90, 1
        %s445 = sand.u32 %s90, 1
        %s446 = smul.addr %s445, 112
        %s447 = scalar_lea.vmem [#allocation3], %s446
        %s448 = smul.u32 7, %s14
        %s449 = smul.u32 7, %s14
        %v451 = vld [vmem:[%s1] sm:$0xff]
        %v452 = vld [vmem:[%s1 + $0x8] sm:$0xff]
        %v453 = vld [vmem:[%s428] sm:$0xff]
        %v454 = vld [vmem:[%s428 + $0x8] sm:$0xff]
        %v455 = vld [vmem:[%s428 + $0x10] sm:$0xff]
        %v456 = vld [vmem:[%s428 + $0x18] sm:$0xf]
        %v457 = vld [vmem:[%s428 + $0x1c] sm:$0xff]
        %v458 = vld [vmem:[%s428 + $0x24] sm:$0xff]
        %v459 = vld [vmem:[%s428 + $0x2c] sm:$0xff]
        %v460 = vld [vmem:[%s428 + $0x34] sm:$0xf]
        %v461 = vld [vmem:[%s428 + $0x38] sm:$0xff]
        %v462 = vld [vmem:[%s428 + $0x40] sm:$0xff]
        %v463 = vld [vmem:[%s428 + $0x48] sm:$0xff]
        %v464 = vld [vmem:[%s428 + $0x50] sm:$0xf]
        %v465 = vld [vmem:[%s428 + $0x54] sm:$0xff]
        %v466 = vld [vmem:[%s428 + $0x5c] sm:$0xff]
        %v467 = vld [vmem:[%s428 + $0x64] sm:$0xff]
        %v468 = vld [vmem:[%s428 + $0x6c] sm:$0xf]
        %v469 = vld [vmem:[%s428 + $0x70] sm:$0xff]
        %v470 = vld [vmem:[%s428 + $0x78] sm:$0xff]
        %v471 = vld [vmem:[%s428 + $0x80] sm:$0xff]
        %v472 = vld [vmem:[%s428 + $0x88] sm:$0xf]
        %v473 = vld [vmem:[%s428 + $0x8c] sm:$0xff]
        %v474 = vld [vmem:[%s428 + $0x94] sm:$0xff]
        %v475 = vld [vmem:[%s428 + $0x9c] sm:$0xff]
        %v476 = vld [vmem:[%s428 + $0xa4] sm:$0xf]
        %v477 = vld [vmem:[%s428 + $0xa8] sm:$0xff]
        %v478 = vld [vmem:[%s428 + $0xb0] sm:$0xff]
        %v479 = vld [vmem:[%s428 + $0xb8] sm:$0xff]
        %v480 = vld [vmem:[%s428 + $0xc0] sm:$0xf]
        %v481 = vld [vmem:[%s428 + $0xc4] sm:$0xff]
        %v482 = vld [vmem:[%s428 + $0xcc] sm:$0xff]
        %v483 = vld [vmem:[%s428 + $0xd4] sm:$0xff]
        %v484 = vld [vmem:[%s428 + $0xdc] sm:$0xf]
        %v485 = vld [vmem:[%s428 + $0xe0] sm:$0xff]
        %v486 = vld [vmem:[%s428 + $0xe8] sm:$0xff]
        %v487 = vld [vmem:[%s428 + $0xf0] sm:$0xff]
        %v488 = vld [vmem:[%s428 + $0xf8] sm:$0xf]
        %v489 = vld [vmem:[%s428 + $0xfc] sm:$0xff]
        %v490 = vld [vmem:[%s428 + $0x104] sm:$0xff]
        %v491 = vld [vmem:[%s428 + $0x10c] sm:$0xff]
        %v492 = vld [vmem:[%s428 + $0x114] sm:$0xf]
        %v493 = vld [vmem:[%s428 + $0x118] sm:$0xff]
        %v494 = vld [vmem:[%s428 + $0x120] sm:$0xff]
        %v495 = vld [vmem:[%s428 + $0x128] sm:$0xff]
        %v496 = vld [vmem:[%s428 + $0x130] sm:$0xf]
        %v497 = vld [vmem:[%s428 + $0x134] sm:$0xff]
        %v498 = vld [vmem:[%s428 + $0x13c] sm:$0xff]
        %v499 = vld [vmem:[%s428 + $0x144] sm:$0xff]
        %v500 = vld [vmem:[%s428 + $0x14c] sm:$0xf]
        %v501 = vld [vmem:[%s428 + $0x150] sm:$0xff]
        %v502 = vld [vmem:[%s428 + $0x158] sm:$0xff]
        %v503 = vld [vmem:[%s428 + $0x160] sm:$0xff]
        %v504 = vld [vmem:[%s428 + $0x168] sm:$0xf]
        %v505 = vld [vmem:[%s428 + $0x16c] sm:$0xff]
        %v506 = vld [vmem:[%s428 + $0x174] sm:$0xff]
        %v507 = vld [vmem:[%s428 + $0x17c] sm:$0xff]
        %v508 = vld [vmem:[%s428 + $0x184] sm:$0xf]
        %v509 = vld [vmem:[%s428 + $0x188] sm:$0xff]
        %v510 = vld [vmem:[%s428 + $0x190] sm:$0xff]
        %v511 = vld [vmem:[%s428 + $0x198] sm:$0xff]
        %v512 = vld [vmem:[%s428 + $0x1a0] sm:$0xf]
        %v513 = vld [vmem:[%s428 + $0x1a4] sm:$0xff]
        %v514 = vld [vmem:[%s428 + $0x1ac] sm:$0xff]
        %v515 = vld [vmem:[%s428 + $0x1b4] sm:$0xff]
        %v516 = vld [vmem:[%s428 + $0x1bc] sm:$0xf]
        %v517 = vld [vmem:[%s428 + $0x1c0] sm:$0xff]
        %v518 = vld [vmem:[%s428 + $0x1c8] sm:$0xff]
        %v519 = vld [vmem:[%s428 + $0x1d0] sm:$0xff]
        %v520 = vld [vmem:[%s428 + $0x1d8] sm:$0xf]
        %v521 = vld [vmem:[%s428 + $0x1dc] sm:$0xff]
        %v522 = vld [vmem:[%s428 + $0x1e4] sm:$0xff]
        %v523 = vld [vmem:[%s428 + $0x1ec] sm:$0xff]
        %v524 = vld [vmem:[%s428 + $0x1f4] sm:$0xf]
        %v525 = vld [vmem:[%s428 + $0x1f8] sm:$0xff]
        %v526 = vld [vmem:[%s428 + $0x200] sm:$0xff]
        %v527 = vld [vmem:[%s428 + $0x208] sm:$0xff]
        %v528 = vld [vmem:[%s428 + $0x210] sm:$0xf]
        %v529 = vld [vmem:[%s428 + $0x214] sm:$0xff]
        %v530 = vld [vmem:[%s428 + $0x21c] sm:$0xff]
        %v531 = vld [vmem:[%s428 + $0x224] sm:$0xff]
        %v532 = vld [vmem:[%s428 + $0x22c] sm:$0xf]
        %v533 = vld [vmem:[%s428 + $0x230] sm:$0xff]
        %v534 = vld [vmem:[%s428 + $0x238] sm:$0xff]
        %v535 = vld [vmem:[%s428 + $0x240] sm:$0xff]
        %v536 = vld [vmem:[%s428 + $0x248] sm:$0xf]
        %v537 = vld [vmem:[%s428 + $0x24c] sm:$0xff]
        %v538 = vld [vmem:[%s428 + $0x254] sm:$0xff]
        %v539 = vld [vmem:[%s428 + $0x25c] sm:$0xff]
        %v540 = vld [vmem:[%s428 + $0x264] sm:$0xf]
        %v541 = vld [vmem:[%s428 + $0x268] sm:$0xff]
        %v542 = vld [vmem:[%s428 + $0x270] sm:$0xff]
        %v543 = vld [vmem:[%s428 + $0x278] sm:$0xff]
        %v544 = vld [vmem:[%s428 + $0x280] sm:$0xf]
        %v545 = vld [vmem:[%s428 + $0x284] sm:$0xff]
        %v546 = vld [vmem:[%s428 + $0x28c] sm:$0xff]
        %v547 = vld [vmem:[%s428 + $0x294] sm:$0xff]
        %v548 = vld [vmem:[%s428 + $0x29c] sm:$0xf]
        %v549 = vld [vmem:[%s428 + $0x2a0] sm:$0xff]
        %v550 = vld [vmem:[%s428 + $0x2a8] sm:$0xff]
        %v551 = vld [vmem:[%s428 + $0x2b0] sm:$0xff]
        %v552 = vld [vmem:[%s428 + $0x2b8] sm:$0xf]
        %v553 = vld [vmem:[%s428 + $0x2bc] sm:$0xff]
        %v554 = vld [vmem:[%s428 + $0x2c4] sm:$0xff]
        %v555 = vld [vmem:[%s428 + $0x2cc] sm:$0xff]
        %v556 = vld [vmem:[%s428 + $0x2d4] sm:$0xf]
        %v557 = vld [vmem:[%s428 + $0x2d8] sm:$0xff]
        %v558 = vld [vmem:[%s428 + $0x2e0] sm:$0xff]
        %v559 = vld [vmem:[%s428 + $0x2e8] sm:$0xff]
        %v560 = vld [vmem:[%s428 + $0x2f0] sm:$0xf]
        %v561 = vld [vmem:[%s428 + $0x2f4] sm:$0xff]
        %v562 = vld [vmem:[%s428 + $0x2fc] sm:$0xff]
        %v563 = vld [vmem:[%s428 + $0x304] sm:$0xff]
        %v564 = vld [vmem:[%s428 + $0x30c] sm:$0xf]
        %v565 = vld [vmem:[%s428 + $0x310] sm:$0xff]
        %v566 = vld [vmem:[%s428 + $0x318] sm:$0xff]
        %v567 = vld [vmem:[%s428 + $0x320] sm:$0xff]
        %v568 = vld [vmem:[%s428 + $0x328] sm:$0xf]
        %v569 = vld [vmem:[%s428 + $0x32c] sm:$0xff]
        %v570 = vld [vmem:[%s428 + $0x334] sm:$0xff]
        %v571 = vld [vmem:[%s428 + $0x33c] sm:$0xff]
        %v572 = vld [vmem:[%s428 + $0x344] sm:$0xf]
        %v573 = vld [vmem:[%s428 + $0x348] sm:$0xff]
        %v574 = vld [vmem:[%s428 + $0x350] sm:$0xff]
        %v575 = vld [vmem:[%s428 + $0x358] sm:$0xff]
        %v576 = vld [vmem:[%s428 + $0x360] sm:$0xf]
        %v577 = vld [vmem:[%s428 + $0x364] sm:$0x11]
        %v578 = vld [vmem:[%s428 + $0x36c] sm:$0x11]
        %v579 = vld [vmem:[%s428 + $0x374] sm:$0x11]
        %v580 = vld [vmem:[%s428 + $0x37c] sm:$0x1]
        %v581 = vld [vmem:[%s2] sm:$0xff]
        %v582 = vld [vmem:[%s2 + $0x8] sm:$0xff]
        %584 = vset.pattern.permute.xlu0 0
        %585 = vperm.xlu0 %584, %v581
        %v586 = vpop.permute.xlu0 %585
        %589 = vset.pattern.permute.xlu0 0
        %590 = vperm.xlu0 %589, %v582
        %v591 = vpop.permute.xlu0 %590
        %v595 = vunpack.c.l.b16 %v451
        %v596 = vunpack.c.h.b16 %v451
        %v597 = vunpack.c.l.b16 %v452
        %v598 = vunpack.c.h.b16 %v452
        %v599 = vpack.c.b16 %v597, %v595
        %v600 = vpack.c.b16 %v598, %v596
        %v730 = vunpack.c.l.b16 %v453
        %v731 = vunpack.c.h.b16 %v453
        %v732 = vunpack.c.l.b16 %v454
        %v733 = vunpack.c.h.b16 %v454
        %v734 = vunpack.c.l.b16 %v455
        %v735 = vunpack.c.h.b16 %v455
        %v736 = vunpack.c.l.b16 %v456
        %v737 = vunpack.c.l.b16 %v457
        %v738 = vunpack.c.h.b16 %v457
        %v739 = vunpack.c.l.b16 %v458
        %v740 = vunpack.c.h.b16 %v458
        %v741 = vunpack.c.l.b16 %v459
        %v742 = vunpack.c.h.b16 %v459
        %v743 = vunpack.c.l.b16 %v460
        %v744 = vunpack.c.l.b16 %v461
        %v745 = vunpack.c.h.b16 %v461
        %v746 = vunpack.c.l.b16 %v462
        %v747 = vunpack.c.h.b16 %v462
        %v748 = vunpack.c.l.b16 %v463
        %v749 = vunpack.c.h.b16 %v463
        %v750 = vunpack.c.l.b16 %v464
        %v751 = vunpack.c.l.b16 %v465
        %v752 = vunpack.c.h.b16 %v465
        %v753 = vunpack.c.l.b16 %v466
        %v754 = vunpack.c.h.b16 %v466
        %v755 = vunpack.c.l.b16 %v467
        %v756 = vunpack.c.h.b16 %v467
        %v757 = vunpack.c.l.b16 %v468
        %v758 = vunpack.c.l.b16 %v469
        %v759 = vunpack.c.h.b16 %v469
        %v760 = vunpack.c.l.b16 %v470
        %v761 = vunpack.c.h.b16 %v470
        %v762 = vunpack.c.l.b16 %v471
        %v763 = vunpack.c.h.b16 %v471
        %v764 = vunpack.c.l.b16 %v472
        %v765 = vunpack.c.l.b16 %v473
        %v766 = vunpack.c.h.b16 %v473
        %v767 = vunpack.c.l.b16 %v474
        %v768 = vunpack.c.h.b16 %v474
        %v769 = vunpack.c.l.b16 %v475
        %v770 = vunpack.c.h.b16 %v475
        %v771 = vunpack.c.l.b16 %v476
        %v772 = vunpack.c.l.b16 %v477
        %v773 = vunpack.c.h.b16 %v477
        %v774 = vunpack.c.l.b16 %v478
        %v775 = vunpack.c.h.b16 %v478
        %v776 = vunpack.c.l.b16 %v479
        %v777 = vunpack.c.h.b16 %v479
        %v778 = vunpack.c.l.b16 %v480
        %v779 = vunpack.c.l.b16 %v481
        %v780 = vunpack.c.h.b16 %v481
        %v781 = vunpack.c.l.b16 %v482
        %v782 = vunpack.c.h.b16 %v482
        %v783 = vunpack.c.l.b16 %v483
        %v784 = vunpack.c.h.b16 %v483
        %v785 = vunpack.c.l.b16 %v484
        %v786 = vunpack.c.l.b16 %v485
        %v787 = vunpack.c.h.b16 %v485
        %v788 = vunpack.c.l.b16 %v486
        %v789 = vunpack.c.h.b16 %v486
        %v790 = vunpack.c.l.b16 %v487
        %v791 = vunpack.c.h.b16 %v487
        %v792 = vunpack.c.l.b16 %v488
        %v793 = vunpack.c.l.b16 %v489
        %v794 = vunpack.c.h.b16 %v489
        %v795 = vunpack.c.l.b16 %v490
        %v796 = vunpack.c.h.b16 %v490
        %v797 = vunpack.c.l.b16 %v491
        %v798 = vunpack.c.h.b16 %v491
        %v799 = vunpack.c.l.b16 %v492
        %v800 = vunpack.c.l.b16 %v493
        %v801 = vunpack.c.h.b16 %v493
        %v802 = vunpack.c.l.b16 %v494
        %v803 = vunpack.c.h.b16 %v494
        %v804 = vunpack.c.l.b16 %v495
        %v805 = vunpack.c.h.b16 %v495
        %v806 = vunpack.c.l.b16 %v496
        %v807 = vunpack.c.l.b16 %v497
        %v808 = vunpack.c.h.b16 %v497
        %v809 = vunpack.c.l.b16 %v498
        %v810 = vunpack.c.h.b16 %v498
        %v811 = vunpack.c.l.b16 %v499
        %v812 = vunpack.c.h.b16 %v499
        %v813 = vunpack.c.l.b16 %v500
        %v814 = vunpack.c.l.b16 %v501
        %v815 = vunpack.c.h.b16 %v501
        %v816 = vunpack.c.l.b16 %v502
        %v817 = vunpack.c.h.b16 %v502
        %v818 = vunpack.c.l.b16 %v503
        %v819 = vunpack.c.h.b16 %v503
        %v820 = vunpack.c.l.b16 %v504
        %v821 = vunpack.c.l.b16 %v505
        %v822 = vunpack.c.h.b16 %v505
        %v823 = vunpack.c.l.b16 %v506
        %v824 = vunpack.c.h.b16 %v506
        %v825 = vunpack.c.l.b16 %v507
        %v826 = vunpack.c.h.b16 %v507
        %v827 = vunpack.c.l.b16 %v508
        %v828 = vunpack.c.l.b16 %v509
        %v829 = vunpack.c.h.b16 %v509
        %v830 = vunpack.c.l.b16 %v510
        %v831 = vunpack.c.h.b16 %v510
        %v832 = vunpack.c.l.b16 %v511
        %v833 = vunpack.c.h.b16 %v511
        %v834 = vunpack.c.l.b16 %v512
        %v835 = vunpack.c.l.b16 %v513
        %v836 = vunpack.c.h.b16 %v513
        %v837 = vunpack.c.l.b16 %v514
        %v838 = vunpack.c.h.b16 %v514
        %v839 = vunpack.c.l.b16 %v515
        %v840 = vunpack.c.h.b16 %v515
        %v841 = vunpack.c.l.b16 %v516
        %v842 = vunpack.c.l.b16 %v517
        %v843 = vunpack.c.h.b16 %v517
        %v844 = vunpack.c.l.b16 %v518
        %v845 = vunpack.c.h.b16 %v518
        %v846 = vunpack.c.l.b16 %v519
        %v847 = vunpack.c.h.b16 %v519
        %v848 = vunpack.c.l.b16 %v520
        %v849 = vunpack.c.l.b16 %v521
        %v850 = vunpack.c.h.b16 %v521
        %v851 = vunpack.c.l.b16 %v522
        %v852 = vunpack.c.h.b16 %v522
        %v853 = vunpack.c.l.b16 %v523
        %v854 = vunpack.c.h.b16 %v523
        %v855 = vunpack.c.l.b16 %v524
        %v856 = vunpack.c.l.b16 %v525
        %v857 = vunpack.c.h.b16 %v525
        %v858 = vunpack.c.l.b16 %v526
        %v859 = vunpack.c.h.b16 %v526
        %v860 = vunpack.c.l.b16 %v527
        %v861 = vunpack.c.h.b16 %v527
        %v862 = vunpack.c.l.b16 %v528
        %v863 = vunpack.c.l.b16 %v529
        %v864 = vunpack.c.h.b16 %v529
        %v865 = vunpack.c.l.b16 %v530
        %v866 = vunpack.c.h.b16 %v530
        %v867 = vunpack.c.l.b16 %v531
        %v868 = vunpack.c.h.b16 %v531
        %v869 = vunpack.c.l.b16 %v532
        %v870 = vunpack.c.l.b16 %v533
        %v871 = vunpack.c.h.b16 %v533
        %v872 = vunpack.c.l.b16 %v534
        %v873 = vunpack.c.h.b16 %v534
        %v874 = vunpack.c.l.b16 %v535
        %v875 = vunpack.c.h.b16 %v535
        %v876 = vunpack.c.l.b16 %v536
        %v877 = vunpack.c.l.b16 %v537
        %v878 = vunpack.c.h.b16 %v537
        %v879 = vunpack.c.l.b16 %v538
        %v880 = vunpack.c.h.b16 %v538
        %v881 = vunpack.c.l.b16 %v539
        %v882 = vunpack.c.h.b16 %v539
        %v883 = vunpack.c.l.b16 %v540
        %v884 = vunpack.c.l.b16 %v541
        %v885 = vunpack.c.h.b16 %v541
        %v886 = vunpack.c.l.b16 %v542
        %v887 = vunpack.c.h.b16 %v542
        %v888 = vunpack.c.l.b16 %v543
        %v889 = vunpack.c.h.b16 %v543
        %v890 = vunpack.c.l.b16 %v544
        %v891 = vunpack.c.l.b16 %v545
        %v892 = vunpack.c.h.b16 %v545
        %v893 = vunpack.c.l.b16 %v546
        %v894 = vunpack.c.h.b16 %v546
        %v895 = vunpack.c.l.b16 %v547
        %v896 = vunpack.c.h.b16 %v547
        %v897 = vunpack.c.l.b16 %v548
        %v898 = vunpack.c.l.b16 %v549
        %v899 = vunpack.c.h.b16 %v549
        %v900 = vunpack.c.l.b16 %v550
        %v901 = vunpack.c.h.b16 %v550
        %v902 = vunpack.c.l.b16 %v551
        %v903 = vunpack.c.h.b16 %v551
        %v904 = vunpack.c.l.b16 %v552
        %v905 = vunpack.c.l.b16 %v553
        %v906 = vunpack.c.h.b16 %v553
        %v907 = vunpack.c.l.b16 %v554
        %v908 = vunpack.c.h.b16 %v554
        %v909 = vunpack.c.l.b16 %v555
        %v910 = vunpack.c.h.b16 %v555
        %v911 = vunpack.c.l.b16 %v556
        %v912 = vunpack.c.l.b16 %v557
        %v913 = vunpack.c.h.b16 %v557
        %v914 = vunpack.c.l.b16 %v558
        %v915 = vunpack.c.h.b16 %v558
        %v916 = vunpack.c.l.b16 %v559
        %v917 = vunpack.c.h.b16 %v559
        %v918 = vunpack.c.l.b16 %v560
        %v919 = vunpack.c.l.b16 %v561
        %v920 = vunpack.c.h.b16 %v561
        %v921 = vunpack.c.l.b16 %v562
        %v922 = vunpack.c.h.b16 %v562
        %v923 = vunpack.c.l.b16 %v563
        %v924 = vunpack.c.h.b16 %v563
        %v925 = vunpack.c.l.b16 %v564
        %v926 = vunpack.c.l.b16 %v565
        %v927 = vunpack.c.h.b16 %v565
        %v928 = vunpack.c.l.b16 %v566
        %v929 = vunpack.c.h.b16 %v566
        %v930 = vunpack.c.l.b16 %v567
        %v931 = vunpack.c.h.b16 %v567
        %v932 = vunpack.c.l.b16 %v568
        %v933 = vunpack.c.l.b16 %v569
        %v934 = vunpack.c.h.b16 %v569
        %v935 = vunpack.c.l.b16 %v570
        %v936 = vunpack.c.h.b16 %v570
        %v937 = vunpack.c.l.b16 %v571
        %v938 = vunpack.c.h.b16 %v571
        %v939 = vunpack.c.l.b16 %v572
        %v940 = vunpack.c.l.b16 %v573
        %v941 = vunpack.c.h.b16 %v573
        %v942 = vunpack.c.l.b16 %v574
        %v943 = vunpack.c.h.b16 %v574
        %v944 = vunpack.c.l.b16 %v575
        %v945 = vunpack.c.h.b16 %v575
        %v946 = vunpack.c.l.b16 %v576
        %v947 = vunpack.c.l.b16 %v577
        %v948 = vunpack.c.h.b16 %v577
        %v949 = vunpack.c.l.b16 %v578
        %v950 = vunpack.c.h.b16 %v578
        %v951 = vunpack.c.l.b16 %v579
        %v952 = vunpack.c.h.b16 %v579
        %v953 = vunpack.c.l.b16 %v580
        %v954 = vpack.c.b16 %v737, %v730
        %v955 = vpack.c.b16 %v738, %v731
        %v956 = vpack.c.b16 %v739, %v732
        %v957 = vpack.c.b16 %v740, %v733
        %v958 = vpack.c.b16 %v741, %v734
        %v959 = vpack.c.b16 %v742, %v735
        %v960 = vpack.c.b16 %v743, %v736
        %v961 = vpack.c.b16 %v751, %v744
        %v962 = vpack.c.b16 %v752, %v745
        %v963 = vpack.c.b16 %v753, %v746
        %v964 = vpack.c.b16 %v754, %v747
        %v965 = vpack.c.b16 %v755, %v748
        %v966 = vpack.c.b16 %v756, %v749
        %v967 = vpack.c.b16 %v757, %v750
        %v968 = vpack.c.b16 %v765, %v758
        %v969 = vpack.c.b16 %v766, %v759
        %v970 = vpack.c.b16 %v767, %v760
        %v971 = vpack.c.b16 %v768, %v761
        %v972 = vpack.c.b16 %v769, %v762
        %v973 = vpack.c.b16 %v770, %v763
        %v974 = vpack.c.b16 %v771, %v764
        %v975 = vpack.c.b16 %v779, %v772
        %v976 = vpack.c.b16 %v780, %v773
        %v977 = vpack.c.b16 %v781, %v774
        %v978 = vpack.c.b16 %v782, %v775
        %v979 = vpack.c.b16 %v783, %v776
        %v980 = vpack.c.b16 %v784, %v777
        %v981 = vpack.c.b16 %v785, %v778
        %v982 = vpack.c.b16 %v793, %v786
        %v983 = vpack.c.b16 %v794, %v787
        %v984 = vpack.c.b16 %v795, %v788
        %v985 = vpack.c.b16 %v796, %v789
        %v986 = vpack.c.b16 %v797, %v790
        %v987 = vpack.c.b16 %v798, %v791
        %v988 = vpack.c.b16 %v799, %v792
        %v989 = vpack.c.b16 %v807, %v800
        %v990 = vpack.c.b16 %v808, %v801
        %v991 = vpack.c.b16 %v809, %v802
        %v992 = vpack.c.b16 %v810, %v803
        %v993 = vpack.c.b16 %v811, %v804
        %v994 = vpack.c.b16 %v812, %v805
        %v995 = vpack.c.b16 %v813, %v806
        %v996 = vpack.c.b16 %v821, %v814
        %v997 = vpack.c.b16 %v822, %v815
        %v998 = vpack.c.b16 %v823, %v816
        %v999 = vpack.c.b16 %v824, %v817
        %v1000 = vpack.c.b16 %v825, %v818
        %v1001 = vpack.c.b16 %v826, %v819
        %v1002 = vpack.c.b16 %v827, %v820
        %v1003 = vpack.c.b16 %v835, %v828
        %v1004 = vpack.c.b16 %v836, %v829
        %v1005 = vpack.c.b16 %v837, %v830
        %v1006 = vpack.c.b16 %v838, %v831
        %v1007 = vpack.c.b16 %v839, %v832
        %v1008 = vpack.c.b16 %v840, %v833
        %v1009 = vpack.c.b16 %v841, %v834
        %v1010 = vpack.c.b16 %v849, %v842
        %v1011 = vpack.c.b16 %v850, %v843
        %v1012 = vpack.c.b16 %v851, %v844
        %v1013 = vpack.c.b16 %v852, %v845
        %v1014 = vpack.c.b16 %v853, %v846
        %v1015 = vpack.c.b16 %v854, %v847
        %v1016 = vpack.c.b16 %v855, %v848
        %v1017 = vpack.c.b16 %v863, %v856
        %v1018 = vpack.c.b16 %v864, %v857
        %v1019 = vpack.c.b16 %v865, %v858
        %v1020 = vpack.c.b16 %v866, %v859
        %v1021 = vpack.c.b16 %v867, %v860
        %v1022 = vpack.c.b16 %v868, %v861
        %v1023 = vpack.c.b16 %v869, %v862
        %v1024 = vpack.c.b16 %v877, %v870
        %v1025 = vpack.c.b16 %v878, %v871
        %v1026 = vpack.c.b16 %v879, %v872
        %v1027 = vpack.c.b16 %v880, %v873
        %v1028 = vpack.c.b16 %v881, %v874
        %v1029 = vpack.c.b16 %v882, %v875
        %v1030 = vpack.c.b16 %v883, %v876
        %v1031 = vpack.c.b16 %v891, %v884
        %v1032 = vpack.c.b16 %v892, %v885
        %v1033 = vpack.c.b16 %v893, %v886
        %v1034 = vpack.c.b16 %v894, %v887
        %v1035 = vpack.c.b16 %v895, %v888
        %v1036 = vpack.c.b16 %v896, %v889
        %v1037 = vpack.c.b16 %v897, %v890
        %v1038 = vpack.c.b16 %v905, %v898
        %v1039 = vpack.c.b16 %v906, %v899
        %v1040 = vpack.c.b16 %v907, %v900
        %v1041 = vpack.c.b16 %v908, %v901
        %v1042 = vpack.c.b16 %v909, %v902
        %v1043 = vpack.c.b16 %v910, %v903
        %v1044 = vpack.c.b16 %v911, %v904
        %v1045 = vpack.c.b16 %v919, %v912
        %v1046 = vpack.c.b16 %v920, %v913
        %v1047 = vpack.c.b16 %v921, %v914
        %v1048 = vpack.c.b16 %v922, %v915
        %v1049 = vpack.c.b16 %v923, %v916
        %v1050 = vpack.c.b16 %v924, %v917
        %v1051 = vpack.c.b16 %v925, %v918
        %v1052 = vpack.c.b16 %v933, %v926
        %v1053 = vpack.c.b16 %v934, %v927
        %v1054 = vpack.c.b16 %v935, %v928
        %v1055 = vpack.c.b16 %v936, %v929
        %v1056 = vpack.c.b16 %v937, %v930
        %v1057 = vpack.c.b16 %v938, %v931
        %v1058 = vpack.c.b16 %v939, %v932
        %v1059 = vpack.c.b16 %v947, %v940
        %v1060 = vpack.c.b16 %v948, %v941
        %v1061 = vpack.c.b16 %v949, %v942
        %v1062 = vpack.c.b16 %v950, %v943
        %v1063 = vpack.c.b16 %v951, %v944
        %v1064 = vpack.c.b16 %v952, %v945
        %v1065 = vpack.c.b16 %v953, %v946
        %vm1171 = vcmask 998400
        %v1173 = vsel %vm1171, %v600, 0
        %vm1175 = vcmask 1044480
        %v1177 = vsel %vm1175, %v1059, 0
        %v1180 = vsel %vm1175, %v1060, 0
        %v1183 = vsel %vm1175, %v1061, 0
        %v1186 = vsel %vm1175, %v1062, 0
        %v1189 = vsel %vm1175, %v1063, 0
        %v1192 = vsel %vm1175, %v1064, 0
        %v1195 = vsel %vm1175, %v1065, 0
        %1197 = vmatprep.subr.bf16.mxu0 %v955
        %1198 = vmatpush1.bf16.msra.mxu0 %v954
        %1199 = vmatprep.subr.bf16.mxu0 %v962
        %1200 = vmatpush1.bf16.msra.mxu0 %v961
        %1201 = vmatprep.subr.bf16.mxu0 %v969
        %1202 = vmatpush1.bf16.msra.mxu0 %v968
        %1203 = vmatprep.subr.bf16.mxu0 %v976
        %1204 = vmatpush1.bf16.msra.mxu0 %v975
        %1205 = vmatprep.subr.bf16.mxu0 %v983
        %1206 = vmatpush1.bf16.msra.mxu0 %v982
        %1207 = vmatprep.subr.bf16.mxu0 %v990
        %1208 = vmatpush1.bf16.msra.mxu0 %v989
        %1209 = vmatprep.subr.bf16.mxu0 %v997
        %1210 = vmatpush1.bf16.msra.mxu0 %v996
        %1211 = vmatprep.subr.bf16.mxu0 %v1004
        %1212 = vmatpush1.bf16.msra.mxu0 %v1003
        %1213 = vmatprep.subr.bf16.mxu0 %v1011
        %1214 = vmatpush1.bf16.msra.mxu0 %v1010
        %1215 = vmatprep.subr.bf16.mxu0 %v1018
        %1216 = vmatpush1.bf16.msra.mxu0 %v1017
        %1217 = vmatprep.subr.bf16.mxu0 %v1025
        %1218 = vmatpush1.bf16.msra.mxu0 %v1024
        %1219 = vmatprep.subr.bf16.mxu0 %v1032
        %1220 = vmatpush1.bf16.msra.mxu0 %v1031
        %1221 = vmatprep.subr.bf16.mxu0 %v1039
        %1222 = vmatpush1.bf16.msra.mxu0 %v1038
        %1223 = vmatprep.subr.bf16.mxu0 %v1046
        %1224 = vmatpush1.bf16.msra.mxu0 %v1045
        %1225 = vmatprep.subr.bf16.mxu0 %v1053
        %1226 = vmatpush1.bf16.msra.mxu0 %v1052
        %1227 = vmatprep.subr.bf16.mxu0 %v1180
        %1228 = vmatpush1.bf16.msra.mxu0 %v1177
        %1229 = vmatprep.mubr.bf16.mxu0 %v1173
        %1230 = vmatmul.mubr.bf16.gmra.mrb[0].mxu0 %v599
        %v1231 = vpop.f32.mrb[0].mxu0
        %v1232 = vadd.f32 %v586, %v1231
        %v1233 = vpop.f32.mrb[0].mxu0
        %v1234 = vadd.f32 %v586, %v1233
        %v1235 = vpop.f32.mrb[0].mxu0
        %v1236 = vadd.f32 %v591, %v1235
        %v1237 = vpop.f32.mrb[0].mxu0
        %v1238 = vadd.f32 %v591, %v1237
        %1239 = vdwg.mxu0
        %1240 = vmatprep.subr.bf16.mxu0 %v957
        %1241 = vmatpush1.bf16.msra.mxu0 %v956
        %1242 = vmatprep.subr.bf16.mxu0 %v964
        %1243 = vmatpush1.bf16.msra.mxu0 %v963
        %1244 = vmatprep.subr.bf16.mxu0 %v971
        %1245 = vmatpush1.bf16.msra.mxu0 %v970
        %1246 = vmatprep.subr.bf16.mxu0 %v978
        %1247 = vmatpush1.bf16.msra.mxu0 %v977
        %1248 = vmatprep.subr.bf16.mxu0 %v985
        %1249 = vmatpush1.bf16.msra.mxu0 %v984
        %1250 = vmatprep.subr.bf16.mxu0 %v992
        %1251 = vmatpush1.bf16.msra.mxu0 %v991
        %1252 = vmatprep.subr.bf16.mxu0 %v999
        %1253 = vmatpush1.bf16.msra.mxu0 %v998
        %1254 = vmatprep.subr.bf16.mxu0 %v1006
        %1255 = vmatpush1.bf16.msra.mxu0 %v1005
        %1256 = vmatprep.subr.bf16.mxu0 %v1013
        %1257 = vmatpush1.bf16.msra.mxu0 %v1012
        %1258 = vmatprep.subr.bf16.mxu0 %v1020
        %1259 = vmatpush1.bf16.msra.mxu0 %v1019
        %1260 = vmatprep.subr.bf16.mxu0 %v1027
        %1261 = vmatpush1.bf16.msra.mxu0 %v1026
        %1262 = vmatprep.subr.bf16.mxu0 %v1034
        %1263 = vmatpush1.bf16.msra.mxu0 %v1033
        %1264 = vmatprep.subr.bf16.mxu0 %v1041
        %1265 = vmatpush1.bf16.msra.mxu0 %v1040
        %1266 = vmatprep.subr.bf16.mxu0 %v1048
        %1267 = vmatpush1.bf16.msra.mxu0 %v1047
        %1268 = vmatprep.subr.bf16.mxu0 %v1055
        %1269 = vmatpush1.bf16.msra.mxu0 %v1054
        %1270 = vmatprep.subr.bf16.mxu0 %v1186
        %1271 = vmatpush1.bf16.msra.mxu0 %v1183
        %1272 = vmatprep.mubr.bf16.mxu0 %v1173
        %1273 = vmatmul.mubr.bf16.gmra.mrb[0].mxu0 %v599
        %v1274 = vpop.f32.mrb[0].mxu0
        %v1275 = vadd.f32 %v586, %v1274
        %v1276 = vpop.f32.mrb[0].mxu0
        %v1277 = vadd.f32 %v586, %v1276
        %v1278 = vpop.f32.mrb[0].mxu0
        %v1279 = vadd.f32 %v591, %v1278
        %v1280 = vpop.f32.mrb[0].mxu0
        %v1281 = vadd.f32 %v591, %v1280
        %1282 = vdwg.mxu0
        %1283 = vmatprep.subr.bf16.mxu0 %v959
        %1284 = vmatpush1.bf16.msra.mxu0 %v958
        %1285 = vmatprep.subr.bf16.mxu0 %v966
        %1286 = vmatpush1.bf16.msra.mxu0 %v965
        %1287 = vmatprep.subr.bf16.mxu0 %v973
        %1288 = vmatpush1.bf16.msra.mxu0 %v972
        %1289 = vmatprep.subr.bf16.mxu0 %v980
        %1290 = vmatpush1.bf16.msra.mxu0 %v979
        %1291 = vmatprep.subr.bf16.mxu0 %v987
        %1292 = vmatpush1.bf16.msra.mxu0 %v986
        %1293 = vmatprep.subr.bf16.mxu0 %v994
        %1294 = vmatpush1.bf16.msra.mxu0 %v993
        %1295 = vmatprep.subr.bf16.mxu0 %v1001
        %1296 = vmatpush1.bf16.msra.mxu0 %v1000
        %1297 = vmatprep.subr.bf16.mxu0 %v1008
        %1298 = vmatpush1.bf16.msra.mxu0 %v1007
        %1299 = vmatprep.subr.bf16.mxu0 %v1015
        %1300 = vmatpush1.bf16.msra.mxu0 %v1014
        %1301 = vmatprep.subr.bf16.mxu0 %v1022
        %1302 = vmatpush1.bf16.msra.mxu0 %v1021
        %1303 = vmatprep.subr.bf16.mxu0 %v1029
        %1304 = vmatpush1.bf16.msra.mxu0 %v1028
        %1305 = vmatprep.subr.bf16.mxu0 %v1036
        %1306 = vmatpush1.bf16.msra.mxu0 %v1035
        %1307 = vmatprep.subr.bf16.mxu0 %v1043
        %1308 = vmatpush1.bf16.msra.mxu0 %v1042
        %1309 = vmatprep.subr.bf16.mxu0 %v1050
        %1310 = vmatpush1.bf16.msra.mxu0 %v1049
        %1311 = vmatprep.subr.bf16.mxu0 %v1057
        %1312 = vmatpush1.bf16.msra.mxu0 %v1056
        %1313 = vmatprep.subr.bf16.mxu0 %v1192
        %1314 = vmatpush1.bf16.msra.mxu0 %v1189
        %1315 = vmatprep.mubr.bf16.mxu0 %v1173
        %1316 = vmatmul.mubr.bf16.gmra.mrb[0].mxu0 %v599
        %v1317 = vpop.f32.mrb[0].mxu0
        %v1318 = vadd.f32 %v586, %v1317
        %v1319 = vpop.f32.mrb[0].mxu0
        %v1320 = vadd.f32 %v586, %v1319
        %v1321 = vpop.f32.mrb[0].mxu0
        %v1322 = vadd.f32 %v591, %v1321
        %v1323 = vpop.f32.mrb[0].mxu0
        %v1324 = vadd.f32 %v591, %v1323
        %1325 = vdwg.mxu0
        %1326 = vmatprep.subr.bf16.mxu0 0
        %1327 = vmatpush1.bf16.msra.mxu0 %v960
        %1328 = vmatprep.subr.bf16.mxu0 0
        %1329 = vmatpush1.bf16.msra.mxu0 %v967
        %1330 = vmatprep.subr.bf16.mxu0 0
        %1331 = vmatpush1.bf16.msra.mxu0 %v974
        %1332 = vmatprep.subr.bf16.mxu0 0
        %1333 = vmatpush1.bf16.msra.mxu0 %v981
        %1334 = vmatprep.subr.bf16.mxu0 0
        %1335 = vmatpush1.bf16.msra.mxu0 %v988
        %1336 = vmatprep.subr.bf16.mxu0 0
        %1337 = vmatpush1.bf16.msra.mxu0 %v995
        %1338 = vmatprep.subr.bf16.mxu0 0
        %1339 = vmatpush1.bf16.msra.mxu0 %v1002
        %1340 = vmatprep.subr.bf16.mxu0 0
        %1341 = vmatpush1.bf16.msra.mxu0 %v1009
        %1342 = vmatprep.subr.bf16.mxu0 0
        %1343 = vmatpush1.bf16.msra.mxu0 %v1016
        %1344 = vmatprep.subr.bf16.mxu0 0
        %1345 = vmatpush1.bf16.msra.mxu0 %v1023
        %1346 = vmatprep.subr.bf16.mxu0 0
        %1347 = vmatpush1.bf16.msra.mxu0 %v1030
        %1348 = vmatprep.subr.bf16.mxu0 0
        %1349 = vmatpush1.bf16.msra.mxu0 %v1037
        %1350 = vmatprep.subr.bf16.mxu0 0
        %1351 = vmatpush1.bf16.msra.mxu0 %v1044
        %1352 = vmatprep.subr.bf16.mxu0 0
        %1353 = vmatpush1.bf16.msra.mxu0 %v1051
        %1354 = vmatprep.subr.bf16.mxu0 0
        %1355 = vmatpush1.bf16.msra.mxu0 %v1058
        %1356 = vmatprep.subr.bf16.mxu0 0
        %1357 = vmatpush1.bf16.msra.mxu0 %v1195
        %1358 = vmatprep.mubr.bf16.mxu0 %v1173
        %1359 = vmatmul.mubr.bf16.gmra.mrb[0].mxu0 %v599
        %v1360 = vpop.f32.mrb[0].mxu0
        %v1361 = vadd.f32 %v586, %v1360
        %v1362 = vpop.f32.mrb[0].mxu0
        %v1363 = vpop.f32.mrb[0].mxu0
        %v1364 = vadd.f32 %v591, %v1363
        %v1365 = vpop.f32.mrb[0].mxu0
        %1366 = vdwg.mxu0
        %1367 = vst [vmem:[%s447] sm:$0xff] %v1232
        %1368 = vst [vmem:[%s447 + $0x8] sm:$0xff] %v1234
        %1369 = vst [vmem:[%s447 + $0x10] sm:$0xff] %v1275
        %1370 = vst [vmem:[%s447 + $0x18] sm:$0xff] %v1277
        %1371 = vst [vmem:[%s447 + $0x20] sm:$0xff] %v1318
        %1372 = vst [vmem:[%s447 + $0x28] sm:$0xff] %v1320
        %1373 = vst [vmem:[%s447 + $0x30] sm:$0xff] %v1361
        %1374 = vst [vmem:[%s447 + $0x38] sm:$0xff] %v1236
        %1375 = vst [vmem:[%s447 + $0x40] sm:$0xff] %v1238
        %1376 = vst [vmem:[%s447 + $0x48] sm:$0xff] %v1279
        %1377 = vst [vmem:[%s447 + $0x50] sm:$0xff] %v1281
        %1378 = vst [vmem:[%s447 + $0x58] sm:$0xff] %v1322
        %1379 = vst [vmem:[%s447 + $0x60] sm:$0xff] %v1324
        %1380 = vst [vmem:[%s447 + $0x68] sm:$0xff] %v1364
        %s1381 = sand.u32 %s90, 1
        %s1382 = sand.u32 %s90, 1
        %s1383 = smul.addr %s1382, 112
        %s1384 = scalar_lea.vmem [#allocation3], %s1383
        // Predicated region
        $region59: #{px_forward.3} parent=53 // pred_check
          %p1385 = pneg %p100
        $region60: #{px_forward.3} parent=53 // pred_check_branch
          %1387 = sbr.rel (%p1385) target = $region62
        $region61: #{px_forward.3} parent=53 // pred_region
          %s1388 = smul.u32 7, %s14
          %s1389 = smul.addr %s1388, 8
          %s1390 = scalar_lea.vmem %s3, %s1389
          // Predicated region
          $region63: #{px_forward.3} parent=61 // pred_check
            _
          $region64: #{px_forward.3} parent=61 // pred_check_branch
            %1392 = sbr.rel (0) target = $region66
          $region65: #{px_forward.3} parent=61 // pred_region
            // Predicated region
            $region67: #{px_forward.3} parent=65 // pred_check
              _
            $region68: #{px_forward.3} parent=65 // pred_check_branch
              %1394 = sbr.rel (0) target = $region70
            $region69: #{px_forward.3} parent=65 // pred_region
              loop: start=0, step=1, limit=1
              $region71: #{px_forward.3} parent=69 // loop_pre_header
                _
              $region72: #{px_forward.3} parent=69 // loop_header
                %s1396 = sphi 0, %s1400
                %p1397 = scmp.ge.s32.totalorder %s1396, 1
                %s1401 = sphi %s1384, %s1384
                %s1402 = sphi %s1390, %s1390
              $region73: #{px_forward.3} parent=69 // loop_header_branch
                %1399 = sbr.rel (%p1397) target = $region77
              $region74: #{px_forward.3} parent=69 // loop_body
                %v1403 = vld [vmem:[%s1401] sm:$0xff]
                %1404 = vst [vmem:[%s1402] sm:$0xff] %v1403
                %v1405 = vld [vmem:[%s1401 + $0x8] sm:$0xff]
                %1406 = vst [vmem:[%s1402 + $0x8] sm:$0xff] %v1405
                %v1407 = vld [vmem:[%s1401 + $0x10] sm:$0xff]
                %1408 = vst [vmem:[%s1402 + $0x10] sm:$0xff] %v1407
                %v1409 = vld [vmem:[%s1401 + $0x18] sm:$0xff]
                %1410 = vst [vmem:[%s1402 + $0x18] sm:$0xff] %v1409
                %v1411 = vld [vmem:[%s1401 + $0x20] sm:$0xff]
                %1412 = vst [vmem:[%s1402 + $0x20] sm:$0xff] %v1411
                %v1413 = vld [vmem:[%s1401 + $0x28] sm:$0xff]
                %1414 = vst [vmem:[%s1402 + $0x28] sm:$0xff] %v1413
                %v1415 = vld [vmem:[%s1401 + $0x30] sm:$0xff]
                %1416 = vst [vmem:[%s1402 + $0x30] sm:$0xff] %v1415
                %v1417 = vld [vmem:[%s1401 + $0x38] sm:$0xff]
                %1418 = vst [vmem:[%s1402 + $0x70] sm:$0xff] %v1417
                %v1419 = vld [vmem:[%s1401 + $0x40] sm:$0xff]
                %1420 = vst [vmem:[%s1402 + $0x78] sm:$0xff] %v1419
                %v1421 = vld [vmem:[%s1401 + $0x48] sm:$0xff]
                %1422 = vst [vmem:[%s1402 + $0x80] sm:$0xff] %v1421
                %v1423 = vld [vmem:[%s1401 + $0x50] sm:$0xff]
                %1424 = vst [vmem:[%s1402 + $0x88] sm:$0xff] %v1423
                %v1425 = vld [vmem:[%s1401 + $0x58] sm:$0xff]
                %1426 = vst [vmem:[%s1402 + $0x90] sm:$0xff] %v1425
                %v1427 = vld [vmem:[%s1401 + $0x60] sm:$0xff]
                %1428 = vst [vmem:[%s1402 + $0x98] sm:$0xff] %v1427
                %v1429 = vld [vmem:[%s1401 + $0x68] sm:$0xff]
                %1430 = vst [vmem:[%s1402 + $0xa0] sm:$0xff] %v1429
              $region75: #{px_forward.3} parent=69 // loop_footer
                %s1400 = sadd.s32 1, %s1396
              $region76: #{px_forward.3} parent=69 // loop_footer_branch
                %1395 = sbr.rel target = $region72
              $region77: #{px_forward.3} parent=69 // loop_exit
                _
            $region70: #{px_forward.3} parent=65 // pred_fallthru
              _
            // Predicated region
            $region78: #{px_forward.3} parent=65 // pred_check
              _
            $region79: #{px_forward.3} parent=65 // pred_check_branch
              %1432 = sbr.rel target = $region81
            $region80: #{px_forward.3} parent=65 // pred_region
              _
            $region81: #{px_forward.3} parent=65 // pred_fallthru
              _
          $region66: #{px_forward.3} parent=61 // pred_fallthru
            _
          %1433 = vnop
        $region62: #{px_forward.3} parent=53 // pred_fallthru
          _
      $region54: #{px_forward.3} parent=5 // pred_fallthru
        _
      %p1434 = scmp.le.s32.totalorder 2, %s9
      // Predicated region
      $region82: #{px_forward.3} parent=5 // pred_check
        %p1435 = pneg %p1434
      $region83: #{px_forward.3} parent=5 // pred_check_branch
        %1437 = sbr.rel (%p1435) target = $region85
      $region84: #{px_forward.3} parent=5 // pred_region
        %s1438 = ssub.s32 %s9, 2
        // Predicated region
        $region86: #{px_forward.3} parent=84 // pred_check
          %p1439 = pneg %p106
        $region87: #{px_forward.3} parent=84 // pred_check_branch
          %1441 = sbr.rel (%p1439) target = $region89
        $region88: #{px_forward.3} parent=84 // pred_region
          %s1442 = sand.u32 %s91, 1
          %s1443 = sand.u32 %s91, 1
          %s1444 = smul.addr %s1443, 112
          %s1445 = scalar_lea.vmem [#allocation3], %s1444
        $region89: #{px_forward.3} parent=84 // pred_fallthru
          _
      $region85: #{px_forward.3} parent=5 // pred_fallthru
        _
    $region6: #{px_forward.3} parent=1 // loop_footer
      %s13 = sadd.s32 1, %s9
    $region7: #{px_forward.3} parent=1 // loop_footer_branch
      %8 = sbr.rel target = $region3
    $region8: #{px_forward.3} parent=1 // loop_exit
      _

// kernel: px_forward.4
$region0: #{px_forward.4}
  #allocation0 [shape = 'u32[]', space=smem, size = 0x4, offset = 0x4, fixed_abs, tag = 'smem constant byte address 0x4 - core index']
  #allocation1 [shape = 'u32[144,128]{1,0:T(1,128)}', space=vmem, size = 0x12000, scoped, tag = 'internal scratch']
  %s0 = inlined_call_operand.vmem [shape: bf16[400,512], index: 0, kind: input, shape index: {}]
  %s1 = inlined_call_operand.vmem [shape: bf16[16,400], index: 1, kind: input, shape index: {}]
  %s2 = inlined_call_operand.vmem [shape: f32[16,1], index: 2, kind: input, shape index: {}]
  %s3 = inlined_call_operand.vmem [shape: f32[16,512], index: 3, kind: output, shape index: {}]
  %s4 = sld [smem:[#allocation0]]
  $region102: #{px_forward.4} parent=0
    _
  %s6 = ssub.s32 1, %s4
  %s7 = scalar_select 0, %s6, %s4
  $region1: #{px_forward.4} parent=0
    #allocation2 [shape = 'u8[409600]{0}', space=vmem, size = 0x64000, scoped, tag = 'input window, operand 0']
    #allocation3 [shape = 'u8[32768]{0}', space=vmem, size = 0x8000, scoped, tag = 'output window, operand 0']
    loop: start=0, step=1, limit=4
    $region2: #{px_forward.4} parent=1 // loop_pre_header
      _
    $region3: #{px_forward.4} parent=1 // loop_header
      %s9 = sphi 0, %s13
      %p10 = scmp.ge.s32.totalorder %s9, 4
      %s19 = sphi 0, %s21
      %s22 = sphi 0, %s19
      %s23 = sphi 0, %s22
      %s39 = sphi 0, %s23
      %s43 = sphi 0, %s43
      %s45 = sphi 0, %s43
      %s46 = sphi 0, %s45
      %s60 = sphi 0, %s46
      %s64 = sphi 0, %s64
      %s66 = sphi 0, %s64
      %s67 = sphi 0, %s66
      %s81 = sphi 0, %s67
      %s87 = sphi 0, %s89
      %s90 = sphi 0, %s87
      %s91 = sphi 0, %s90
      %s107 = sphi 0, %s91
    $region4: #{px_forward.4} parent=1 // loop_header_branch
      %12 = sbr.rel (%p10) target = $region8
    $region5: #{px_forward.4} parent=1 // loop_body
      %s14 = ssub.s32 %s9, 1
      %s15 = ssub.s32 %s9, 2
      %s16 = sadd.s32 %s9, 1
      %s17 = ssub.s32 %s9, %s16
      %p18 = scmp.eq.s32.totalorder %s17, 0
      %s20 = sadd.s32 %s19, 1
      %s21 = scalar_select %p18, %s19, %s20
      %p24 = pneg %p18
      %p25 = scmp.eq.s32.totalorder %s9, 1
      %p26 = por %p24, %p25
      %p27 = scmp.ne.s32.totalorder %s19, %s22
      %p28 = scmp.eq.s32.totalorder %s9, 0
      %p29 = por %p27, %p28
      %p30 = scmp.ne.s32.totalorder %s19, %s22
      %p31 = scmp.eq.s32.totalorder %s14, 1
      %p32 = por %p30, %p31
      %p33 = scmp.ne.s32.totalorder %s22, %s23
      %p34 = scmp.eq.s32.totalorder %s14, 0
      %p35 = por %p33, %p34
      %p36 = scmp.ne.s32.totalorder %s22, %s23
      %p37 = scmp.eq.s32.totalorder %s15, 1
      %p38 = por %p36, %p37
      %p40 = scmp.ne.s32.totalorder %s23, %s39
      %p41 = scmp.eq.s32.totalorder %s15, 0
      %p42 = por %p40, %p41
      %s44 = sadd.s32 %s43, 1
      %p47 = scmp.eq.s32.totalorder %s9, 1
      %p48 = scmp.ne.s32.totalorder %s43, %s45
      %p49 = scmp.eq.s32.totalorder %s9, 0
      %p50 = por %p48, %p49
      %p51 = scmp.ne.s32.totalorder %s43, %s45
      %p52 = scmp.eq.s32.totalorder %s14, 1
      %p53 = por %p51, %p52
      %p54 = scmp.ne.s32.totalorder %s45, %s46
      %p55 = scmp.eq.s32.totalorder %s14, 0
      %p56 = por %p54, %p55
      %p57 = scmp.ne.s32.totalorder %s45, %s46
      %p58 = scmp.eq.s32.totalorder %s15, 1
      %p59 = por %p57, %p58
      %p61 = scmp.ne.s32.totalorder %s46, %s60
      %p62 = scmp.eq.s32.totalorder %s15, 0
      %p63 = por %p61, %p62
      %s65 = sadd.s32 %s64, 1
      %p68 = scmp.eq.s32.totalorder %s9, 1
      %p69 = scmp.ne.s32.totalorder %s64, %s66
      %p70 = scmp.eq.s32.totalorder %s9, 0
      %p71 = por %p69, %p70
      %p72 = scmp.ne.s32.totalorder %s64, %s66
      %p73 = scmp.eq.s32.totalorder %s14, 1
      %p74 = por %p72, %p73
      %p75 = scmp.ne.s32.totalorder %s66, %s67
      %p76 = scmp.eq.s32.totalorder %s14, 0
      %p77 = por %p75, %p76
      %p78 = scmp.ne.s32.totalorder %s66, %s67
      %p79 = scmp.eq.s32.totalorder %s15, 1
      %p80 = por %p78, %p79
      %p82 = scmp.ne.s32.totalorder %s67, %s81
      %p83 = scmp.eq.s32.totalorder %s15, 0
      %p84 = por %p82, %p83
      %s85 = ssub.s32 %s9, %s16
      %p86 = scmp.eq.s32.totalorder %s85, 0
      %s88 = sadd.s32 %s87, 1
      %s89 = scalar_select %p86, %s87, %s88
      %p92 = pneg %p86
      %p93 = scmp.eq.s32.totalorder %s9, 1
      %p94 = por %p92, %p93
      %p95 = scmp.ne.s32.totalorder %s87, %s90
      %p96 = scmp.eq.s32.totalorder %s9, 0
      %p97 = por %p95, %p96
      %p98 = scmp.ne.s32.totalorder %s87, %s90
      %p99 = scmp.eq.s32.totalorder %s14, 1
      %p100 = por %p98, %p99
      %p101 = scmp.ne.s32.totalorder %s90, %s91
      %p102 = scmp.eq.s32.totalorder %s14, 0
      %p103 = por %p101, %p102
      %p104 = scmp.ne.s32.totalorder %s90, %s91
      %p105 = scmp.eq.s32.totalorder %s15, 1
      %p106 = por %p104, %p105
      %p108 = scmp.ne.s32.totalorder %s91, %s107
      %p109 = scmp.eq.s32.totalorder %s15, 0
      %p110 = por %p108, %p109
      %p111 = scmp.le.s32.totalorder 1, %s9
      %p112 = scmp.lt.s32.totalorder %s9, 3
      %p113 = pnand %p111, %p112
      %p114 = pneg %p113
      // Predicated region
      $region9: #{px_forward.4} parent=5 // pred_check
        _
      $region10: #{px_forward.4} parent=5 // pred_check_branch
        %116 = sbr.rel (%p113) target = $region12
      $region11: #{px_forward.4} parent=5 // pred_region
        %s117 = ssub.s32 %s9, 1
        // Predicated region
        $region13: #{px_forward.4} parent=11 // pred_check
          %p118 = pneg %p56
        $region14: #{px_forward.4} parent=11 // pred_check_branch
          %120 = sbr.rel (%p118) target = $region16
        $region15: #{px_forward.4} parent=11 // pred_region
          _
        $region16: #{px_forward.4} parent=11 // pred_fallthru
          _
        // Predicated region
        $region17: #{px_forward.4} parent=11 // pred_check
          %p121 = pneg %p77
        $region18: #{px_forward.4} parent=11 // pred_check_branch
          %123 = sbr.rel (%p121) target = $region20
        $region19: #{px_forward.4} parent=11 // pred_region
          _
        $region20: #{px_forward.4} parent=11 // pred_fallthru
          _
      $region12: #{px_forward.4} parent=5 // pred_fallthru
        _
      %p124 = scmp.lt.s32.totalorder %s9, 2
      // Predicated region
      $region21: #{px_forward.4} parent=5 // pred_check
        %p125 = pneg %p124
      $region22: #{px_forward.4} parent=5 // pred_check_branch
        %127 = sbr.rel (%p125) target = $region24
      $region23: #{px_forward.4} parent=5 // pred_region
        // Predicated region
        $region25: #{px_forward.4} parent=23 // pred_check
          %p128 = pneg %p29
        $region26: #{px_forward.4} parent=23 // pred_check_branch
          %130 = sbr.rel (%p128) target = $region28
        $region27: #{px_forward.4} parent=23 // pred_region
          %s131 = sand.u32 %s19, 1
          %s132 = sand.u32 %s19, 1
          %s133 = smul.addr %s132, 400
          %s134 = scalar_lea.vmem [#allocation2], %s133
          %s135 = smul.u32 2, %s9
          %s136 = smul.addr %s135, 4
          %s137 = scalar_lea.vmem %s0, %s136
          // Predicated region
          $region29: #{px_forward.4} parent=27 // pred_check
            _
          $region30: #{px_forward.4} parent=27 // pred_check_branch
            %139 = sbr.rel (0) target = $region32
          $region31: #{px_forward.4} parent=27 // pred_region
            // Predicated region
            $region33: #{px_forward.4} parent=31 // pred_check
              _
            $region34: #{px_forward.4} parent=31 // pred_check_branch
              %141 = sbr.rel (0) target = $region36
            $region35: #{px_forward.4} parent=31 // pred_region
              // Predicated region
              $region48: #{px_forward.4} parent=35 // pred_check
                _
              $region49: #{px_forward.4} parent=35 // pred_check_branch
                %254 = sbr.rel (0) target = $region51
              $region50: #{px_forward.4} parent=35 // pred_region
                loop: start=0, step=1, limit=1
                $region52: #{px_forward.4} parent=50 // loop_pre_header
                  _
                $region53: #{px_forward.4} parent=50 // loop_header
                  %s256 = sphi 0, %s260
                  %p257 = scmp.ge.s32.totalorder %s256, 1
                  %s261 = sphi %s137, %s137
                  %s262 = sphi %s134, %s134
                $region54: #{px_forward.4} parent=50 // loop_header_branch
                  %259 = sbr.rel (%p257) target = $region58
                $region55: #{px_forward.4} parent=50 // loop_body
                  %v263 = vld [vmem:[%s261] sm:$0xff]
                  %264 = vst [vmem:[%s262] sm:$0xff] %v263
                  %v265 = vld [vmem:[%s261 + $0x10] sm:$0xff]
                  %266 = vst [vmem:[%s262 + $0x8] sm:$0xff] %v265
                  %v267 = vld [vmem:[%s261 + $0x20] sm:$0xff]
                  %268 = vst [vmem:[%s262 + $0x10] sm:$0xff] %v267
                  %v269 = vld [vmem:[%s261 + $0x30] sm:$0xff]
                  %270 = vst [vmem:[%s262 + $0x18] sm:$0xff] %v269
                  %v271 = vld [vmem:[%s261 + $0x40] sm:$0xff]
                  %272 = vst [vmem:[%s262 + $0x20] sm:$0xff] %v271
                  %v273 = vld [vmem:[%s261 + $0x50] sm:$0xff]
                  %274 = vst [vmem:[%s262 + $0x28] sm:$0xff] %v273
                  %v275 = vld [vmem:[%s261 + $0x60] sm:$0xff]
                  %276 = vst [vmem:[%s262 + $0x30] sm:$0xff] %v275
                  %v277 = vld [vmem:[%s261 + $0x70] sm:$0xff]
                  %278 = vst [vmem:[%s262 + $0x38] sm:$0xff] %v277
                  %v279 = vld [vmem:[%s261 + $0x80] sm:$0xff]
                  %280 = vst [vmem:[%s262 + $0x40] sm:$0xff] %v279
                  %v281 = vld [vmem:[%s261 + $0x90] sm:$0xff]
                  %282 = vst [vmem:[%s262 + $0x48] sm:$0xff] %v281
                  %v283 = vld [vmem:[%s261 + $0xa0] sm:$0xff]
                  %284 = vst [vmem:[%s262 + $0x50] sm:$0xff] %v283
                  %v285 = vld [vmem:[%s261 + $0xb0] sm:$0xff]
                  %286 = vst [vmem:[%s262 + $0x58] sm:$0xff] %v285
                  %v287 = vld [vmem:[%s261 + $0xc0] sm:$0xff]
                  %288 = vst [vmem:[%s262 + $0x60] sm:$0xff] %v287
                  %v289 = vld [vmem:[%s261 + $0xd0] sm:$0xff]
                  %290 = vst [vmem:[%s262 + $0x68] sm:$0xff] %v289
                  %v291 = vld [vmem:[%s261 + $0xe0] sm:$0xff]
                  %292 = vst [vmem:[%s262 + $0x70] sm:$0xff] %v291
                  %v293 = vld [vmem:[%s261 + $0xf0] sm:$0xff]
                  %294 = vst [vmem:[%s262 + $0x78] sm:$0xff] %v293
                  %v295 = vld [vmem:[%s261 + $0x100] sm:$0xff]
                  %296 = vst [vmem:[%s262 + $0x80] sm:$0xff] %v295
                  %v297 = vld [vmem:[%s261 + $0x110] sm:$0xff]
                  %298 = vst [vmem:[%s262 + $0x88] sm:$0xff] %v297
                  %v299 = vld [vmem:[%s261 + $0x120] sm:$0xff]
                  %300 = vst [vmem:[%s262 + $0x90] sm:$0xff] %v299
                  %v301 = vld [vmem:[%s261 + $0x130] sm:$0xff]
                  %302 = vst [vmem:[%s262 + $0x98] sm:$0xff] %v301
                  %v303 = vld [vmem:[%s261 + $0x140] sm:$0xff]
                  %304 = vst [vmem:[%s262 + $0xa0] sm:$0xff] %v303
                  %v305 = vld [vmem:[%s261 + $0x150] sm:$0xff]
                  %306 = vst [vmem:[%s262 + $0xa8] sm:$0xff] %v305
                  %v307 = vld [vmem:[%s261 + $0x160] sm:$0xff]
                  %308 = vst [vmem:[%s262 + $0xb0] sm:$0xff] %v307
                  %v309 = vld [vmem:[%s261 + $0x170] sm:$0xff]
                  %310 = vst [vmem:[%s262 + $0xb8] sm:$0xff] %v309
                  %v311 = vld [vmem:[%s261 + $0x180] sm:$0xff]
                  %312 = vst [vmem:[%s262 + $0xc0] sm:$0xff] %v311
                  %v313 = vld [vmem:[%s261 + $0x190] sm:$0xff]
                  %314 = vst [vmem:[%s262 + $0xc8] sm:$0xff] %v313
                  %v315 = vld [vmem:[%s261 + $0x1a0] sm:$0xff]
                  %316 = vst [vmem:[%s262 + $0xd0] sm:$0xff] %v315
                  %v317 = vld [vmem:[%s261 + $0x1b0] sm:$0xff]
                  %318 = vst [vmem:[%s262 + $0xd8] sm:$0xff] %v317
                  %v319 = vld [vmem:[%s261 + $0x1c0] sm:$0xff]
                  %320 = vst [vmem:[%s262 + $0xe0] sm:$0xff] %v319
                  %v321 = vld [vmem:[%s261 + $0x1d0] sm:$0xff]
                  %322 = vst [vmem:[%s262 + $0xe8] sm:$0xff] %v321
                  %v323 = vld [vmem:[%s261 + $0x1e0] sm:$0xff]
                  %324 = vst [vmem:[%s262 + $0xf0] sm:$0xff] %v323
                  %v325 = vld [vmem:[%s261 + $0x1f0] sm:$0xff]
                  %326 = vst [vmem:[%s262 + $0xf8] sm:$0xff] %v325
                  %v327 = vld [vmem:[%s261 + $0x200] sm:$0xff]
                  %328 = vst [vmem:[%s262 + $0x100] sm:$0xff] %v327
                  %v329 = vld [vmem:[%s261 + $0x210] sm:$0xff]
                  %330 = vst [vmem:[%s262 + $0x108] sm:$0xff] %v329
                  %v331 = vld [vmem:[%s261 + $0x220] sm:$0xff]
                  %332 = vst [vmem:[%s262 + $0x110] sm:$0xff] %v331
                  %v333 = vld [vmem:[%s261 + $0x230] sm:$0xff]
                  %334 = vst [vmem:[%s262 + $0x118] sm:$0xff] %v333
                  %v335 = vld [vmem:[%s261 + $0x240] sm:$0xff]
                  %336 = vst [vmem:[%s262 + $0x120] sm:$0xff] %v335
                  %v337 = vld [vmem:[%s261 + $0x250] sm:$0xff]
                  %338 = vst [vmem:[%s262 + $0x128] sm:$0xff] %v337
                  %v339 = vld [vmem:[%s261 + $0x260] sm:$0xff]
                  %340 = vst [vmem:[%s262 + $0x130] sm:$0xff] %v339
                  %v341 = vld [vmem:[%s261 + $0x270] sm:$0xff]
                  %342 = vst [vmem:[%s262 + $0x138] sm:$0xff] %v341
                  %v343 = vld [vmem:[%s261 + $0x280] sm:$0xff]
                  %344 = vst [vmem:[%s262 + $0x140] sm:$0xff] %v343
                  %v345 = vld [vmem:[%s261 + $0x290] sm:$0xff]
                  %346 = vst [vmem:[%s262 + $0x148] sm:$0xff] %v345
                  %v347 = vld [vmem:[%s261 + $0x2a0] sm:$0xff]
                  %348 = vst [vmem:[%s262 + $0x150] sm:$0xff] %v347
                  %v349 = vld [vmem:[%s261 + $0x2b0] sm:$0xff]
                  %350 = vst [vmem:[%s262 + $0x158] sm:$0xff] %v349
                  %v351 = vld [vmem:[%s261 + $0x2c0] sm:$0xff]
                  %352 = vst [vmem:[%s262 + $0x160] sm:$0xff] %v351
                  %v353 = vld [vmem:[%s261 + $0x2d0] sm:$0xff]
                  %354 = vst [vmem:[%s262 + $0x168] sm:$0xff] %v353
                  %v355 = vld [vmem:[%s261 + $0x2e0] sm:$0xff]
                  %356 = vst [vmem:[%s262 + $0x170] sm:$0xff] %v355
                  %v357 = vld [vmem:[%s261 + $0x2f0] sm:$0xff]
                  %358 = vst [vmem:[%s262 + $0x178] sm:$0xff] %v357
                  %v359 = vld [vmem:[%s261 + $0x300] sm:$0xff]
                  %360 = vst [vmem:[%s262 + $0x180] sm:$0xff] %v359
                  %v361 = vld [vmem:[%s261 + $0x310] sm:$0xff]
                  %362 = vst [vmem:[%s262 + $0x188] sm:$0xff] %v361
                $region56: #{px_forward.4} parent=50 // loop_footer
                  %s260 = sadd.s32 1, %s256
                $region57: #{px_forward.4} parent=50 // loop_footer_branch
                  %255 = sbr.rel target = $region53
                $region58: #{px_forward.4} parent=50 // loop_exit
                  _
              $region51: #{px_forward.4} parent=35 // pred_fallthru
                _
              // Predicated region
              $region59: #{px_forward.4} parent=35 // pred_check
                _
              $region60: #{px_forward.4} parent=35 // pred_check_branch
                %364 = sbr.rel target = $region62
              $region61: #{px_forward.4} parent=35 // pred_region
                _
              $region62: #{px_forward.4} parent=35 // pred_fallthru
                _
            $region36: #{px_forward.4} parent=31 // pred_fallthru
              _
            // Predicated region
            $region37: #{px_forward.4} parent=31 // pred_check
              _
            $region38: #{px_forward.4} parent=31 // pred_check_branch
              %143 = sbr.rel target = $region40
            $region39: #{px_forward.4} parent=31 // pred_region
              loop: start=0, step=1, limit=1
              $region41: #{px_forward.4} parent=39 // loop_pre_header
                _
              $region42: #{px_forward.4} parent=39 // loop_header
                %s146 = sphi 0, %s150
                %p147 = scmp.ge.s32.totalorder %s146, 1
                %s151 = sphi %s137, %s137
                %s152 = sphi %s134, %s134
              $region43: #{px_forward.4} parent=39 // loop_header_branch
                %149 = sbr.rel (%p147) target = $region47
              $region44: #{px_forward.4} parent=39 // loop_body
                %v153 = vld [vmem:[%s151] sm:$0xff]
                %154 = vst [vmem:[%s152] sm:$0xff] %v153
                %v155 = vld [vmem:[%s151 + $0x10] sm:$0xff]
                %156 = vst [vmem:[%s152 + $0x8] sm:$0xff] %v155
                %v157 = vld [vmem:[%s151 + $0x20] sm:$0xff]
                %158 = vst [vmem:[%s152 + $0x10] sm:$0xff] %v157
                %v159 = vld [vmem:[%s151 + $0x30] sm:$0xff]
                %160 = vst [vmem:[%s152 + $0x18] sm:$0xff] %v159
                %v161 = vld [vmem:[%s151 + $0x40] sm:$0xff]
                %162 = vst [vmem:[%s152 + $0x20] sm:$0xff] %v161
                %v163 = vld [vmem:[%s151 + $0x50] sm:$0xff]
                %164 = vst [vmem:[%s152 + $0x28] sm:$0xff] %v163
                %v165 = vld [vmem:[%s151 + $0x60] sm:$0xff]
                %166 = vst [vmem:[%s152 + $0x30] sm:$0xff] %v165
                %v167 = vld [vmem:[%s151 + $0x70] sm:$0xff]
                %168 = vst [vmem:[%s152 + $0x38] sm:$0xff] %v167
                %v169 = vld [vmem:[%s151 + $0x80] sm:$0xff]
                %170 = vst [vmem:[%s152 + $0x40] sm:$0xff] %v169
                %v171 = vld [vmem:[%s151 + $0x90] sm:$0xff]
                %172 = vst [vmem:[%s152 + $0x48] sm:$0xff] %v171
                %v173 = vld [vmem:[%s151 + $0xa0] sm:$0xff]
                %174 = vst [vmem:[%s152 + $0x50] sm:$0xff] %v173
                %v175 = vld [vmem:[%s151 + $0xb0] sm:$0xff]
                %176 = vst [vmem:[%s152 + $0x58] sm:$0xff] %v175
                %v177 = vld [vmem:[%s151 + $0xc0] sm:$0xff]
                %178 = vst [vmem:[%s152 + $0x60] sm:$0xff] %v177
                %v179 = vld [vmem:[%s151 + $0xd0] sm:$0xff]
                %180 = vst [vmem:[%s152 + $0x68] sm:$0xff] %v179
                %v181 = vld [vmem:[%s151 + $0xe0] sm:$0xff]
                %182 = vst [vmem:[%s152 + $0x70] sm:$0xff] %v181
                %v183 = vld [vmem:[%s151 + $0xf0] sm:$0xff]
                %184 = vst [vmem:[%s152 + $0x78] sm:$0xff] %v183
                %v185 = vld [vmem:[%s151 + $0x100] sm:$0xff]
                %186 = vst [vmem:[%s152 + $0x80] sm:$0xff] %v185
                %v187 = vld [vmem:[%s151 + $0x110] sm:$0xff]
                %188 = vst [vmem:[%s152 + $0x88] sm:$0xff] %v187
                %v189 = vld [vmem:[%s151 + $0x120] sm:$0xff]
                %190 = vst [vmem:[%s152 + $0x90] sm:$0xff] %v189
                %v191 = vld [vmem:[%s151 + $0x130] sm:$0xff]
                %192 = vst [vmem:[%s152 + $0x98] sm:$0xff] %v191
                %v193 = vld [vmem:[%s151 + $0x140] sm:$0xff]
                %194 = vst [vmem:[%s152 + $0xa0] sm:$0xff] %v193
                %v195 = vld [vmem:[%s151 + $0x150] sm:$0xff]
                %196 = vst [vmem:[%s152 + $0xa8] sm:$0xff] %v195
                %v197 = vld [vmem:[%s151 + $0x160] sm:$0xff]
                %198 = vst [vmem:[%s152 + $0xb0] sm:$0xff] %v197
                %v199 = vld [vmem:[%s151 + $0x170] sm:$0xff]
                %200 = vst [vmem:[%s152 + $0xb8] sm:$0xff] %v199
                %v201 = vld [vmem:[%s151 + $0x180] sm:$0xff]
                %202 = vst [vmem:[%s152 + $0xc0] sm:$0xff] %v201
                %v203 = vld [vmem:[%s151 + $0x190] sm:$0xff]
                %204 = vst [vmem:[%s152 + $0xc8] sm:$0xff] %v203
                %v205 = vld [vmem:[%s151 + $0x1a0] sm:$0xff]
                %206 = vst [vmem:[%s152 + $0xd0] sm:$0xff] %v205
                %v207 = vld [vmem:[%s151 + $0x1b0] sm:$0xff]
                %208 = vst [vmem:[%s152 + $0xd8] sm:$0xff] %v207
                %v209 = vld [vmem:[%s151 + $0x1c0] sm:$0xff]
                %210 = vst [vmem:[%s152 + $0xe0] sm:$0xff] %v209
                %v211 = vld [vmem:[%s151 + $0x1d0] sm:$0xff]
                %212 = vst [vmem:[%s152 + $0xe8] sm:$0xff] %v211
                %v213 = vld [vmem:[%s151 + $0x1e0] sm:$0xff]
                %214 = vst [vmem:[%s152 + $0xf0] sm:$0xff] %v213
                %v215 = vld [vmem:[%s151 + $0x1f0] sm:$0xff]
                %216 = vst [vmem:[%s152 + $0xf8] sm:$0xff] %v215
                %v217 = vld [vmem:[%s151 + $0x200] sm:$0xff]
                %218 = vst [vmem:[%s152 + $0x100] sm:$0xff] %v217
                %v219 = vld [vmem:[%s151 + $0x210] sm:$0xff]
                %220 = vst [vmem:[%s152 + $0x108] sm:$0xff] %v219
                %v221 = vld [vmem:[%s151 + $0x220] sm:$0xff]
                %222 = vst [vmem:[%s152 + $0x110] sm:$0xff] %v221
                %v223 = vld [vmem:[%s151 + $0x230] sm:$0xff]
                %224 = vst [vmem:[%s152 + $0x118] sm:$0xff] %v223
                %v225 = vld [vmem:[%s151 + $0x240] sm:$0xff]
                %226 = vst [vmem:[%s152 + $0x120] sm:$0xff] %v225
                %v227 = vld [vmem:[%s151 + $0x250] sm:$0xff]
                %228 = vst [vmem:[%s152 + $0x128] sm:$0xff] %v227
                %v229 = vld [vmem:[%s151 + $0x260] sm:$0xff]
                %230 = vst [vmem:[%s152 + $0x130] sm:$0xff] %v229
                %v231 = vld [vmem:[%s151 + $0x270] sm:$0xff]
                %232 = vst [vmem:[%s152 + $0x138] sm:$0xff] %v231
                %v233 = vld [vmem:[%s151 + $0x280] sm:$0xff]
                %234 = vst [vmem:[%s152 + $0x140] sm:$0xff] %v233
                %v235 = vld [vmem:[%s151 + $0x290] sm:$0xff]
                %236 = vst [vmem:[%s152 + $0x148] sm:$0xff] %v235
                %v237 = vld [vmem:[%s151 + $0x2a0] sm:$0xff]
                %238 = vst [vmem:[%s152 + $0x150] sm:$0xff] %v237
                %v239 = vld [vmem:[%s151 + $0x2b0] sm:$0xff]
                %240 = vst [vmem:[%s152 + $0x158] sm:$0xff] %v239
                %v241 = vld [vmem:[%s151 + $0x2c0] sm:$0xff]
                %242 = vst [vmem:[%s152 + $0x160] sm:$0xff] %v241
                %v243 = vld [vmem:[%s151 + $0x2d0] sm:$0xff]
                %244 = vst [vmem:[%s152 + $0x168] sm:$0xff] %v243
                %v245 = vld [vmem:[%s151 + $0x2e0] sm:$0xff]
                %246 = vst [vmem:[%s152 + $0x170] sm:$0xff] %v245
                %v247 = vld [vmem:[%s151 + $0x2f0] sm:$0xff]
                %248 = vst [vmem:[%s152 + $0x178] sm:$0xff] %v247
                %v249 = vld [vmem:[%s151 + $0x300] sm:$0xff]
                %250 = vst [vmem:[%s152 + $0x180] sm:$0xff] %v249
                %v251 = vld [vmem:[%s151 + $0x310] sm:$0xff]
                %252 = vst [vmem:[%s152 + $0x188] sm:$0xff] %v251
              $region45: #{px_forward.4} parent=39 // loop_footer
                %s150 = sadd.s32 1, %s146
              $region46: #{px_forward.4} parent=39 // loop_footer_branch
                %145 = sbr.rel target = $region42
              $region47: #{px_forward.4} parent=39 // loop_exit
                _
            $region40: #{px_forward.4} parent=31 // pred_fallthru
              _
          $region32: #{px_forward.4} parent=27 // pred_fallthru
            _
          %365 = vnop
        $region28: #{px_forward.4} parent=23 // pred_fallthru
          _
      $region24: #{px_forward.4} parent=5 // pred_fallthru
        _
      %p366 = scmp.le.s32.totalorder 1, %s9
      %p367 = scmp.lt.s32.totalorder %s9, 3
      %p368 = pnand %p366, %p367
      %p369 = pneg %p368
      // Predicated region
      $region63: #{px_forward.4} parent=5 // pred_check
        _
      $region64: #{px_forward.4} parent=5 // pred_check_branch
        %371 = sbr.rel (%p368) target = $region66
      $region65: #{px_forward.4} parent=5 // pred_region
        %s372 = ssub.s32 %s9, 1
        %s373 = sand.u32 %s22, 1
        %s374 = sand.u32 %s22, 1
        %s375 = smul.addr %s374, 400
        %s376 = scalar_lea.vmem [#allocation2], %s375
        // Predicated region
        $region67: #{px_forward.4} parent=65 // pred_check
          %p377 = pneg %p35
        $region68: #{px_forward.4} parent=65 // pred_check_branch
          %379 = sbr.rel (%p377) target = $region70
        $region69: #{px_forward.4} parent=65 // pred_region
          _
        $region70: #{px_forward.4} parent=65 // pred_fallthru
          _
        %s380 = sand.u32 %s22, 1
        %s381 = sand.u32 %s22, 1
        %s382 = smul.addr %s381, 400
        %s383 = scalar_lea.vmem [#allocation2], %s382
        %p384 = pneg %p35
        %p385 = pneg %p32
        %p386 = pneg %p56
        %p387 = pneg %p53
        %p388 = pneg %p77
        %p389 = pneg %p74
        %p390 = pneg %p103
        %p391 = pneg %p100
        %s392 = sand.u32 %s90, 1
        %s393 = sand.u32 %s90, 1
        %s394 = smul.addr %s393, 32
        %s395 = scalar_lea.vmem [#allocation3], %s394
        %s396 = smul.u32 2, %s14
        %s397 = smul.u32 2, %s14
        %v399 = vld [vmem:[%s1] sm:$0xff]
        %v400 = vld [vmem:[%s1 + $0x8] sm:$0xff]
        %v401 = vld [vmem:[%s1 + $0x10] sm:$0xff]
        %v402 = vld [vmem:[%s1 + $0x18] sm:$0xff]
        %v403 = vld [vmem:[%s376] sm:$0xff]
        %v404 = vld [vmem:[%s376 + $0x8] sm:$0xff]
        %v405 = vld [vmem:[%s376 + $0x10] sm:$0xff]
        %v406 = vld [vmem:[%s376 + $0x18] sm:$0xff]
        %v407 = vld [vmem:[%s376 + $0x20] sm:$0xff]
        %v408 = vld [vmem:[%s376 + $0x28] sm:$0xff]
        %v409 = vld [vmem:[%s376 + $0x30] sm:$0xff]
        %v410 = vld [vmem:[%s376 + $0x38] sm:$0xff]
        %v411 = vld [vmem:[%s376 + $0x40] sm:$0xff]
        %v412 = vld [vmem:[%s376 + $0x48] sm:$0xff]
        %v413 = vld [vmem:[%s376 + $0x50] sm:$0xff]
        %v414 = vld [vmem:[%s376 + $0x58] sm:$0xff]
        %v415 = vld [vmem:[%s376 + $0x60] sm:$0xff]
        %v416 = vld [vmem:[%s376 + $0x68] sm:$0xff]
        %v417 = vld [vmem:[%s376 + $0x70] sm:$0xff]
        %v418 = vld [vmem:[%s376 + $0x78] sm:$0xff]
        %v419 = vld [vmem:[%s376 + $0x80] sm:$0xff]
        %v420 = vld [vmem:[%s376 + $0x88] sm:$0xff]
        %v421 = vld [vmem:[%s376 + $0x90] sm:$0xff]
        %v422 = vld [vmem:[%s376 + $0x98] sm:$0xff]
        %v423 = vld [vmem:[%s376 + $0xa0] sm:$0xff]
        %v424 = vld [vmem:[%s376 + $0xa8] sm:$0xff]
        %v425 = vld [vmem:[%s376 + $0xb0] sm:$0xff]
        %v426 = vld [vmem:[%s376 + $0xb8] sm:$0xff]
        %v427 = vld [vmem:[%s376 + $0xc0] sm:$0xff]
        %v428 = vld [vmem:[%s376 + $0xc8] sm:$0xff]
        %v429 = vld [vmem:[%s376 + $0xd0] sm:$0xff]
        %v430 = vld [vmem:[%s376 + $0xd8] sm:$0xff]
        %v431 = vld [vmem:[%s376 + $0xe0] sm:$0xff]
        %v432 = vld [vmem:[%s376 + $0xe8] sm:$0xff]
        %v433 = vld [vmem:[%s376 + $0xf0] sm:$0xff]
        %v434 = vld [vmem:[%s376 + $0xf8] sm:$0xff]
        %v435 = vld [vmem:[%s376 + $0x100] sm:$0xff]
        %v436 = vld [vmem:[%s376 + $0x108] sm:$0xff]
        %v437 = vld [vmem:[%s376 + $0x110] sm:$0xff]
        %v438 = vld [vmem:[%s376 + $0x118] sm:$0xff]
        %v439 = vld [vmem:[%s376 + $0x120] sm:$0xff]
        %v440 = vld [vmem:[%s376 + $0x128] sm:$0xff]
        %v441 = vld [vmem:[%s376 + $0x130] sm:$0xff]
        %v442 = vld [vmem:[%s376 + $0x138] sm:$0xff]
        %v443 = vld [vmem:[%s376 + $0x140] sm:$0xff]
        %v444 = vld [vmem:[%s376 + $0x148] sm:$0xff]
        %v445 = vld [vmem:[%s376 + $0x150] sm:$0xff]
        %v446 = vld [vmem:[%s376 + $0x158] sm:$0xff]
        %v447 = vld [vmem:[%s376 + $0x160] sm:$0xff]
        %v448 = vld [vmem:[%s376 + $0x168] sm:$0xff]
        %v449 = vld [vmem:[%s376 + $0x170] sm:$0xff]
        %v450 = vld [vmem:[%s376 + $0x178] sm:$0xff]
        %v451 = vld [vmem:[%s376 + $0x180] sm:$0xff]
        %v452 = vld [vmem:[%s376 + $0x188] sm:$0xff]
        %v453 = vld [vmem:[%s2] sm:$0xff]
        %v454 = vld [vmem:[%s2 + $0x8] sm:$0xff]
        %456 = vset.pattern.permute.xlu0 0
        %457 = vperm.xlu0 %456, %v453
        %v458 = vpop.permute.xlu0 %457
        %461 = vset.pattern.permute.xlu0 0
        %462 = vperm.xlu0 %461, %v454
        %v463 = vpop.permute.xlu0 %462
        %v469 = vunpack.c.l.b16 %v399
        %v470 = vunpack.c.h.b16 %v399
        %v471 = vunpack.c.l.b16 %v400
        %v472 = vunpack.c.h.b16 %v400
        %v473 = vunpack.c.l.b16 %v401
        %v474 = vunpack.c.h.b16 %v401
        %v475 = vunpack.c.l.b16 %v402
        %v476 = vunpack.c.h.b16 %v402
        %v477 = vpack.c.b16 %v473, %v469
        %v478 = vpack.c.b16 %v474, %v470
        %v479 = vpack.c.b16 %v475, %v471
        %v480 = vpack.c.b16 %v476, %v472
        %v534 = vunpack.c.l.b16 %v403
        %v535 = vunpack.c.h.b16 %v403
        %v536 = vunpack.c.l.b16 %v404
        %v537 = vunpack.c.h.b16 %v404
        %v538 = vunpack.c.l.b16 %v405
        %v539 = vunpack.c.h.b16 %v405
        %v540 = vunpack.c.l.b16 %v406
        %v541 = vunpack.c.h.b16 %v406
        %v542 = vunpack.c.l.b16 %v407
        %v543 = vunpack.c.h.b16 %v407
        %v544 = vunpack.c.l.b16 %v408
        %v545 = vunpack.c.h.b16 %v408
        %v546 = vunpack.c.l.b16 %v409
        %v547 = vunpack.c.h.b16 %v409
        %v548 = vunpack.c.l.b16 %v410
        %v549 = vunpack.c.h.b16 %v410
        %v550 = vunpack.c.l.b16 %v411
        %v551 = vunpack.c.h.b16 %v411
        %v552 = vunpack.c.l.b16 %v412
        %v553 = vunpack.c.h.b16 %v412
        %v554 = vunpack.c.l.b16 %v413
        %v555 = vunpack.c.h.b16 %v413
        %v556 = vunpack.c.l.b16 %v414
        %v557 = vunpack.c.h.b16 %v414
        %v558 = vunpack.c.l.b16 %v415
        %v559 = vunpack.c.h.b16 %v415
        %v560 = vunpack.c.l.b16 %v416
        %v561 = vunpack.c.h.b16 %v416
        %v562 = vunpack.c.l.b16 %v417
        %v563 = vunpack.c.h.b16 %v417
        %v564 = vunpack.c.l.b16 %v418
        %v565 = vunpack.c.h.b16 %v418
        %v566 = vunpack.c.l.b16 %v419
        %v567 = vunpack.c.h.b16 %v419
        %v568 = vunpack.c.l.b16 %v420
        %v569 = vunpack.c.h.b16 %v420
        %v570 = vunpack.c.l.b16 %v421
        %v571 = vunpack.c.h.b16 %v421
        %v572 = vunpack.c.l.b16 %v422
        %v573 = vunpack.c.h.b16 %v422
        %v574 = vunpack.c.l.b16 %v423
        %v575 = vunpack.c.h.b16 %v423
        %v576 = vunpack.c.l.b16 %v424
        %v577 = vunpack.c.h.b16 %v424
        %v578 = vunpack.c.l.b16 %v425
        %v579 = vunpack.c.h.b16 %v425
        %v580 = vunpack.c.l.b16 %v426
        %v581 = vunpack.c.h.b16 %v426
        %v582 = vunpack.c.l.b16 %v427
        %v583 = vunpack.c.h.b16 %v427
        %v584 = vunpack.c.l.b16 %v428
        %v585 = vunpack.c.h.b16 %v428
        %v586 = vunpack.c.l.b16 %v429
        %v587 = vunpack.c.h.b16 %v429
        %v588 = vunpack.c.l.b16 %v430
        %v589 = vunpack.c.h.b16 %v430
        %v590 = vunpack.c.l.b16 %v431
        %v591 = vunpack.c.h.b16 %v431
        %v592 = vunpack.c.l.b16 %v432
        %v593 = vunpack.c.h.b16 %v432
        %v594 = vunpack.c.l.b16 %v433
        %v595 = vunpack.c.h.b16 %v433
        %v596 = vunpack.c.l.b16 %v434
        %v597 = vunpack.c.h.b16 %v434
        %v598 = vunpack.c.l.b16 %v435
        %v599 = vunpack.c.h.b16 %v435
        %v600 = vunpack.c.l.b16 %v436
        %v601 = vunpack.c.h.b16 %v436
        %v602 = vunpack.c.l.b16 %v437
        %v603 = vunpack.c.h.b16 %v437
        %v604 = vunpack.c.l.b16 %v438
        %v605 = vunpack.c.h.b16 %v438
        %v606 = vunpack.c.l.b16 %v439
        %v607 = vunpack.c.h.b16 %v439
        %v608 = vunpack.c.l.b16 %v440
        %v609 = vunpack.c.h.b16 %v440
        %v610 = vunpack.c.l.b16 %v441
        %v611 = vunpack.c.h.b16 %v441
        %v612 = vunpack.c.l.b16 %v442
        %v613 = vunpack.c.h.b16 %v442
        %v614 = vunpack.c.l.b16 %v443
        %v615 = vunpack.c.h.b16 %v443
        %v616 = vunpack.c.l.b16 %v444
        %v617 = vunpack.c.h.b16 %v444
        %v618 = vunpack.c.l.b16 %v445
        %v619 = vunpack.c.h.b16 %v445
        %v620 = vunpack.c.l.b16 %v446
        %v621 = vunpack.c.h.b16 %v446
        %v622 = vunpack.c.l.b16 %v447
        %v623 = vunpack.c.h.b16 %v447
        %v624 = vunpack.c.l.b16 %v448
        %v625 = vunpack.c.h.b16 %v448
        %v626 = vunpack.c.l.b16 %v449
        %v627 = vunpack.c.h.b16 %v449
        %v628 = vunpack.c.l.b16 %v450
        %v629 = vunpack.c.h.b16 %v450
        %v630 = vunpack.c.l.b16 %v451
        %v631 = vunpack.c.h.b16 %v451
        %v632 = vunpack.c.l.b16 %v452
        %v633 = vunpack.c.h.b16 %v452
        %v634 = vpack.c.b16 %v536, %v534
        %v635 = vpack.c.b16 %v537, %v535
        %v636 = vpack.c.b16 %v540, %v538
        %v637 = vpack.c.b16 %v541, %v539
        %v638 = vpack.c.b16 %v544, %v542
        %v639 = vpack.c.b16 %v545, %v543
        %v640 = vpack.c.b16 %v548, %v546
        %v641 = vpack.c.b16 %v549, %v547
        %v642 = vpack.c.b16 %v552, %v550
        %v643 = vpack.c.b16 %v553, %v551
        %v644 = vpack.c.b16 %v556, %v554
        %v645 = vpack.c.b16 %v557, %v555
        %v646 = vpack.c.b16 %v560, %v558
        %v647 = vpack.c.b16 %v561, %v559
        %v648 = vpack.c.b16 %v564, %v562
        %v649 = vpack.c.b16 %v565, %v563
        %v650 = vpack.c.b16 %v568, %v566
        %v651 = vpack.c.b16 %v569, %v567
        %v652 = vpack.c.b16 %v572, %v570
        %v653 = vpack.c.b16 %v573, %v571
        %v654 = vpack.c.b16 %v576, %v574
        %v655 = vpack.c.b16 %v577, %v575
        %v656 = vpack.c.b16 %v580, %v578
        %v657 = vpack.c.b16 %v581, %v579
        %v658 = vpack.c.b16 %v584, %v582
        %v659 = vpack.c.b16 %v585, %v583
        %v660 = vpack.c.b16 %v588, %v586
        %v661 = vpack.c.b16 %v589, %v587
        %v662 = vpack.c.b16 %v592, %v590
        %v663 = vpack.c.b16 %v593, %v591
        %v664 = vpack.c.b16 %v596, %v594
        %v665 = vpack.c.b16 %v597, %v595
        %v666 = vpack.c.b16 %v600, %v598
        %v667 = vpack.c.b16 %v601, %v599
        %v668 = vpack.c.b16 %v604, %v602
        %v669 = vpack.c.b16 %v605, %v603
        %v670 = vpack.c.b16 %v608, %v606
        %v671 = vpack.c.b16 %v609, %v607
        %v672 = vpack.c.b16 %v612, %v610
        %v673 = vpack.c.b16 %v613, %v611
        %v674 = vpack.c.b16 %v616, %v614
        %v675 = vpack.c.b16 %v617, %v615
        %v676 = vpack.c.b16 %v620, %v618
        %v677 = vpack.c.b16 %v621, %v619
        %v678 = vpack.c.b16 %v624, %v622
        %v679 = vpack.c.b16 %v625, %v623
        %v680 = vpack.c.b16 %v628, %v626
        %v681 = vpack.c.b16 %v629, %v627
        %v682 = vpack.c.b16 %v632, %v630
        %v683 = vpack.c.b16 %v633, %v631
        %vm734 = vcmask 130048
        %v736 = vsel %vm734, %v480, 0
        %738 = vmatprep.subr.bf16.mxu0 %v635
        %739 = vmatpush1.bf16.msra.mxu0 %v634
        %740 = vmatprep.subr.bf16.mxu0 %v637
        %741 = vmatpush1.bf16.msra.mxu0 %v636
        %742 = vmatprep.subr.bf16.mxu0 %v639
        %743 = vmatpush1.bf16.msra.mxu0 %v638
        %744 = vmatprep.subr.bf16.mxu0 %v641
        %745 = vmatpush1.bf16.msra.mxu0 %v640
        %746 = vmatprep.subr.bf16.mxu0 %v643
        %747 = vmatpush1.bf16.msra.mxu0 %v642
        %748 = vmatprep.subr.bf16.mxu0 %v645
        %749 = vmatpush1.bf16.msra.mxu0 %v644
        %750 = vmatprep.subr.bf16.mxu0 %v647
        %751 = vmatpush1.bf16.msra.mxu0 %v646
        %752 = vmatprep.subr.bf16.mxu0 %v649
        %753 = vmatpush1.bf16.msra.mxu0 %v648
        %754 = vmatprep.subr.bf16.mxu0 %v651
        %755 = vmatpush1.bf16.msra.mxu0 %v650
        %756 = vmatprep.subr.bf16.mxu0 %v653
        %757 = vmatpush1.bf16.msra.mxu0 %v652
        %758 = vmatprep.subr.bf16.mxu0 %v655
        %759 = vmatpush1.bf16.msra.mxu0 %v654
        %760 = vmatprep.subr.bf16.mxu0 %v657
        %761 = vmatpush1.bf16.msra.mxu0 %v656
        %762 = vmatprep.subr.bf16.mxu0 %v659
        %763 = vmatpush1.bf16.msra.mxu0 %v658
        %764 = vmatprep.subr.bf16.mxu0 %v661
        %765 = vmatpush1.bf16.msra.mxu0 %v660
        %766 = vmatprep.subr.bf16.mxu0 %v663
        %767 = vmatpush1.bf16.msra.mxu0 %v662
        %768 = vmatprep.subr.bf16.mxu0 %v665
        %769 = vmatpush1.bf16.msra.mxu0 %v664
        %770 = vmatprep.mubr.bf16.mxu0 %v478
        %771 = vmatmul.mubr.bf16.gmra.mrb[0].mxu0 %v477
        %v772 = vpop.f32.mrb[0].mxu0
        %v773 = vadd.f32 %v458, %v772
        %v774 = vpop.f32.mrb[0].mxu0
        %v775 = vadd.f32 %v458, %v774
        %v776 = vpop.f32.mrb[0].mxu0
        %v777 = vadd.f32 %v463, %v776
        %v778 = vpop.f32.mrb[0].mxu0
        %v779 = vadd.f32 %v463, %v778
        %780 = vdwg.mxu0
        %781 = vmatprep.subr.bf16.mxu0 %v667
        %782 = vmatpush1.bf16.msra.mxu0 %v666
        %783 = vmatprep.subr.bf16.mxu0 %v669
        %784 = vmatpush1.bf16.msra.mxu0 %v668
        %785 = vmatprep.subr.bf16.mxu0 %v671
        %786 = vmatpush1.bf16.msra.mxu0 %v670
        %787 = vmatprep.subr.bf16.mxu0 %v673
        %788 = vmatpush1.bf16.msra.mxu0 %v672
        %789 = vmatprep.subr.bf16.mxu0 %v675
        %790 = vmatpush1.bf16.msra.mxu0 %v674
        %791 = vmatprep.subr.bf16.mxu0 %v677
        %792 = vmatpush1.bf16.msra.mxu0 %v676
        %793 = vmatprep.subr.bf16.mxu0 %v679
        %794 = vmatpush1.bf16.msra.mxu0 %v678
        %795 = vmatprep.subr.bf16.mxu0 %v681
        %796 = vmatpush1.bf16.msra.mxu0 %v680
        %797 = vmatprep.subr.bf16.mxu0 %v683
        %798 = vmatpush1.bf16.msra.mxu0 %v682
        %799 = vmatprep.subr.bf16.mxu0 0
        %800 = vmatpush1.bf16.msra.mxu0 0
        %801 = vmatprep.subr.bf16.mxu0 0
        %802 = vmatpush1.bf16.msra.mxu0 0
        %803 = vmatprep.subr.bf16.mxu0 0
        %804 = vmatpush1.bf16.msra.mxu0 0
        %805 = vmatprep.subr.bf16.mxu0 0
        %806 = vmatpush1.bf16.msra.mxu0 0
        %807 = vmatprep.subr.bf16.mxu0 0
        %808 = vmatpush1.bf16.msra.mxu0 0
        %809 = vmatprep.subr.bf16.mxu0 0
        %810 = vmatpush1.bf16.msra.mxu0 0
        %811 = vmatprep.subr.bf16.mxu0 0
        %812 = vmatpush1.bf16.msra.mxu0 0
        %813 = vmatprep.mubr.bf16.mxu0 %v736
        %814 = vmatmul.mubr.bf16.gmra.mrb[0].mxu0 %v479
        %v815 = vpop.f32.mrb[0].mxu0
        %v816 = vadd.f32 %v773, %v815
        %v817 = vpop.f32.mrb[0].mxu0
        %v818 = vadd.f32 %v775, %v817
        %v819 = vpop.f32.mrb[0].mxu0
        %v820 = vadd.f32 %v777, %v819
        %v821 = vpop.f32.mrb[0].mxu0
        %v822 = vadd.f32 %v779, %v821
        %823 = vdwg.mxu0
        %824 = vst [vmem:[%s395] sm:$0xff] %v816
        %825 = vst [vmem:[%s395 + $0x8] sm:$0xff] %v818
        %826 = vst [vmem:[%s395 + $0x10] sm:$0xff] %v820
        %827 = vst [vmem:[%s395 + $0x18] sm:$0xff] %v822
        %s828 = sand.u32 %s90, 1
        %s829 = sand.u32 %s90, 1
        %s830 = smul.addr %s829, 32
        %s831 = scalar_lea.vmem [#allocation3], %s830
        // Predicated region
        $region71: #{px_forward.4} parent=65 // pred_check
          %p832 = pneg %p100
        $region72: #{px_forward.4} parent=65 // pred_check_branch
          %834 = sbr.rel (%p832) target = $region74
        $region73: #{px_forward.4} parent=65 // pred_region
          %s835 = smul.u32 2, %s14
          %s836 = smul.addr %s835, 8
          %s837 = scalar_lea.vmem %s3, %s836
          // Predicated region
          $region75: #{px_forward.4} parent=73 // pred_check
            _
          $region76: #{px_forward.4} parent=73 // pred_check_branch
            %839 = sbr.rel (0) target = $region78
          $region77: #{px_forward.4} parent=73 // pred_region
            // Predicated region
            $region79: #{px_forward.4} parent=77 // pred_check
              _
            $region80: #{px_forward.4} parent=77 // pred_check_branch
              %841 = sbr.rel (0) target = $region82
            $region81: #{px_forward.4} parent=77 // pred_region
              loop: start=0, step=1, limit=1
              $region83: #{px_forward.4} parent=81 // loop_pre_header
                _
              $region84: #{px_forward.4} parent=81 // loop_header
                %s843 = sphi 0, %s847
                %p844 = scmp.ge.s32.totalorder %s843, 1
                %s848 = sphi %s831, %s831
                %s849 = sphi %s837, %s837
              $region85: #{px_forward.4} parent=81 // loop_header_branch
                %846 = sbr.rel (%p844) target = $region89
              $region86: #{px_forward.4} parent=81 // loop_body
                %v850 = vld [vmem:[%s848] sm:$0xff]
                %851 = vst [vmem:[%s849] sm:$0xff] %v850
                %v852 = vld [vmem:[%s848 + $0x8] sm:$0xff]
                %853 = vst [vmem:[%s849 + $0x8] sm:$0xff] %v852
                %v854 = vld [vmem:[%s848 + $0x10] sm:$0xff]
                %855 = vst [vmem:[%s849 + $0x20] sm:$0xff] %v854
                %v856 = vld [vmem:[%s848 + $0x18] sm:$0xff]
                %857 = vst [vmem:[%s849 + $0x28] sm:$0xff] %v856
              $region87: #{px_forward.4} parent=81 // loop_footer
                %s847 = sadd.s32 1, %s843
              $region88: #{px_forward.4} parent=81 // loop_footer_branch
                %842 = sbr.rel target = $region84
              $region89: #{px_forward.4} parent=81 // loop_exit
                _
            $region82: #{px_forward.4} parent=77 // pred_fallthru
              _
            // Predicated region
            $region90: #{px_forward.4} parent=77 // pred_check
              _
            $region91: #{px_forward.4} parent=77 // pred_check_branch
              %859 = sbr.rel target = $region93
            $region92: #{px_forward.4} parent=77 // pred_region
              _
            $region93: #{px_forward.4} parent=77 // pred_fallthru
              _
          $region78: #{px_forward.4} parent=73 // pred_fallthru
            _
          %860 = vnop
        $region74: #{px_forward.4} parent=65 // pred_fallthru
          _
      $region66: #{px_forward.4} parent=5 // pred_fallthru
        _
      %p861 = scmp.le.s32.totalorder 2, %s9
      // Predicated region
      $region94: #{px_forward.4} parent=5 // pred_check
        %p862 = pneg %p861
      $region95: #{px_forward.4} parent=5 // pred_check_branch
        %864 = sbr.rel (%p862) target = $region97
      $region96: #{px_forward.4} parent=5 // pred_region
        %s865 = ssub.s32 %s9, 2
        // Predicated region
        $region98: #{px_forward.4} parent=96 // pred_check
          %p866 = pneg %p106
        $region99: #{px_forward.4} parent=96 // pred_check_branch
          %868 = sbr.rel (%p866) target = $region101
        $region100: #{px_forward.4} parent=96 // pred_region
          %s869 = sand.u32 %s91, 1
          %s870 = sand.u32 %s91, 1
          %s871 = smul.addr %s870, 32
          %s872 = scalar_lea.vmem [#allocation3], %s871
        $region101: #{px_forward.4} parent=96 // pred_fallthru
          _
      $region97: #{px_forward.4} parent=5 // pred_fallthru
        _
    $region6: #{px_forward.4} parent=1 // loop_footer
      %s13 = sadd.s32 1, %s9
    $region7: #{px_forward.4} parent=1 // loop_footer_branch
      %8 = sbr.rel target = $region3
    $region8: #{px_forward.4} parent=1 // loop_exit
      _

// kernel: px_forward.5
$region0: #{px_forward.5}
  #allocation0 [shape = 'u32[]', space=smem, size = 0x4, offset = 0x4, fixed_abs, tag = 'smem constant byte address 0x4 - core index']
  #allocation1 [shape = 'u32[144,128]{1,0:T(1,128)}', space=vmem, size = 0x12000, scoped, tag = 'internal scratch']
  %s0 = inlined_call_operand.vmem [shape: bf16[400,256], index: 0, kind: input, shape index: {}]
  %s1 = inlined_call_operand.vmem [shape: bf16[16,400], index: 1, kind: input, shape index: {}]
  %s2 = inlined_call_operand.vmem [shape: f32[16,1], index: 2, kind: input, shape index: {}]
  %s3 = inlined_call_operand.vmem [shape: f32[16,256], index: 3, kind: output, shape index: {}]
  %s4 = sld [smem:[#allocation0]]
  $region120: #{px_forward.5} parent=0
    _
  %s6 = ssub.s32 1, %s4
  %s7 = scalar_select 0, %s6, %s4
  $region1: #{px_forward.5} parent=0
    #allocation2 [shape = 'u8[204800]{0}', space=vmem, size = 0x32000, scoped, tag = 'input window, operand 0']
    #allocation3 [shape = 'u8[16384]{0}', space=vmem, size = 0x4000, scoped, tag = 'output window, operand 0']
    loop: start=0, step=1, limit=4
    $region2: #{px_forward.5} parent=1 // loop_pre_header
      _
    $region3: #{px_forward.5} parent=1 // loop_header
      %s9 = sphi 0, %s13
      %p10 = scmp.ge.s32.totalorder %s9, 4
      %s19 = sphi 0, %s21
      %s22 = sphi 0, %s19
      %s23 = sphi 0, %s22
      %s39 = sphi 0, %s23
      %s43 = sphi 0, %s43
      %s45 = sphi 0, %s43
      %s46 = sphi 0, %s45
      %s60 = sphi 0, %s46
      %s64 = sphi 0, %s64
      %s66 = sphi 0, %s64
      %s67 = sphi 0, %s66
      %s81 = sphi 0, %s67
      %s87 = sphi 0, %s89
      %s90 = sphi 0, %s87
      %s91 = sphi 0, %s90
      %s107 = sphi 0, %s91
    $region4: #{px_forward.5} parent=1 // loop_header_branch
      %12 = sbr.rel (%p10) target = $region8
    $region5: #{px_forward.5} parent=1 // loop_body
      %s14 = ssub.s32 %s9, 1
      %s15 = ssub.s32 %s9, 2
      %s16 = sadd.s32 %s9, 1
      %s17 = ssub.s32 %s9, %s16
      %p18 = scmp.eq.s32.totalorder %s17, 0
      %s20 = sadd.s32 %s19, 1
      %s21 = scalar_select %p18, %s19, %s20
      %p24 = pneg %p18
      %p25 = scmp.eq.s32.totalorder %s9, 1
      %p26 = por %p24, %p25
      %p27 = scmp.ne.s32.totalorder %s19, %s22
      %p28 = scmp.eq.s32.totalorder %s9, 0
      %p29 = por %p27, %p28
      %p30 = scmp.ne.s32.totalorder %s19, %s22
      %p31 = scmp.eq.s32.totalorder %s14, 1
      %p32 = por %p30, %p31
      %p33 = scmp.ne.s32.totalorder %s22, %s23
      %p34 = scmp.eq.s32.totalorder %s14, 0
      %p35 = por %p33, %p34
      %p36 = scmp.ne.s32.totalorder %s22, %s23
      %p37 = scmp.eq.s32.totalorder %s15, 1
      %p38 = por %p36, %p37
      %p40 = scmp.ne.s32.totalorder %s23, %s39
      %p41 = scmp.eq.s32.totalorder %s15, 0
      %p42 = por %p40, %p41
      %s44 = sadd.s32 %s43, 1
      %p47 = scmp.eq.s32.totalorder %s9, 1
      %p48 = scmp.ne.s32.totalorder %s43, %s45
      %p49 = scmp.eq.s32.totalorder %s9, 0
      %p50 = por %p48, %p49
      %p51 = scmp.ne.s32.totalorder %s43, %s45
      %p52 = scmp.eq.s32.totalorder %s14, 1
      %p53 = por %p51, %p52
      %p54 = scmp.ne.s32.totalorder %s45, %s46
      %p55 = scmp.eq.s32.totalorder %s14, 0
      %p56 = por %p54, %p55
      %p57 = scmp.ne.s32.totalorder %s45, %s46
      %p58 = scmp.eq.s32.totalorder %s15, 1
      %p59 = por %p57, %p58
      %p61 = scmp.ne.s32.totalorder %s46, %s60
      %p62 = scmp.eq.s32.totalorder %s15, 0
      %p63 = por %p61, %p62
      %s65 = sadd.s32 %s64, 1
      %p68 = scmp.eq.s32.totalorder %s9, 1
      %p69 = scmp.ne.s32.totalorder %s64, %s66
      %p70 = scmp.eq.s32.totalorder %s9, 0
      %p71 = por %p69, %p70
      %p72 = scmp.ne.s32.totalorder %s64, %s66
      %p73 = scmp.eq.s32.totalorder %s14, 1
      %p74 = por %p72, %p73
      %p75 = scmp.ne.s32.totalorder %s66, %s67
      %p76 = scmp.eq.s32.totalorder %s14, 0
      %p77 = por %p75, %p76
      %p78 = scmp.ne.s32.totalorder %s66, %s67
      %p79 = scmp.eq.s32.totalorder %s15, 1
      %p80 = por %p78, %p79
      %p82 = scmp.ne.s32.totalorder %s67, %s81
      %p83 = scmp.eq.s32.totalorder %s15, 0
      %p84 = por %p82, %p83
      %s85 = ssub.s32 %s9, %s16
      %p86 = scmp.eq.s32.totalorder %s85, 0
      %s88 = sadd.s32 %s87, 1
      %s89 = scalar_select %p86, %s87, %s88
      %p92 = pneg %p86
      %p93 = scmp.eq.s32.totalorder %s9, 1
      %p94 = por %p92, %p93
      %p95 = scmp.ne.s32.totalorder %s87, %s90
      %p96 = scmp.eq.s32.totalorder %s9, 0
      %p97 = por %p95, %p96
      %p98 = scmp.ne.s32.totalorder %s87, %s90
      %p99 = scmp.eq.s32.totalorder %s14, 1
      %p100 = por %p98, %p99
      %p101 = scmp.ne.s32.totalorder %s90, %s91
      %p102 = scmp.eq.s32.totalorder %s14, 0
      %p103 = por %p101, %p102
      %p104 = scmp.ne.s32.totalorder %s90, %s91
      %p105 = scmp.eq.s32.totalorder %s15, 1
      %p106 = por %p104, %p105
      %p108 = scmp.ne.s32.totalorder %s91, %s107
      %p109 = scmp.eq.s32.totalorder %s15, 0
      %p110 = por %p108, %p109
      %p111 = scmp.le.s32.totalorder 1, %s9
      %p112 = scmp.lt.s32.totalorder %s9, 3
      %p113 = pnand %p111, %p112
      %p114 = pneg %p113
      // Predicated region
      $region9: #{px_forward.5} parent=5 // pred_check
        _
      $region10: #{px_forward.5} parent=5 // pred_check_branch
        %116 = sbr.rel (%p113) target = $region12
      $region11: #{px_forward.5} parent=5 // pred_region
        %s117 = ssub.s32 %s9, 1
        // Predicated region
        $region13: #{px_forward.5} parent=11 // pred_check
          %p118 = pneg %p56
        $region14: #{px_forward.5} parent=11 // pred_check_branch
          %120 = sbr.rel (%p118) target = $region16
        $region15: #{px_forward.5} parent=11 // pred_region
          _
        $region16: #{px_forward.5} parent=11 // pred_fallthru
          _
        // Predicated region
        $region17: #{px_forward.5} parent=11 // pred_check
          %p121 = pneg %p77
        $region18: #{px_forward.5} parent=11 // pred_check_branch
          %123 = sbr.rel (%p121) target = $region20
        $region19: #{px_forward.5} parent=11 // pred_region
          _
        $region20: #{px_forward.5} parent=11 // pred_fallthru
          _
      $region12: #{px_forward.5} parent=5 // pred_fallthru
        _
      %p124 = scmp.lt.s32.totalorder %s9, 2
      // Predicated region
      $region21: #{px_forward.5} parent=5 // pred_check
        %p125 = pneg %p124
      $region22: #{px_forward.5} parent=5 // pred_check_branch
        %127 = sbr.rel (%p125) target = $region24
      $region23: #{px_forward.5} parent=5 // pred_region
        // Predicated region
        $region25: #{px_forward.5} parent=23 // pred_check
          %p128 = pneg %p29
        $region26: #{px_forward.5} parent=23 // pred_check_branch
          %130 = sbr.rel (%p128) target = $region28
        $region27: #{px_forward.5} parent=23 // pred_region
          %s131 = sand.u32 %s19, 1
          %s132 = sand.u32 %s19, 1
          %s133 = smul.addr %s132, 200
          %s134 = scalar_lea.vmem [#allocation2], %s133
          %s135 = smul.addr %s9, 4
          %s136 = scalar_lea.vmem %s0, %s135
          // Predicated region
          $region29: #{px_forward.5} parent=27 // pred_check
            _
          $region30: #{px_forward.5} parent=27 // pred_check_branch
            %138 = sbr.rel (0) target = $region32
          $region31: #{px_forward.5} parent=27 // pred_region
            // Predicated region
            $region33: #{px_forward.5} parent=31 // pred_check
              _
            $region34: #{px_forward.5} parent=31 // pred_check_branch
              %140 = sbr.rel target = $region36
            $region35: #{px_forward.5} parent=31 // pred_region
              // Predicated region
              $region48: #{px_forward.5} parent=35 // pred_check
                _
              $region49: #{px_forward.5} parent=35 // pred_check_branch
                %253 = sbr.rel (0) target = $region51
              $region50: #{px_forward.5} parent=35 // pred_region
                loop: start=0, step=1, limit=1
                $region52: #{px_forward.5} parent=50 // loop_pre_header
                  _
                $region53: #{px_forward.5} parent=50 // loop_header
                  %s255 = sphi 0, %s259
                  %p256 = scmp.ge.s32.totalorder %s255, 1
                  %s260 = sphi %s136, %s136
                  %s261 = sphi %s134, %s134
                $region54: #{px_forward.5} parent=50 // loop_header_branch
                  %258 = sbr.rel (%p256) target = $region58
                $region55: #{px_forward.5} parent=50 // loop_body
                  _
                $region56: #{px_forward.5} parent=50 // loop_footer
                  %s259 = sadd.s32 1, %s255
                $region57: #{px_forward.5} parent=50 // loop_footer_branch
                  %254 = sbr.rel target = $region53
                $region58: #{px_forward.5} parent=50 // loop_exit
                  _
                loop: start=0, step=1, limit=1
                $region59: #{px_forward.5} parent=50 // loop_pre_header
                  _
                $region60: #{px_forward.5} parent=50 // loop_header
                  %s264 = sphi 0, %s268
                  %p265 = scmp.ge.s32.totalorder %s264, 1
                  %s269 = sphi %s136, %s136
                  %s270 = sphi %s134, %s134
                $region61: #{px_forward.5} parent=50 // loop_header_branch
                  %267 = sbr.rel (%p265) target = $region65
                $region62: #{px_forward.5} parent=50 // loop_body
                  %v271 = vld [vmem:[%s269] sm:$0xf]
                  %272 = vst [vmem:[%s270] sm:$0xf] %v271
                  %v273 = vld [vmem:[%s269 + $0x8] sm:$0xf]
                  %274 = vst [vmem:[%s270 + $0x4] sm:$0xf] %v273
                  %v275 = vld [vmem:[%s269 + $0x10] sm:$0xf]
                  %276 = vst [vmem:[%s270 + $0x8] sm:$0xf] %v275
                  %v277 = vld [vmem:[%s269 + $0x18] sm:$0xf]
                  %278 = vst [vmem:[%s270 + $0xc] sm:$0xf] %v277
                  %v279 = vld [vmem:[%s269 + $0x20] sm:$0xf]
                  %280 = vst [vmem:[%s270 + $0x10] sm:$0xf] %v279
                  %v281 = vld [vmem:[%s269 + $0x28] sm:$0xf]
                  %282 = vst [vmem:[%s270 + $0x14] sm:$0xf] %v281
                  %v283 = vld [vmem:[%s269 + $0x30] sm:$0xf]
                  %284 = vst [vmem:[%s270 + $0x18] sm:$0xf] %v283
                  %v285 = vld [vmem:[%s269 + $0x38] sm:$0xf]
                  %286 = vst [vmem:[%s270 + $0x1c] sm:$0xf] %v285
                  %v287 = vld [vmem:[%s269 + $0x40] sm:$0xf]
                  %288 = vst [vmem:[%s270 + $0x20] sm:$0xf] %v287
                  %v289 = vld [vmem:[%s269 + $0x48] sm:$0xf]
                  %290 = vst [vmem:[%s270 + $0x24] sm:$0xf] %v289
                  %v291 = vld [vmem:[%s269 + $0x50] sm:$0xf]
                  %292 = vst [vmem:[%s270 + $0x28] sm:$0xf] %v291
                  %v293 = vld [vmem:[%s269 + $0x58] sm:$0xf]
                  %294 = vst [vmem:[%s270 + $0x2c] sm:$0xf] %v293
                  %v295 = vld [vmem:[%s269 + $0x60] sm:$0xf]
                  %296 = vst [vmem:[%s270 + $0x30] sm:$0xf] %v295
                  %v297 = vld [vmem:[%s269 + $0x68] sm:$0xf]
                  %298 = vst [vmem:[%s270 + $0x34] sm:$0xf] %v297
                  %v299 = vld [vmem:[%s269 + $0x70] sm:$0xf]
                  %300 = vst [vmem:[%s270 + $0x38] sm:$0xf] %v299
                  %v301 = vld [vmem:[%s269 + $0x78] sm:$0xf]
                  %302 = vst [vmem:[%s270 + $0x3c] sm:$0xf] %v301
                  %v303 = vld [vmem:[%s269 + $0x80] sm:$0xf]
                  %304 = vst [vmem:[%s270 + $0x40] sm:$0xf] %v303
                  %v305 = vld [vmem:[%s269 + $0x88] sm:$0xf]
                  %306 = vst [vmem:[%s270 + $0x44] sm:$0xf] %v305
                  %v307 = vld [vmem:[%s269 + $0x90] sm:$0xf]
                  %308 = vst [vmem:[%s270 + $0x48] sm:$0xf] %v307
                  %v309 = vld [vmem:[%s269 + $0x98] sm:$0xf]
                  %310 = vst [vmem:[%s270 + $0x4c] sm:$0xf] %v309
                  %v311 = vld [vmem:[%s269 + $0xa0] sm:$0xf]
                  %312 = vst [vmem:[%s270 + $0x50] sm:$0xf] %v311
                  %v313 = vld [vmem:[%s269 + $0xa8] sm:$0xf]
                  %314 = vst [vmem:[%s270 + $0x54] sm:$0xf] %v313
                  %v315 = vld [vmem:[%s269 + $0xb0] sm:$0xf]
                  %316 = vst [vmem:[%s270 + $0x58] sm:$0xf] %v315
                  %v317 = vld [vmem:[%s269 + $0xb8] sm:$0xf]
                  %318 = vst [vmem:[%s270 + $0x5c] sm:$0xf] %v317
                  %v319 = vld [vmem:[%s269 + $0xc0] sm:$0xf]
                  %320 = vst [vmem:[%s270 + $0x60] sm:$0xf] %v319
                  %v321 = vld [vmem:[%s269 + $0xc8] sm:$0xf]
                  %322 = vst [vmem:[%s270 + $0x64] sm:$0xf] %v321
                  %v323 = vld [vmem:[%s269 + $0xd0] sm:$0xf]
                  %324 = vst [vmem:[%s270 + $0x68] sm:$0xf] %v323
                  %v325 = vld [vmem:[%s269 + $0xd8] sm:$0xf]
                  %326 = vst [vmem:[%s270 + $0x6c] sm:$0xf] %v325
                  %v327 = vld [vmem:[%s269 + $0xe0] sm:$0xf]
                  %328 = vst [vmem:[%s270 + $0x70] sm:$0xf] %v327
                  %v329 = vld [vmem:[%s269 + $0xe8] sm:$0xf]
                  %330 = vst [vmem:[%s270 + $0x74] sm:$0xf] %v329
                  %v331 = vld [vmem:[%s269 + $0xf0] sm:$0xf]
                  %332 = vst [vmem:[%s270 + $0x78] sm:$0xf] %v331
                  %v333 = vld [vmem:[%s269 + $0xf8] sm:$0xf]
                  %334 = vst [vmem:[%s270 + $0x7c] sm:$0xf] %v333
                  %v335 = vld [vmem:[%s269 + $0x100] sm:$0xf]
                  %336 = vst [vmem:[%s270 + $0x80] sm:$0xf] %v335
                  %v337 = vld [vmem:[%s269 + $0x108] sm:$0xf]
                  %338 = vst [vmem:[%s270 + $0x84] sm:$0xf] %v337
                  %v339 = vld [vmem:[%s269 + $0x110] sm:$0xf]
                  %340 = vst [vmem:[%s270 + $0x88] sm:$0xf] %v339
                  %v341 = vld [vmem:[%s269 + $0x118] sm:$0xf]
                  %342 = vst [vmem:[%s270 + $0x8c] sm:$0xf] %v341
                  %v343 = vld [vmem:[%s269 + $0x120] sm:$0xf]
                  %344 = vst [vmem:[%s270 + $0x90] sm:$0xf] %v343
                  %v345 = vld [vmem:[%s269 + $0x128] sm:$0xf]
                  %346 = vst [vmem:[%s270 + $0x94] sm:$0xf] %v345
                  %v347 = vld [vmem:[%s269 + $0x130] sm:$0xf]
                  %348 = vst [vmem:[%s270 + $0x98] sm:$0xf] %v347
                  %v349 = vld [vmem:[%s269 + $0x138] sm:$0xf]
                  %350 = vst [vmem:[%s270 + $0x9c] sm:$0xf] %v349
                  %v351 = vld [vmem:[%s269 + $0x140] sm:$0xf]
                  %352 = vst [vmem:[%s270 + $0xa0] sm:$0xf] %v351
                  %v353 = vld [vmem:[%s269 + $0x148] sm:$0xf]
                  %354 = vst [vmem:[%s270 + $0xa4] sm:$0xf] %v353
                  %v355 = vld [vmem:[%s269 + $0x150] sm:$0xf]
                  %356 = vst [vmem:[%s270 + $0xa8] sm:$0xf] %v355
                  %v357 = vld [vmem:[%s269 + $0x158] sm:$0xf]
                  %358 = vst [vmem:[%s270 + $0xac] sm:$0xf] %v357
                  %v359 = vld [vmem:[%s269 + $0x160] sm:$0xf]
                  %360 = vst [vmem:[%s270 + $0xb0] sm:$0xf] %v359
                  %v361 = vld [vmem:[%s269 + $0x168] sm:$0xf]
                  %362 = vst [vmem:[%s270 + $0xb4] sm:$0xf] %v361
                  %v363 = vld [vmem:[%s269 + $0x170] sm:$0xf]
                  %364 = vst [vmem:[%s270 + $0xb8] sm:$0xf] %v363
                  %v365 = vld [vmem:[%s269 + $0x178] sm:$0xf]
                  %366 = vst [vmem:[%s270 + $0xbc] sm:$0xf] %v365
                  %v367 = vld [vmem:[%s269 + $0x180] sm:$0xf]
                  %368 = vst [vmem:[%s270 + $0xc0] sm:$0xf] %v367
                  %v369 = vld [vmem:[%s269 + $0x188] sm:$0xf]
                  %370 = vst [vmem:[%s270 + $0xc4] sm:$0xf] %v369
                $region63: #{px_forward.5} parent=50 // loop_footer
                  %s268 = sadd.s32 1, %s264
                $region64: #{px_forward.5} parent=50 // loop_footer_branch
                  %263 = sbr.rel target = $region60
                $region65: #{px_forward.5} parent=50 // loop_exit
                  _
              $region51: #{px_forward.5} parent=35 // pred_fallthru
                _
            $region36: #{px_forward.5} parent=31 // pred_fallthru
              _
            // Predicated region
            $region37: #{px_forward.5} parent=31 // pred_check
              _
            $region38: #{px_forward.5} parent=31 // pred_check_branch
              %142 = sbr.rel (0) target = $region40
            $region39: #{px_forward.5} parent=31 // pred_region
              loop: start=0, step=1, limit=1
              $region41: #{px_forward.5} parent=39 // loop_pre_header
                _
              $region42: #{px_forward.5} parent=39 // loop_header
                %s145 = sphi 0, %s149
                %p146 = scmp.ge.s32.totalorder %s145, 1
                %s150 = sphi %s136, %s136
                %s151 = sphi %s134, %s134
              $region43: #{px_forward.5} parent=39 // loop_header_branch
                %148 = sbr.rel (%p146) target = $region47
              $region44: #{px_forward.5} parent=39 // loop_body
                %v152 = vld [vmem:[%s150] sm:$0xf]
                %153 = vst [vmem:[%s151] sm:$0xf] %v152
                %v154 = vld [vmem:[%s150 + $0x8] sm:$0xf]
                %155 = vst [vmem:[%s151 + $0x4] sm:$0xf] %v154
                %v156 = vld [vmem:[%s150 + $0x10] sm:$0xf]
                %157 = vst [vmem:[%s151 + $0x8] sm:$0xf] %v156
                %v158 = vld [vmem:[%s150 + $0x18] sm:$0xf]
                %159 = vst [vmem:[%s151 + $0xc] sm:$0xf] %v158
                %v160 = vld [vmem:[%s150 + $0x20] sm:$0xf]
                %161 = vst [vmem:[%s151 + $0x10] sm:$0xf] %v160
                %v162 = vld [vmem:[%s150 + $0x28] sm:$0xf]
                %163 = vst [vmem:[%s151 + $0x14] sm:$0xf] %v162
                %v164 = vld [vmem:[%s150 + $0x30] sm:$0xf]
                %165 = vst [vmem:[%s151 + $0x18] sm:$0xf] %v164
                %v166 = vld [vmem:[%s150 + $0x38] sm:$0xf]
                %167 = vst [vmem:[%s151 + $0x1c] sm:$0xf] %v166
                %v168 = vld [vmem:[%s150 + $0x40] sm:$0xf]
                %169 = vst [vmem:[%s151 + $0x20] sm:$0xf] %v168
                %v170 = vld [vmem:[%s150 + $0x48] sm:$0xf]
                %171 = vst [vmem:[%s151 + $0x24] sm:$0xf] %v170
                %v172 = vld [vmem:[%s150 + $0x50] sm:$0xf]
                %173 = vst [vmem:[%s151 + $0x28] sm:$0xf] %v172
                %v174 = vld [vmem:[%s150 + $0x58] sm:$0xf]
                %175 = vst [vmem:[%s151 + $0x2c] sm:$0xf] %v174
                %v176 = vld [vmem:[%s150 + $0x60] sm:$0xf]
                %177 = vst [vmem:[%s151 + $0x30] sm:$0xf] %v176
                %v178 = vld [vmem:[%s150 + $0x68] sm:$0xf]
                %179 = vst [vmem:[%s151 + $0x34] sm:$0xf] %v178
                %v180 = vld [vmem:[%s150 + $0x70] sm:$0xf]
                %181 = vst [vmem:[%s151 + $0x38] sm:$0xf] %v180
                %v182 = vld [vmem:[%s150 + $0x78] sm:$0xf]
                %183 = vst [vmem:[%s151 + $0x3c] sm:$0xf] %v182
                %v184 = vld [vmem:[%s150 + $0x80] sm:$0xf]
                %185 = vst [vmem:[%s151 + $0x40] sm:$0xf] %v184
                %v186 = vld [vmem:[%s150 + $0x88] sm:$0xf]
                %187 = vst [vmem:[%s151 + $0x44] sm:$0xf] %v186
                %v188 = vld [vmem:[%s150 + $0x90] sm:$0xf]
                %189 = vst [vmem:[%s151 + $0x48] sm:$0xf] %v188
                %v190 = vld [vmem:[%s150 + $0x98] sm:$0xf]
                %191 = vst [vmem:[%s151 + $0x4c] sm:$0xf] %v190
                %v192 = vld [vmem:[%s150 + $0xa0] sm:$0xf]
                %193 = vst [vmem:[%s151 + $0x50] sm:$0xf] %v192
                %v194 = vld [vmem:[%s150 + $0xa8] sm:$0xf]
                %195 = vst [vmem:[%s151 + $0x54] sm:$0xf] %v194
                %v196 = vld [vmem:[%s150 + $0xb0] sm:$0xf]
                %197 = vst [vmem:[%s151 + $0x58] sm:$0xf] %v196
                %v198 = vld [vmem:[%s150 + $0xb8] sm:$0xf]
                %199 = vst [vmem:[%s151 + $0x5c] sm:$0xf] %v198
                %v200 = vld [vmem:[%s150 + $0xc0] sm:$0xf]
                %201 = vst [vmem:[%s151 + $0x60] sm:$0xf] %v200
                %v202 = vld [vmem:[%s150 + $0xc8] sm:$0xf]
                %203 = vst [vmem:[%s151 + $0x64] sm:$0xf] %v202
                %v204 = vld [vmem:[%s150 + $0xd0] sm:$0xf]
                %205 = vst [vmem:[%s151 + $0x68] sm:$0xf] %v204
                %v206 = vld [vmem:[%s150 + $0xd8] sm:$0xf]
                %207 = vst [vmem:[%s151 + $0x6c] sm:$0xf] %v206
                %v208 = vld [vmem:[%s150 + $0xe0] sm:$0xf]
                %209 = vst [vmem:[%s151 + $0x70] sm:$0xf] %v208
                %v210 = vld [vmem:[%s150 + $0xe8] sm:$0xf]
                %211 = vst [vmem:[%s151 + $0x74] sm:$0xf] %v210
                %v212 = vld [vmem:[%s150 + $0xf0] sm:$0xf]
                %213 = vst [vmem:[%s151 + $0x78] sm:$0xf] %v212
                %v214 = vld [vmem:[%s150 + $0xf8] sm:$0xf]
                %215 = vst [vmem:[%s151 + $0x7c] sm:$0xf] %v214
                %v216 = vld [vmem:[%s150 + $0x100] sm:$0xf]
                %217 = vst [vmem:[%s151 + $0x80] sm:$0xf] %v216
                %v218 = vld [vmem:[%s150 + $0x108] sm:$0xf]
                %219 = vst [vmem:[%s151 + $0x84] sm:$0xf] %v218
                %v220 = vld [vmem:[%s150 + $0x110] sm:$0xf]
                %221 = vst [vmem:[%s151 + $0x88] sm:$0xf] %v220
                %v222 = vld [vmem:[%s150 + $0x118] sm:$0xf]
                %223 = vst [vmem:[%s151 + $0x8c] sm:$0xf] %v222
                %v224 = vld [vmem:[%s150 + $0x120] sm:$0xf]
                %225 = vst [vmem:[%s151 + $0x90] sm:$0xf] %v224
                %v226 = vld [vmem:[%s150 + $0x128] sm:$0xf]
                %227 = vst [vmem:[%s151 + $0x94] sm:$0xf] %v226
                %v228 = vld [vmem:[%s150 + $0x130] sm:$0xf]
                %229 = vst [vmem:[%s151 + $0x98] sm:$0xf] %v228
                %v230 = vld [vmem:[%s150 + $0x138] sm:$0xf]
                %231 = vst [vmem:[%s151 + $0x9c] sm:$0xf] %v230
                %v232 = vld [vmem:[%s150 + $0x140] sm:$0xf]
                %233 = vst [vmem:[%s151 + $0xa0] sm:$0xf] %v232
                %v234 = vld [vmem:[%s150 + $0x148] sm:$0xf]
                %235 = vst [vmem:[%s151 + $0xa4] sm:$0xf] %v234
                %v236 = vld [vmem:[%s150 + $0x150] sm:$0xf]
                %237 = vst [vmem:[%s151 + $0xa8] sm:$0xf] %v236
                %v238 = vld [vmem:[%s150 + $0x158] sm:$0xf]
                %239 = vst [vmem:[%s151 + $0xac] sm:$0xf] %v238
                %v240 = vld [vmem:[%s150 + $0x160] sm:$0xf]
                %241 = vst [vmem:[%s151 + $0xb0] sm:$0xf] %v240
                %v242 = vld [vmem:[%s150 + $0x168] sm:$0xf]
                %243 = vst [vmem:[%s151 + $0xb4] sm:$0xf] %v242
                %v244 = vld [vmem:[%s150 + $0x170] sm:$0xf]
                %245 = vst [vmem:[%s151 + $0xb8] sm:$0xf] %v244
                %v246 = vld [vmem:[%s150 + $0x178] sm:$0xf]
                %247 = vst [vmem:[%s151 + $0xbc] sm:$0xf] %v246
                %v248 = vld [vmem:[%s150 + $0x180] sm:$0xf]
                %249 = vst [vmem:[%s151 + $0xc0] sm:$0xf] %v248
                %v250 = vld [vmem:[%s150 + $0x188] sm:$0xf]
                %251 = vst [vmem:[%s151 + $0xc4] sm:$0xf] %v250
              $region45: #{px_forward.5} parent=39 // loop_footer
                %s149 = sadd.s32 1, %s145
              $region46: #{px_forward.5} parent=39 // loop_footer_branch
                %144 = sbr.rel target = $region42
              $region47: #{px_forward.5} parent=39 // loop_exit
                _
            $region40: #{px_forward.5} parent=31 // pred_fallthru
              _
          $region32: #{px_forward.5} parent=27 // pred_fallthru
            _
          %371 = vnop
        $region28: #{px_forward.5} parent=23 // pred_fallthru
          _
      $region24: #{px_forward.5} parent=5 // pred_fallthru
        _
      %p372 = scmp.le.s32.totalorder 1, %s9
      %p373 = scmp.lt.s32.totalorder %s9, 3
      %p374 = pnand %p372, %p373
      %p375 = pneg %p374
      // Predicated region
      $region66: #{px_forward.5} parent=5 // pred_check
        _
      $region67: #{px_forward.5} parent=5 // pred_check_branch
        %377 = sbr.rel (%p374) target = $region69
      $region68: #{px_forward.5} parent=5 // pred_region
        %s378 = ssub.s32 %s9, 1
        %s379 = sand.u32 %s22, 1
        %s380 = sand.u32 %s22, 1
        %s381 = smul.addr %s380, 200
        %s382 = scalar_lea.vmem [#allocation2], %s381
        // Predicated region
        $region70: #{px_forward.5} parent=68 // pred_check
          %p383 = pneg %p35
        $region71: #{px_forward.5} parent=68 // pred_check_branch
          %385 = sbr.rel (%p383) target = $region73
        $region72: #{px_forward.5} parent=68 // pred_region
          _
        $region73: #{px_forward.5} parent=68 // pred_fallthru
          _
        %s386 = sand.u32 %s22, 1
        %s387 = sand.u32 %s22, 1
        %s388 = smul.addr %s387, 200
        %s389 = scalar_lea.vmem [#allocation2], %s388
        %p390 = pneg %p35
        %p391 = pneg %p32
        %p392 = pneg %p56
        %p393 = pneg %p53
        %p394 = pneg %p77
        %p395 = pneg %p74
        %p396 = pneg %p103
        %p397 = pneg %p100
        %s398 = sand.u32 %s90, 1
        %s399 = sand.u32 %s90, 1
        %s400 = smul.addr %s399, 16
        %s401 = scalar_lea.vmem [#allocation3], %s400
        %v403 = vld [vmem:[%s1] sm:$0xff]
        %v404 = vld [vmem:[%s1 + $0x8] sm:$0xff]
        %v405 = vld [vmem:[%s1 + $0x10] sm:$0xff]
        %v406 = vld [vmem:[%s1 + $0x18] sm:$0xff]
        %v407 = vld [vmem:[%s382] sm:$0xf]
        %v408 = vld [vmem:[%s382 + $0x4] sm:$0xf]
        %v409 = vld [vmem:[%s382 + $0x8] sm:$0xf]
        %v410 = vld [vmem:[%s382 + $0xc] sm:$0xf]
        %v411 = vld [vmem:[%s382 + $0x10] sm:$0xf]
        %v412 = vld [vmem:[%s382 + $0x14] sm:$0xf]
        %v413 = vld [vmem:[%s382 + $0x18] sm:$0xf]
        %v414 = vld [vmem:[%s382 + $0x1c] sm:$0xf]
        %v415 = vld [vmem:[%s382 + $0x20] sm:$0xf]
        %v416 = vld [vmem:[%s382 + $0x24] sm:$0xf]
        %v417 = vld [vmem:[%s382 + $0x28] sm:$0xf]
        %v418 = vld [vmem:[%s382 + $0x2c] sm:$0xf]
        %v419 = vld [vmem:[%s382 + $0x30] sm:$0xf]
        %v420 = vld [vmem:[%s382 + $0x34] sm:$0xf]
        %v421 = vld [vmem:[%s382 + $0x38] sm:$0xf]
        %v422 = vld [vmem:[%s382 + $0x3c] sm:$0xf]
        %v423 = vld [vmem:[%s382 + $0x40] sm:$0xf]
        %v424 = vld [vmem:[%s382 + $0x44] sm:$0xf]
        %v425 = vld [vmem:[%s382 + $0x48] sm:$0xf]
        %v426 = vld [vmem:[%s382 + $0x4c] sm:$0xf]
        %v427 = vld [vmem:[%s382 + $0x50] sm:$0xf]
        %v428 = vld [vmem:[%s382 + $0x54] sm:$0xf]
        %v429 = vld [vmem:[%s382 + $0x58] sm:$0xf]
        %v430 = vld [vmem:[%s382 + $0x5c] sm:$0xf]
        %v431 = vld [vmem:[%s382 + $0x60] sm:$0xf]
        %v432 = vld [vmem:[%s382 + $0x64] sm:$0xf]
        %v433 = vld [vmem:[%s382 + $0x68] sm:$0xf]
        %v434 = vld [vmem:[%s382 + $0x6c] sm:$0xf]
        %v435 = vld [vmem:[%s382 + $0x70] sm:$0xf]
        %v436 = vld [vmem:[%s382 + $0x74] sm:$0xf]
        %v437 = vld [vmem:[%s382 + $0x78] sm:$0xf]
        %v438 = vld [vmem:[%s382 + $0x7c] sm:$0xf]
        %v439 = vld [vmem:[%s382 + $0x80] sm:$0xf]
        %v440 = vld [vmem:[%s382 + $0x84] sm:$0xf]
        %v441 = vld [vmem:[%s382 + $0x88] sm:$0xf]
        %v442 = vld [vmem:[%s382 + $0x8c] sm:$0xf]
        %v443 = vld [vmem:[%s382 + $0x90] sm:$0xf]
        %v444 = vld [vmem:[%s382 + $0x94] sm:$0xf]
        %v445 = vld [vmem:[%s382 + $0x98] sm:$0xf]
        %v446 = vld [vmem:[%s382 + $0x9c] sm:$0xf]
        %v447 = vld [vmem:[%s382 + $0xa0] sm:$0xf]
        %v448 = vld [vmem:[%s382 + $0xa4] sm:$0xf]
        %v449 = vld [vmem:[%s382 + $0xa8] sm:$0xf]
        %v450 = vld [vmem:[%s382 + $0xac] sm:$0xf]
        %v451 = vld [vmem:[%s382 + $0xb0] sm:$0xf]
        %v452 = vld [vmem:[%s382 + $0xb4] sm:$0xf]
        %v453 = vld [vmem:[%s382 + $0xb8] sm:$0xf]
        %v454 = vld [vmem:[%s382 + $0xbc] sm:$0xf]
        %v455 = vld [vmem:[%s382 + $0xc0] sm:$0xf]
        %v456 = vld [vmem:[%s382 + $0xc4] sm:$0xf]
        %v457 = vld [vmem:[%s2] sm:$0xff]
        %v458 = vld [vmem:[%s2 + $0x8] sm:$0xff]
        %460 = vset.pattern.permute.xlu0 0
        %461 = vperm.xlu0 %460, %v457
        %v462 = vpop.permute.xlu0 %461
        %465 = vset.pattern.permute.xlu0 0
        %466 = vperm.xlu0 %465, %v458
        %v467 = vpop.permute.xlu0 %466
        %v473 = vunpack.c.l.b16 %v403
        %v474 = vunpack.c.h.b16 %v403
        %v475 = vunpack.c.l.b16 %v404
        %v476 = vunpack.c.h.b16 %v404
        %v477 = vunpack.c.l.b16 %v405
        %v478 = vunpack.c.h.b16 %v405
        %v479 = vunpack.c.l.b16 %v406
        %v480 = vunpack.c.h.b16 %v406
        %v481 = vpack.c.b16 %v477, %v473
        %v482 = vpack.c.b16 %v478, %v474
        %v483 = vpack.c.b16 %v479, %v475
        %v484 = vpack.c.b16 %v480, %v476
        %v538 = vunpack.c.l.b16 %v407
        %v539 = vunpack.c.l.b16 %v408
        %v540 = vunpack.c.l.b16 %v409
        %v541 = vunpack.c.l.b16 %v410
        %v542 = vunpack.c.l.b16 %v411
        %v543 = vunpack.c.l.b16 %v412
        %v544 = vunpack.c.l.b16 %v413
        %v545 = vunpack.c.l.b16 %v414
        %v546 = vunpack.c.l.b16 %v415
        %v547 = vunpack.c.l.b16 %v416
        %v548 = vunpack.c.l.b16 %v417
        %v549 = vunpack.c.l.b16 %v418
        %v550 = vunpack.c.l.b16 %v419
        %v551 = vunpack.c.l.b16 %v420
        %v552 = vunpack.c.l.b16 %v421
        %v553 = vunpack.c.l.b16 %v422
        %v554 = vunpack.c.l.b16 %v423
        %v555 = vunpack.c.l.b16 %v424
        %v556 = vunpack.c.l.b16 %v425
        %v557 = vunpack.c.l.b16 %v426
        %v558 = vunpack.c.l.b16 %v427
        %v559 = vunpack.c.l.b16 %v428
        %v560 = vunpack.c.l.b16 %v429
        %v561 = vunpack.c.l.b16 %v430
        %v562 = vunpack.c.l.b16 %v431
        %v563 = vunpack.c.l.b16 %v432
        %v564 = vunpack.c.l.b16 %v433
        %v565 = vunpack.c.l.b16 %v434
        %v566 = vunpack.c.l.b16 %v435
        %v567 = vunpack.c.l.b16 %v436
        %v568 = vunpack.c.l.b16 %v437
        %v569 = vunpack.c.l.b16 %v438
        %v570 = vunpack.c.l.b16 %v439
        %v571 = vunpack.c.l.b16 %v440
        %v572 = vunpack.c.l.b16 %v441
        %v573 = vunpack.c.l.b16 %v442
        %v574 = vunpack.c.l.b16 %v443
        %v575 = vunpack.c.l.b16 %v444
        %v576 = vunpack.c.l.b16 %v445
        %v577 = vunpack.c.l.b16 %v446
        %v578 = vunpack.c.l.b16 %v447
        %v579 = vunpack.c.l.b16 %v448
        %v580 = vunpack.c.l.b16 %v449
        %v581 = vunpack.c.l.b16 %v450
        %v582 = vunpack.c.l.b16 %v451
        %v583 = vunpack.c.l.b16 %v452
        %v584 = vunpack.c.l.b16 %v453
        %v585 = vunpack.c.l.b16 %v454
        %v586 = vunpack.c.l.b16 %v455
        %v587 = vunpack.c.l.b16 %v456
        %v588 = vpack.c.b16 %v539, %v538
        %v589 = vpack.c.b16 %v541, %v540
        %v590 = vpack.c.b16 %v543, %v542
        %v591 = vpack.c.b16 %v545, %v544
        %v592 = vpack.c.b16 %v547, %v546
        %v593 = vpack.c.b16 %v549, %v548
        %v594 = vpack.c.b16 %v551, %v550
        %v595 = vpack.c.b16 %v553, %v552
        %v596 = vpack.c.b16 %v555, %v554
        %v597 = vpack.c.b16 %v557, %v556
        %v598 = vpack.c.b16 %v559, %v558
        %v599 = vpack.c.b16 %v561, %v560
        %v600 = vpack.c.b16 %v563, %v562
        %v601 = vpack.c.b16 %v565, %v564
        %v602 = vpack.c.b16 %v567, %v566
        %v603 = vpack.c.b16 %v569, %v568
        %v604 = vpack.c.b16 %v571, %v570
        %v605 = vpack.c.b16 %v573, %v572
        %v606 = vpack.c.b16 %v575, %v574
        %v607 = vpack.c.b16 %v577, %v576
        %v608 = vpack.c.b16 %v579, %v578
        %v609 = vpack.c.b16 %v581, %v580
        %v610 = vpack.c.b16 %v583, %v582
        %v611 = vpack.c.b16 %v585, %v584
        %v612 = vpack.c.b16 %v587, %v586
        %vm638 = vcmask 130048
        %v640 = vsel %vm638, %v484, 0
        %642 = vmatprep.subr.bf16.mxu0 0
        %643 = vmatpush1.bf16.msra.mxu0 %v588
        %644 = vmatprep.subr.bf16.mxu0 0
        %645 = vmatpush1.bf16.msra.mxu0 %v589
        %646 = vmatprep.subr.bf16.mxu0 0
        %647 = vmatpush1.bf16.msra.mxu0 %v590
        %648 = vmatprep.subr.bf16.mxu0 0
        %649 = vmatpush1.bf16.msra.mxu0 %v591
        %650 = vmatprep.subr.bf16.mxu0 0
        %651 = vmatpush1.bf16.msra.mxu0 %v592
        %652 = vmatprep.subr.bf16.mxu0 0
        %653 = vmatpush1.bf16.msra.mxu0 %v593
        %654 = vmatprep.subr.bf16.mxu0 0
        %655 = vmatpush1.bf16.msra.mxu0 %v594
        %656 = vmatprep.subr.bf16.mxu0 0
        %657 = vmatpush1.bf16.msra.mxu0 %v595
        %658 = vmatprep.subr.bf16.mxu0 0
        %659 = vmatpush1.bf16.msra.mxu0 %v596
        %660 = vmatprep.subr.bf16.mxu0 0
        %661 = vmatpush1.bf16.msra.mxu0 %v597
        %662 = vmatprep.subr.bf16.mxu0 0
        %663 = vmatpush1.bf16.msra.mxu0 %v598
        %664 = vmatprep.subr.bf16.mxu0 0
        %665 = vmatpush1.bf16.msra.mxu0 %v599
        %666 = vmatprep.subr.bf16.mxu0 0
        %667 = vmatpush1.bf16.msra.mxu0 %v600
        %668 = vmatprep.subr.bf16.mxu0 0
        %669 = vmatpush1.bf16.msra.mxu0 %v601
        %670 = vmatprep.subr.bf16.mxu0 0
        %671 = vmatpush1.bf16.msra.mxu0 %v602
        %672 = vmatprep.subr.bf16.mxu0 0
        %673 = vmatpush1.bf16.msra.mxu0 %v603
        %674 = vmatprep.mubr.bf16.mxu0 %v482
        %675 = vmatmul.mubr.bf16.gmra.mrb[0].mxu0 %v481
        %v676 = vpop.f32.mrb[0].mxu0
        %v677 = vadd.f32 %v462, %v676
        %v678 = vpop.f32.mrb[0].mxu0
        %v679 = vpop.f32.mrb[0].mxu0
        %v680 = vadd.f32 %v467, %v679
        %v681 = vpop.f32.mrb[0].mxu0
        %682 = vdwg.mxu0
        %683 = vmatprep.subr.bf16.mxu0 0
        %684 = vmatpush1.bf16.msra.mxu0 %v604
        %685 = vmatprep.subr.bf16.mxu0 0
        %686 = vmatpush1.bf16.msra.mxu0 %v605
        %687 = vmatprep.subr.bf16.mxu0 0
        %688 = vmatpush1.bf16.msra.mxu0 %v606
        %689 = vmatprep.subr.bf16.mxu0 0
        %690 = vmatpush1.bf16.msra.mxu0 %v607
        %691 = vmatprep.subr.bf16.mxu0 0
        %692 = vmatpush1.bf16.msra.mxu0 %v608
        %693 = vmatprep.subr.bf16.mxu0 0
        %694 = vmatpush1.bf16.msra.mxu0 %v609
        %695 = vmatprep.subr.bf16.mxu0 0
        %696 = vmatpush1.bf16.msra.mxu0 %v610
        %697 = vmatprep.subr.bf16.mxu0 0
        %698 = vmatpush1.bf16.msra.mxu0 %v611
        %699 = vmatprep.subr.bf16.mxu0 0
        %700 = vmatpush1.bf16.msra.mxu0 %v612
        %701 = vmatprep.subr.bf16.mxu0 0
        %702 = vmatpush1.bf16.msra.mxu0 0
        %703 = vmatprep.subr.bf16.mxu0 0
        %704 = vmatpush1.bf16.msra.mxu0 0
        %705 = vmatprep.subr.bf16.mxu0 0
        %706 = vmatpush1.bf16.msra.mxu0 0
        %707 = vmatprep.subr.bf16.mxu0 0
        %708 = vmatpush1.bf16.msra.mxu0 0
        %709 = vmatprep.subr.bf16.mxu0 0
        %710 = vmatpush1.bf16.msra.mxu0 0
        %711 = vmatprep.subr.bf16.mxu0 0
        %712 = vmatpush1.bf16.msra.mxu0 0
        %713 = vmatprep.subr.bf16.mxu0 0
        %714 = vmatpush1.bf16.msra.mxu0 0
        %715 = vmatprep.mubr.bf16.mxu0 %v640
        %716 = vmatmul.mubr.bf16.gmra.mrb[0].mxu0 %v483
        %v717 = vpop.f32.mrb[0].mxu0
        %v718 = vadd.f32 %v677, %v717
        %v719 = vpop.f32.mrb[0].mxu0
        %v720 = vpop.f32.mrb[0].mxu0
        %v721 = vadd.f32 %v680, %v720
        %v722 = vpop.f32.mrb[0].mxu0
        %723 = vdwg.mxu0
        %724 = vst [vmem:[%s401] sm:$0xff] %v718
        %725 = vst [vmem:[%s401 + $0x8] sm:$0xff] %v721
        %s726 = sand.u32 %s90, 1
        %s727 = sand.u32 %s90, 1
        %s728 = smul.addr %s727, 16
        %s729 = scalar_lea.vmem [#allocation3], %s728
        // Predicated region
        $region74: #{px_forward.5} parent=68 // pred_check
          %p730 = pneg %p100
        $region75: #{px_forward.5} parent=68 // pred_check_branch
          %732 = sbr.rel (%p730) target = $region77
        $region76: #{px_forward.5} parent=68 // pred_region
          %s733 = smul.addr %s14, 8
          %s734 = scalar_lea.vmem %s3, %s733
          // Predicated region
          $region78: #{px_forward.5} parent=76 // pred_check
            _
          $region79: #{px_forward.5} parent=76 // pred_check_branch
            %736 = sbr.rel (0) target = $region81
          $region80: #{px_forward.5} parent=76 // pred_region
            // Predicated region
            $region82: #{px_forward.5} parent=80 // pred_check
              _
            $region83: #{px_forward.5} parent=80 // pred_check_branch
              %738 = sbr.rel (0) target = $region85
            $region84: #{px_forward.5} parent=80 // pred_region
              // Predicated region
              $region97: #{px_forward.5} parent=84 // pred_check
                _
              $region98: #{px_forward.5} parent=84 // pred_check_branch
                %755 = sbr.rel (0) target = $region100
              $region99: #{px_forward.5} parent=84 // pred_region
                loop: start=0, step=1, limit=1
                $region101: #{px_forward.5} parent=99 // loop_pre_header
                  _
                $region102: #{px_forward.5} parent=99 // loop_header
                  %s757 = sphi 0, %s761
                  %p758 = scmp.ge.s32.totalorder %s757, 1
                  %s762 = sphi %s729, %s729
                  %s763 = sphi %s734, %s734
                $region103: #{px_forward.5} parent=99 // loop_header_branch
                  %760 = sbr.rel (%p758) target = $region107
                $region104: #{px_forward.5} parent=99 // loop_body
                  %v764 = vld [vmem:[%s762] sm:$0xff]
                  %765 = vst [vmem:[%s763] sm:$0xff] %v764
                  %v766 = vld [vmem:[%s762 + $0x8] sm:$0xff]
                  %767 = vst [vmem:[%s763 + $0x10] sm:$0xff] %v766
                $region105: #{px_forward.5} parent=99 // loop_footer
                  %s761 = sadd.s32 1, %s757
                $region106: #{px_forward.5} parent=99 // loop_footer_branch
                  %756 = sbr.rel target = $region102
                $region107: #{px_forward.5} parent=99 // loop_exit
                  _
              $region100: #{px_forward.5} parent=84 // pred_fallthru
                _
              // Predicated region
              $region108: #{px_forward.5} parent=84 // pred_check
                _
              $region109: #{px_forward.5} parent=84 // pred_check_branch
                %769 = sbr.rel target = $region111
              $region110: #{px_forward.5} parent=84 // pred_region
                _
              $region111: #{px_forward.5} parent=84 // pred_fallthru
                _
            $region85: #{px_forward.5} parent=80 // pred_fallthru
              _
            // Predicated region
            $region86: #{px_forward.5} parent=80 // pred_check
              _
            $region87: #{px_forward.5} parent=80 // pred_check_branch
              %740 = sbr.rel target = $region89
            $region88: #{px_forward.5} parent=80 // pred_region
              loop: start=0, step=1, limit=1
              $region90: #{px_forward.5} parent=88 // loop_pre_header
                _
              $region91: #{px_forward.5} parent=88 // loop_header
                %s743 = sphi 0, %s747
                %p744 = scmp.ge.s32.totalorder %s743, 1
                %s748 = sphi %s729, %s729
                %s749 = sphi %s734, %s734
              $region92: #{px_forward.5} parent=88 // loop_header_branch
                %746 = sbr.rel (%p744) target = $region96
              $region93: #{px_forward.5} parent=88 // loop_body
                %v750 = vld [vmem:[%s748] sm:$0xff]
                %751 = vst [vmem:[%s749] sm:$0xff] %v750
                %v752 = vld [vmem:[%s748 + $0x8] sm:$0xff]
                %753 = vst [vmem:[%s749 + $0x10] sm:$0xff] %v752
              $region94: #{px_forward.5} parent=88 // loop_footer
                %s747 = sadd.s32 1, %s743
              $region95: #{px_forward.5} parent=88 // loop_footer_branch
                %742 = sbr.rel target = $region91
              $region96: #{px_forward.5} parent=88 // loop_exit
                _
            $region89: #{px_forward.5} parent=80 // pred_fallthru
              _
          $region81: #{px_forward.5} parent=76 // pred_fallthru
            _
          %770 = vnop
        $region77: #{px_forward.5} parent=68 // pred_fallthru
          _
      $region69: #{px_forward.5} parent=5 // pred_fallthru
        _
      %p771 = scmp.le.s32.totalorder 2, %s9
      // Predicated region
      $region112: #{px_forward.5} parent=5 // pred_check
        %p772 = pneg %p771
      $region113: #{px_forward.5} parent=5 // pred_check_branch
        %774 = sbr.rel (%p772) target = $region115
      $region114: #{px_forward.5} parent=5 // pred_region
        %s775 = ssub.s32 %s9, 2
        // Predicated region
        $region116: #{px_forward.5} parent=114 // pred_check
          %p776 = pneg %p106
        $region117: #{px_forward.5} parent=114 // pred_check_branch
          %778 = sbr.rel (%p776) target = $region119
        $region118: #{px_forward.5} parent=114 // pred_region
          %s779 = sand.u32 %s91, 1
          %s780 = sand.u32 %s91, 1
          %s781 = smul.addr %s780, 16
          %s782 = scalar_lea.vmem [#allocation3], %s781
        $region119: #{px_forward.5} parent=114 // pred_fallthru
          _
      $region115: #{px_forward.5} parent=5 // pred_fallthru
        _
    $region6: #{px_forward.5} parent=1 // loop_footer
      %s13 = sadd.s32 1, %s9
    $region7: #{px_forward.5} parent=1 // loop_footer_branch
      %8 = sbr.rel target = $region3
    $region8: #{px_forward.5} parent=1 // loop_exit
      _

</llo_original>
